<compile_context>
chip_gen: v7x
topology: tpu7x:2x2x1
jax: 0.10.0
libtpu: 0.0.40
codegen_flags: <defaults>
</compile_context>

<pallas_src>
import functools
import math

import jax
import jax.numpy as jnp
from jax import lax
from jax.experimental import pallas as pl
from jax.experimental.pallas import tpu as pltpu


def _round_up(n, m):
    return (n + m - 1) // m * m


def _pick_vmem_limit():
    # v5e/v6e have 128 MiB physical VMEM, v7x has 64 MiB; use ~75% of physical
    # (capped) so big row tiles pipeline instead of being squeezed by the
    # 16/32 MiB scoped default.
    try:
        cap = int(pltpu.get_tpu_info().vmem_capacity_bytes)
    except Exception:
        cap = 64 * 1024 * 1024
    return min(100 * 1024 * 1024, (cap * 3) // 4)


_VMEM_LIMIT = _pick_vmem_limit()


def _pick_tile(n, candidates=(512, 256, 128)):
    """Largest candidate tile that divides n, else the full extent."""
    for c in candidates:
        if n % c == 0:
            return c
    return n


# --------------------------------------------------------------------------
# Fused [LayerNorm] -> matmul -> bias -> [ReLU] -> [+residual] kernel
# (grid = (M/bm, N/bn); weight streamed in (K, bn) tiles)
# --------------------------------------------------------------------------

def _fused_matmul_kernel(*refs, ln, eps, relu, residual):
    it = iter(refs)
    x_ref = next(it)
    if ln:
        g_ref = next(it)
        beta_ref = next(it)
    w_ref = next(it)
    b_ref = next(it)
    if residual:
        r_ref = next(it)
    o_ref = next(it)

    x = x_ref[...]                                       # (bm, K), native dtype
    if ln:
        # LN stats in f32; recomputed per N tile (negligible vs the matmul).
        xf = x.astype(jnp.float32)
        d = xf.shape[-1]
        mean = jnp.mean(xf, axis=-1, keepdims=True)
        # PyTorch Tensor.std(): unbiased (n-1) estimator; eps added to std.
        var = jnp.sum((xf - mean) ** 2, axis=-1, keepdims=True) * (1.0 / (d - 1))
        inv = 1.0 / (jnp.sqrt(var) + eps)                # exact; per-row only
        x = (g_ref[...] * (xf - mean) * inv + beta_ref[...]).astype(x.dtype)

    # MXU operands stay in the native activation/weight dtype (bf16-friendly);
    # accumulation is f32 via preferred_element_type.
    y = jnp.dot(x, w_ref[...], preferred_element_type=jnp.float32)
    y = y + b_ref[...].astype(jnp.float32)
    if relu:
        y = jnp.maximum(y, 0.0)
    if residual:
        y = y + r_ref[...].astype(jnp.float32)
    o_ref[...] = y.astype(o_ref.dtype)


def fused_matmul(x, w, b, *, gamma=None, beta=None, residual=None,
                 relu=False, eps=1e-6, bm=512):
    """out = [LN(x)] @ w + b [ReLU] [+ residual].  x: (M, K), w: (K, N)."""
    M, K = x.shape
    N = w.shape[1]
    ln = gamma is not None
    use_res = residual is not None

    bm = min(bm, _round_up(M, 8))
    Mp = _round_up(M, bm)
    bn = _pick_tile(N)
    if Mp != M:
        x = jnp.pad(x, ((0, Mp - M), (0, 0)))
        if use_res:
            residual = jnp.pad(residual, ((0, Mp - M), (0, 0)))

    args = [x]
    in_specs = [pl.BlockSpec((bm, K), lambda i, j: (i, 0))]
    if ln:
        args += [gamma.reshape(1, K).astype(jnp.float32),
                 beta.reshape(1, K).astype(jnp.float32)]
        in_specs += [pl.BlockSpec((1, K), lambda i, j: (0, 0)),
                     pl.BlockSpec((1, K), lambda i, j: (0, 0))]
    args += [w, b.reshape(1, N)]
    in_specs += [pl.BlockSpec((K, bn), lambda i, j: (0, j)),
                 pl.BlockSpec((1, bn), lambda i, j: (0, j))]
    if use_res:
        args.append(residual)
        in_specs.append(pl.BlockSpec((bm, bn), lambda i, j: (i, j)))

    out = pl.pallas_call(
        functools.partial(_fused_matmul_kernel, ln=ln, eps=eps,
                          relu=relu, residual=use_res),
        out_shape=jax.ShapeDtypeStruct((Mp, N), x.dtype),
        grid=(Mp // bm, N // bn),
        in_specs=in_specs,
        out_specs=pl.BlockSpec((bm, bn), lambda i, j: (i, j)),
        compiler_params=pltpu.CompilerParams(
            dimension_semantics=("parallel", "parallel"),
            vmem_limit_bytes=_VMEM_LIMIT),
    )(*args)
    return out[:M] if Mp != M else out


# --------------------------------------------------------------------------
# Flash-style multi-head attention (online softmax over kv tiles).
# Grid = (B, head_groups, Tq tiles, Tk tiles); kv axis last & "arbitrary".
# Head groups are lane-aligned slabs sliced by the BlockSpec DMA.
# --------------------------------------------------------------------------

def _head_group_width(d_model, dk):
    """Smallest lane-aligned (multiple-of-128) head-group width, else full D."""
    lcm = dk * 128 // math.gcd(dk, 128)
    if lcm <= d_model and d_model % lcm == 0:
        return lcm
    return d_model


def _attention_kernel(q_ref, k_ref, v_ref, mask_ref, o_ref,
                      m_sc, l_sc, acc_sc, *, gh, dk):
    kj = pl.program_id(3)

    @pl.when(kj == 0)
    def _init():
        m_sc[...] = jnp.full(m_sc.shape, -jnp.inf, jnp.float32)
        l_sc[...] = jnp.zeros(l_sc.shape, jnp.float32)
        acc_sc[...] = jnp.zeros(acc_sc.shape, jnp.float32)

    q = q_ref[0]                                  # (tq, gw), native dtype
    k = k_ref[0]                                  # (tk, gw)
    v = v_ref[0]                                  # (tk, gw)
    masked = mask_ref[0].astype(jnp.int32) == 0   # (tq|1, tk)  True == drop

    # gh heads per group (gh == 1 whenever dk is a multiple of 128, i.e. no
    # in-kernel head slicing at all at production head dims).
    for head in range(gh):
        lo = head * dk
        qh = q[:, lo:lo + dk]                     # (tq, dk)  (scale pre-folded)
        kh = k[:, lo:lo + dk]                     # (tk, dk)
        vh = v[:, lo:lo + dk]                     # (tk, dk)

        # Contract on dk in native layout (no explicit k.T / XLU transpose).
        s = lax.dot_general(qh, kh, (((1,), (1,)), ((), ())),
                            preferred_element_type=jnp.float32)
        s = jnp.where(masked, jnp.float32(-1e9), s)

        m_prev = m_sc[head]                       # (tq, 1)
        m_new = jnp.maximum(m_prev, jnp.max(s, axis=-1, keepdims=True))
        alpha = jnp.exp(m_prev - m_new)
        p = jnp.exp(s - m_new)
        l_sc[head] = alpha * l_sc[head] + jnp.sum(p, axis=-1, keepdims=True)
        acc_sc[head] = alpha * acc_sc[head] + lax.dot_general(
            p.astype(vh.dtype), vh, (((1,), (0,)), ((), ())),
            preferred_element_type=jnp.float32)
        m_sc[head] = m_new

    @pl.when(kj == pl.num_programs(3) - 1)
    def _finalize():
        # Write each head slab straight into its lane slice (no concatenate).
        for head in range(gh):
            inv = 1.0 / l_sc[head]                # exact; (tq, 1) only
            o_ref[0, :, head * dk:(head + 1) * dk] = (
                acc_sc[head] * inv).astype(o_ref.dtype)


def attention(q, k, v, mask, h, *, tq=256, tk=256):
    """q: (B, Tq, D); k, v: (B, Tk, D); mask: (B|1, Tq|1, Tk), nonzero = keep."""
    B, Tq, D = q.shape
    Tk = k.shape[1]
    dk = D // h
    gw = _head_group_width(D, dk)                 # lane-aligned group width
    gh = gw // dk                                 # heads per group
    G = D // gw                                   # head groups (grid axis)

    tq = min(tq, _round_up(Tq, 8))
    tk = min(tk, _round_up(Tk, 8))
    Tqp = _round_up(Tq, tq)
    Tkp = _round_up(Tk, tk)

    if Tqp != Tq:
        q = jnp.pad(q, ((0, 0), (0, Tqp - Tq), (0, 0)))
    if Tkp != Tk:
        k = jnp.pad(k, ((0, 0), (0, Tkp - Tk), (0, 0)))
        v = jnp.pad(v, ((0, 0), (0, Tkp - Tk), (0, 0)))

    # int8 mask (4x less HBM traffic than int32); singleton batch / query dims
    # stay singleton and are broadcast by the index_map / in-kernel jnp.where.
    mask = mask.astype(jnp.int8)
    mb = mask.shape[0]
    q_bcast = mask.shape[1] == 1
    pad_q = 0 if q_bcast else Tqp - Tq
    if pad_q or Tkp != Tk:
        mask = jnp.pad(mask, ((0, 0), (0, pad_q), (0, Tkp - Tk)))

    if q_bcast:
        mask_spec = pl.BlockSpec(
            (1, 1, tk), lambda b, g, qi, kj: (b if mb == B else 0, 0, kj))
    else:
        mask_spec = pl.BlockSpec(
            (1, tq, tk), lambda b, g, qi, kj: (b if mb == B else 0, qi, kj))

    out = pl.pallas_call(
        functools.partial(_attention_kernel, gh=gh, dk=dk),
        out_shape=jax.ShapeDtypeStruct((B, Tqp, D), q.dtype),
        grid=(B, G, Tqp // tq, Tkp // tk),
        in_specs=[
            pl.BlockSpec((1, tq, gw), lambda b, g, qi, kj: (b, qi, g)),
            pl.BlockSpec((1, tk, gw), lambda b, g, qi, kj: (b, kj, g)),
            pl.BlockSpec((1, tk, gw), lambda b, g, qi, kj: (b, kj, g)),
            mask_spec,
        ],
        out_specs=pl.BlockSpec((1, tq, gw), lambda b, g, qi, kj: (b, qi, g)),
        scratch_shapes=[
            pltpu.VMEM((gh, tq, 1), jnp.float32),    # running max
            pltpu.VMEM((gh, tq, 1), jnp.float32),    # running denom
            pltpu.VMEM((gh, tq, dk), jnp.float32),   # running numerator
        ],
        compiler_params=pltpu.CompilerParams(
            dimension_semantics=("parallel", "parallel", "parallel", "arbitrary"),
            vmem_limit_bytes=_VMEM_LIMIT),
    )(q, k, v, mask)
    return out[:, :Tq] if Tqp != Tq else out


# --------------------------------------------------------------------------
# Standalone LayerNorm kernel (final decoder norm only)
# --------------------------------------------------------------------------

def _layernorm_kernel(x_ref, a_ref, b_ref, o_ref, *, eps):
    x = x_ref[...].astype(jnp.float32)
    d = x.shape[-1]
    mean = jnp.mean(x, axis=-1, keepdims=True)
    var = jnp.sum((x - mean) ** 2, axis=-1, keepdims=True) * (1.0 / (d - 1))
    inv = 1.0 / (jnp.sqrt(var) + eps)               # exact; per-row only
    o_ref[...] = (a_ref[...] * (x - mean) * inv + b_ref[...]).astype(o_ref.dtype)


def layer_norm(x2, a, b, eps=1e-6, bm=512):
    M, D = x2.shape
    bm = min(bm, _round_up(M, 8))
    Mp = _round_up(M, bm)
    if Mp != M:
        x2 = jnp.pad(x2, ((0, Mp - M), (0, 0)))
    out = pl.pallas_call(
        functools.partial(_layernorm_kernel, eps=eps),
        out_shape=jax.ShapeDtypeStruct((Mp, D), x2.dtype),
        grid=(Mp // bm,),
        in_specs=[pl.BlockSpec((bm, D), lambda i: (i, 0)),
                  pl.BlockSpec((1, D), lambda i: (0, 0)),
                  pl.BlockSpec((1, D), lambda i: (0, 0))],
        out_specs=pl.BlockSpec((bm, D), lambda i: (i, 0)),
        compiler_params=pltpu.CompilerParams(
            dimension_semantics=("parallel",),
            vmem_limit_bytes=_VMEM_LIMIT),
    )(x2, a.reshape(1, D).astype(jnp.float32), b.reshape(1, D).astype(jnp.float32))
    return out[:M] if Mp != M else out


# --------------------------------------------------------------------------
# Decoder layer / decoder forward (residual wiring in plain JAX; all heavy
# lifting inside the kernels above)
# --------------------------------------------------------------------------

def decoder_layer(x2, memory2, src_mask, tgt_mask, p, h, B, T, S, D):
    scale = 1.0 / math.sqrt(D // h)

    # Fold the 1/sqrt(dk) score scale into the Q-producing projection columns
    # (one-time per call; removes the per-tile multiply from the attention
    # kernel's inner loop).
    q_col = jnp.concatenate([jnp.full((D,), scale, p["sa_wqkv"].dtype),
                             jnp.ones((2 * D,), p["sa_wqkv"].dtype)])
    sa_wqkv = p["sa_wqkv"] * q_col
    sa_bqkv = p["sa_bqkv"] * q_col
    ca_wq = p["ca_wq"] * jnp.asarray(scale, p["ca_wq"].dtype)
    ca_bq = p["ca_bq"] * jnp.asarray(scale, p["ca_bq"].dtype)

    # sublayer 0: masked self-attention (pre-LN, fused QKV projection).
    qkv = fused_matmul(x2, sa_wqkv, sa_bqkv,
                       gamma=p["ln0_a"], beta=p["ln0_b"]).reshape(B, T, 3 * D)
    q, k, v = qkv[..., :D], qkv[..., D:2 * D], qkv[..., 2 * D:]
    attn = attention(q, k, v, tgt_mask, h)
    x2 = fused_matmul(attn.reshape(-1, D), p["sa_wo"], p["sa_bo"], residual=x2)

    # sublayer 1: source (cross) attention — LN only on the query stream.
    q = fused_matmul(x2, ca_wq, ca_bq,
                     gamma=p["ln1_a"], beta=p["ln1_b"]).reshape(B, T, D)
    kv = fused_matmul(memory2, p["ca_wkv"], p["ca_bkv"]).reshape(B, S, 2 * D)
    k, v = kv[..., :D], kv[..., D:]
    attn = attention(q, k, v, src_mask, h)
    x2 = fused_matmul(attn.reshape(-1, D), p["ca_wo"], p["ca_bo"], residual=x2)

    # sublayer 2: position-wise feed forward (LN + matmul + ReLU fused).
    hdn = fused_matmul(x2, p["ff_w1"], p["ff_b1"],
                       gamma=p["ln2_a"], beta=p["ln2_b"], relu=True)
    x2 = fused_matmul(hdn, p["ff_w2"], p["ff_b2"], residual=x2)
    return x2


def decoder_forward(params, x, memory, src_mask, tgt_mask, h):
    B, T, D = x.shape
    S = memory.shape[1]
    # Masks are kept in their caller-provided (possibly broadcast) shapes and
    # only cast to int8; the attention kernel handles singleton dims.
    tgt_m = tgt_mask.astype(jnp.int8)
    src_m = src_mask.astype(jnp.int8)
    x2 = x.reshape(-1, D)
    mem2 = memory.reshape(-1, D)
    for lp in params["layers"]:
        x2 = decoder_layer(x2, mem2, src_m, tgt_m, lp, h, B, T, S, D)
    out = layer_norm(x2, params["norm_a"], params["norm_b"])
    return out.reshape(B, T, D)


# --------------------------------------------------------------------------
# Pure-JAX reference (numerical self-check)
# --------------------------------------------------------------------------

def _ref_ln(x, a, b, eps=1e-6):
    mean = x.mean(-1, keepdims=True)
    var = jnp.sum((x - mean) ** 2, -1, keepdims=True) / (x.shape[-1] - 1)
    return a * (x - mean) / (jnp.sqrt(var) + eps) + b


def _ref_attn(q, k, v, mask, h):
    B, Tq, D = q.shape
    Tk = k.shape[1]
    dk = D // h
    qh = q.reshape(B, Tq, h, dk).transpose(0, 2, 1, 3)
    kh = k.reshape(B, Tk, h, dk).transpose(0, 2, 1, 3)
    vh = v.reshape(B, Tk, h, dk).transpose(0, 2, 1, 3)
    s = jnp.einsum("bhqd,bhkd->bhqk", qh, kh) / math.sqrt(dk)
    s = jnp.where(mask[:, None] == 0, -1e9, s)
    p = jax.nn.softmax(s, axis=-1)
    o = jnp.einsum("bhqk,bhkd->bhqd", p, vh)
    return o.transpose(0, 2, 1, 3).reshape(B, Tq, D)


def ref_decoder(params, x, memory, src_mask, tgt_mask, h):
    B, T, D = x.shape
    S = memory.shape[1]
    tgt_m = jnp.broadcast_to(tgt_mask, (B, T, T))
    src_m = jnp.broadcast_to(src_mask, (B, T, S))
    for p in params["layers"]:
        y = _ref_ln(x, p["ln0_a"], p["ln0_b"])
        qkv = y @ p["sa_wqkv"] + p["sa_bqkv"]
        q, k, v = jnp.split(qkv, 3, axis=-1)
        x = x + _ref_attn(q, k, v, tgt_m, h) @ p["sa_wo"] + p["sa_bo"]
        y = _ref_ln(x, p["ln1_a"], p["ln1_b"])
        q = y @ p["ca_wq"] + p["ca_bq"]
        kv = memory @ p["ca_wkv"] + p["ca_bkv"]
        k, v = jnp.split(kv, 2, axis=-1)
        x = x + _ref_attn(q, k, v, src_m, h) @ p["ca_wo"] + p["ca_bo"]
        y = _ref_ln(x, p["ln2_a"], p["ln2_b"])
        x = x + jnp.maximum(y @ p["ff_w1"] + p["ff_b1"], 0.0) @ p["ff_w2"] + p["ff_b2"]
    return _ref_ln(x, params["norm_a"], params["norm_b"])


# --------------------------------------------------------------------------
# Deterministic parameter init (Q/K/V and K/V weights stored concatenated)
# --------------------------------------------------------------------------

def init_params(key, n_layers, d_model, d_ff):
    def dense(k, fi, fo):
        return jax.random.normal(k, (fi, fo), jnp.float32) / math.sqrt(fi)

    def bias(k, fo):
        return 0.1 * jax.random.normal(k, (fo,), jnp.float32)

    ks = jax.random.split(key, 14)
    one_layer = {
        "sa_wqkv": dense(ks[0], d_model, 3 * d_model),
        "sa_bqkv": bias(ks[1], 3 * d_model),
        "sa_wo": dense(ks[2], d_model, d_model),
        "sa_bo": bias(ks[3], d_model),
        "ca_wq": dense(ks[4], d_model, d_model),
        "ca_bq": bias(ks[5], d_model),
        "ca_wkv": dense(ks[6], d_model, 2 * d_model),
        "ca_bkv": bias(ks[7], 2 * d_model),
        "ca_wo": dense(ks[8], d_model, d_model),
        "ca_bo": bias(ks[9], d_model),
        "ff_w1": dense(ks[10], d_model, d_ff),
        "ff_b1": bias(ks[11], d_ff),
        "ff_w2": dense(ks[12], d_ff, d_model),
        "ff_b2": bias(ks[13], d_model),
        "ln0_a": jnp.ones((d_model,), jnp.float32), "ln0_b": jnp.zeros((d_model,), jnp.float32),
        "ln1_a": jnp.ones((d_model,), jnp.float32), "ln1_b": jnp.zeros((d_model,), jnp.float32),
        "ln2_a": jnp.ones((d_model,), jnp.float32), "ln2_b": jnp.zeros((d_model,), jnp.float32),
    }
    # clones() deep-copies one layer => all N layers start with identical weights.
    return {
        "layers": [one_layer for _ in range(n_layers)],
        "norm_a": jnp.ones((d_model,), jnp.float32),
        "norm_b": jnp.zeros((d_model,), jnp.float32),
    }


# --------------------------------------------------------------------------
if __name__ == "__main__":
    B, T, S, D, H, DFF, N = 2, 8, 8, 32, 4, 64, 2

    key = jax.random.PRNGKey(0)
    kx, km, kp = jax.random.split(key, 3)

    x = jax.random.normal(kx, (B, T, D), jnp.float32)
    memory = jax.random.normal(km, (B, S, D), jnp.float32)
    # src_mask: (B, 1, S) all-ones; tgt_mask: (B, T, T) causal.
    src_mask = jnp.ones((B, 1, S), jnp.int32)
    tgt_mask = jnp.broadcast_to(
        jnp.tril(jnp.ones((T, T), jnp.int32))[None], (B, T, T))

    params = init_params(kp, N, D, DFF)

    fwd = jax.jit(functools.partial(decoder_forward, h=H))
    out = jax.block_until_ready(fwd(params, x, memory, src_mask, tgt_mask))

    ref = ref_decoder(params, x, memory, src_mask, tgt_mask, H)
    assert out.shape == (B, T, D)
    max_err = float(jnp.max(jnp.abs(out - ref)))
    assert jnp.allclose(out, ref, rtol=2e-2, atol=2e-2), max_err

    print("KERNEL_OK")
</pallas_src>

<mosaic_0001>
module attributes {stable_mosaic.version = 11 : i64} {
  func.func @_fused_matmul_kernel(%arg0: i32, %arg1: i32, %arg2: memref<16x32xf32, #tpu.memory_space<vmem>>, %arg3: memref<1x32xf32, #tpu.memory_space<vmem>>, %arg4: memref<1x32xf32, #tpu.memory_space<vmem>>, %arg5: memref<32x96xf32, #tpu.memory_space<vmem>>, %arg6: memref<1x96xf32, #tpu.memory_space<vmem>>, %arg7: memref<16x96xf32, #tpu.memory_space<vmem>>) attributes {dimension_semantics = [#tpu.dimension_semantics<parallel>, #tpu.dimension_semantics<parallel>], iteration_bounds = array<i64: 1, 1>, scalar_prefetch = 0 : i64, scratch_operands = 0 : i64, tpu.core_type = #tpu.core_type<tc>, window_params = [{transform_indices = @transform_0, window_bounds = array<i64: 16, 32>}, {pipeline_mode = #tpu.pipeline_mode<synchronous>, transform_indices = @transform_1, window_bounds = array<i64: 1, 32>}, {pipeline_mode = #tpu.pipeline_mode<synchronous>, transform_indices = @transform_2, window_bounds = array<i64: 1, 32>}, {transform_indices = @transform_3, window_bounds = array<i64: 32, 96>}, {transform_indices = @transform_4, window_bounds = array<i64: 1, 96>}, {transform_indices = @transform_5, window_bounds = array<i64: 16, 96>}]} {
    %c0 = arith.constant 0 : index
    %c0_0 = arith.constant 0 : index
    %0 = vector.load %arg2[%c0, %c0_0] : memref<16x32xf32, #tpu.memory_space<vmem>>, vector<16x32xf32>
    %cst = arith.constant dense<0.000000e+00> : vector<16xf32>
    %1 = vector.multi_reduction <add>, %0, %cst [1] : vector<16x32xf32> to vector<16xf32>
    %2 = vector.shape_cast %1 : vector<16xf32> to vector<16x1xf32>
    %cst_1 = arith.constant 3.200000e+01 : f32
    %3 = vector.broadcast %cst_1 : f32 to vector<16x1xf32>
    %4 = arith.divf %2, %3 : vector<16x1xf32>
    %5 = vector.broadcast %4 : vector<16x1xf32> to vector<16x32xf32>
    %6 = arith.subf %0, %5 : vector<16x32xf32>
    %7 = arith.mulf %6, %6 : vector<16x32xf32>
    %cst_2 = arith.constant dense<0.000000e+00> : vector<16xf32>
    %8 = vector.multi_reduction <add>, %7, %cst_2 [1] : vector<16x32xf32> to vector<16xf32>
    %9 = vector.shape_cast %8 : vector<16xf32> to vector<16x1xf32>
    %cst_3 = arith.constant 0.0322580636 : f32
    %10 = vector.broadcast %cst_3 : f32 to vector<16x1xf32>
    %11 = arith.mulf %9, %10 : vector<16x1xf32>
    %12 = math.sqrt %11 : vector<16x1xf32>
    %cst_4 = arith.constant 9.99999997E-7 : f32
    %13 = vector.broadcast %cst_4 : f32 to vector<16x1xf32>
    %14 = arith.addf %12, %13 : vector<16x1xf32>
    %cst_5 = arith.constant 1.000000e+00 : f32
    %15 = vector.broadcast %cst_5 : f32 to vector<16x1xf32>
    %16 = arith.divf %15, %14 : vector<16x1xf32>
    %c0_6 = arith.constant 0 : index
    %c0_7 = arith.constant 0 : index
    %17 = vector.load %arg3[%c0_6, %c0_7] : memref<1x32xf32, #tpu.memory_space<vmem>>, vector<1x32xf32>
    %18 = vector.broadcast %4 : vector<16x1xf32> to vector<16x32xf32>
    %19 = arith.subf %0, %18 : vector<16x32xf32>
    %20 = vector.broadcast %17 : vector<1x32xf32> to vector<16x32xf32>
    %21 = arith.mulf %20, %19 : vector<16x32xf32>
    %22 = vector.broadcast %16 : vector<16x1xf32> to vector<16x32xf32>
    %23 = arith.mulf %21, %22 : vector<16x32xf32>
    %c0_8 = arith.constant 0 : index
    %c0_9 = arith.constant 0 : index
    %24 = vector.load %arg4[%c0_8, %c0_9] : memref<1x32xf32, #tpu.memory_space<vmem>>, vector<1x32xf32>
    %25 = vector.broadcast %24 : vector<1x32xf32> to vector<16x32xf32>
    %26 = arith.addf %23, %25 : vector<16x32xf32>
    %c0_10 = arith.constant 0 : index
    %c0_11 = arith.constant 0 : index
    %27 = vector.load %arg5[%c0_10, %c0_11] : memref<32x96xf32, #tpu.memory_space<vmem>>, vector<32x96xf32>
    %cst_12 = arith.constant dense<0.000000e+00> : vector<16x96xf32>
    %28 = tpu.matmul %26, %27, %cst_12 {dimension_numbers = #tpu.dot_dimension_numbers<[1], [0], [0], [1], [0, 0, 1, 1], [], []>} : vector<16x32xf32>, vector<32x96xf32>, vector<16x96xf32> -> vector<16x96xf32>
    %c0_13 = arith.constant 0 : index
    %c0_14 = arith.constant 0 : index
    %29 = vector.load %arg6[%c0_13, %c0_14] : memref<1x96xf32, #tpu.memory_space<vmem>>, vector<1x96xf32>
    %30 = vector.broadcast %29 : vector<1x96xf32> to vector<16x96xf32>
    %31 = arith.addf %28, %30 : vector<16x96xf32>
    %c0_15 = arith.constant 0 : index
    %c0_16 = arith.constant 0 : index
    %32 = vector.load %arg7[%c0_15, %c0_16] : memref<16x96xf32, #tpu.memory_space<vmem>>, vector<16x96xf32>
    tpu.vector_store %arg7[%c0_15, %c0_16], %31 {strides = array<i32>} : memref<16x96xf32, #tpu.memory_space<vmem>>, vector<16x96xf32>,
    return
  }
  func.func @transform_0(%arg0: i32, %arg1: i32) -> (i32, i32) {
    %c0_i32 = arith.constant 0 : i32
    %c0_i32_0 = arith.constant 0 : i32
    return %arg0, %c0_i32 : i32, i32
  }
  func.func @transform_1(%arg0: i32, %arg1: i32) -> (i32, i32) {
    %c0_i32 = arith.constant 0 : i32
    %c0_i32_0 = arith.constant 0 : i32
    %c0_i32_1 = arith.constant 0 : i32
    return %c0_i32, %c0_i32_0 : i32, i32
  }
  func.func @transform_2(%arg0: i32, %arg1: i32) -> (i32, i32) {
    %c0_i32 = arith.constant 0 : i32
    %c0_i32_0 = arith.constant 0 : i32
    %c0_i32_1 = arith.constant 0 : i32
    return %c0_i32, %c0_i32_0 : i32, i32
  }
  func.func @transform_3(%arg0: i32, %arg1: i32) -> (i32, i32) {
    %c0_i32 = arith.constant 0 : i32
    %c0_i32_0 = arith.constant 0 : i32
    return %c0_i32, %arg1 : i32, i32
  }
  func.func @transform_4(%arg0: i32, %arg1: i32) -> (i32, i32) {
    %c0_i32 = arith.constant 0 : i32
    %c0_i32_0 = arith.constant 0 : i32
    return %c0_i32, %arg1 : i32, i32
  }
  func.func @transform_5(%arg0: i32, %arg1: i32) -> (i32, i32) {
    %c0_i32 = arith.constant 0 : i32
    return %arg0, %arg1 : i32, i32
  }
}

module attributes {stable_mosaic.version = 11 : i64} {
  func.func @_fused_matmul_kernel(%arg0: i32, %arg1: i32, %arg2: memref<16x32xf32, #tpu.memory_space<vmem>>, %arg3: memref<32x32xf32, #tpu.memory_space<vmem>>, %arg4: memref<1x32xf32, #tpu.memory_space<vmem>>, %arg5: memref<16x32xf32, #tpu.memory_space<vmem>>, %arg6: memref<16x32xf32, #tpu.memory_space<vmem>>) attributes {dimension_semantics = [#tpu.dimension_semantics<parallel>, #tpu.dimension_semantics<parallel>], iteration_bounds = array<i64: 1, 1>, scalar_prefetch = 0 : i64, scratch_operands = 0 : i64, tpu.core_type = #tpu.core_type<tc>, window_params = [{transform_indices = @transform_0, window_bounds = array<i64: 16, 32>}, {transform_indices = @transform_1, window_bounds = array<i64: 32, 32>}, {transform_indices = @transform_2, window_bounds = array<i64: 1, 32>}, {transform_indices = @transform_3, window_bounds = array<i64: 16, 32>}, {transform_indices = @transform_4, window_bounds = array<i64: 16, 32>}]} {
    %c0 = arith.constant 0 : index
    %c0_0 = arith.constant 0 : index
    %0 = vector.load %arg2[%c0, %c0_0] : memref<16x32xf32, #tpu.memory_space<vmem>>, vector<16x32xf32>
    %c0_1 = arith.constant 0 : index
    %c0_2 = arith.constant 0 : index
    %1 = vector.load %arg3[%c0_1, %c0_2] : memref<32x32xf32, #tpu.memory_space<vmem>>, vector<32x32xf32>
    %cst = arith.constant dense<0.000000e+00> : vector<16x32xf32>
    %2 = tpu.matmul %0, %1, %cst {dimension_numbers = #tpu.dot_dimension_numbers<[1], [0], [0], [1], [0, 0, 1, 1], [], []>} : vector<16x32xf32>, vector<32x32xf32>, vector<16x32xf32> -> vector<16x32xf32>
    %c0_3 = arith.constant 0 : index
    %c0_4 = arith.constant 0 : index
    %3 = vector.load %arg4[%c0_3, %c0_4] : memref<1x32xf32, #tpu.memory_space<vmem>>, vector<1x32xf32>
    %4 = vector.broadcast %3 : vector<1x32xf32> to vector<16x32xf32>
    %5 = arith.addf %2, %4 : vector<16x32xf32>
    %c0_5 = arith.constant 0 : index
    %c0_6 = arith.constant 0 : index
    %6 = vector.load %arg5[%c0_5, %c0_6] : memref<16x32xf32, #tpu.memory_space<vmem>>, vector<16x32xf32>
    %7 = arith.addf %5, %6 : vector<16x32xf32>
    %c0_7 = arith.constant 0 : index
    %c0_8 = arith.constant 0 : index
    %8 = vector.load %arg6[%c0_7, %c0_8] : memref<16x32xf32, #tpu.memory_space<vmem>>, vector<16x32xf32>
    tpu.vector_store %arg6[%c0_7, %c0_8], %7 {strides = array<i32>} : memref<16x32xf32, #tpu.memory_space<vmem>>, vector<16x32xf32>,
    return
  }
  func.func @transform_0(%arg0: i32, %arg1: i32) -> (i32, i32) {
    %c0_i32 = arith.constant 0 : i32
    %c0_i32_0 = arith.constant 0 : i32
    return %arg0, %c0_i32 : i32, i32
  }
  func.func @transform_1(%arg0: i32, %arg1: i32) -> (i32, i32) {
    %c0_i32 = arith.constant 0 : i32
    %c0_i32_0 = arith.constant 0 : i32
    return %c0_i32, %arg1 : i32, i32
  }
  func.func @transform_2(%arg0: i32, %arg1: i32) -> (i32, i32) {
    %c0_i32 = arith.constant 0 : i32
    %c0_i32_0 = arith.constant 0 : i32
    return %c0_i32, %arg1 : i32, i32
  }
  func.func @transform_3(%arg0: i32, %arg1: i32) -> (i32, i32) {
    %c0_i32 = arith.constant 0 : i32
    return %arg0, %arg1 : i32, i32
  }
  func.func @transform_4(%arg0: i32, %arg1: i32) -> (i32, i32) {
    %c0_i32 = arith.constant 0 : i32
    return %arg0, %arg1 : i32, i32
  }
}

module attributes {stable_mosaic.version = 11 : i64} {
  func.func @_attention_kernel(%arg0: i32, %arg1: i32, %arg2: i32, %arg3: i32, %arg4: memref<1x8x32xf32, #tpu.memory_space<vmem>>, %arg5: memref<1x8x32xf32, #tpu.memory_space<vmem>>, %arg6: memref<1x8x32xf32, #tpu.memory_space<vmem>>, %arg7: memref<1x8x8xi8, #tpu.memory_space<vmem>>, %arg8: memref<1x8x32xf32, #tpu.memory_space<vmem>>, %arg9: memref<4x8x1xf32, #tpu.memory_space<vmem>>, %arg10: memref<4x8x1xf32, #tpu.memory_space<vmem>>, %arg11: memref<4x8x8xf32, #tpu.memory_space<vmem>>) attributes {dimension_semantics = [#tpu.dimension_semantics<parallel>, #tpu.dimension_semantics<parallel>, #tpu.dimension_semantics<parallel>, #tpu.dimension_semantics<arbitrary>], iteration_bounds = array<i64: 2, 1, 1, 1>, scalar_prefetch = 0 : i64, scratch_operands = 3 : i64, tpu.core_type = #tpu.core_type<tc>, window_params = [{transform_indices = @transform_0, window_bounds = array<i64: 1, 8, 32>}, {transform_indices = @transform_1, window_bounds = array<i64: 1, 8, 32>}, {transform_indices = @transform_2, window_bounds = array<i64: 1, 8, 32>}, {transform_indices = @transform_3, window_bounds = array<i64: 1, 8, 8>}, {transform_indices = @transform_4, window_bounds = array<i64: 1, 8, 32>}]} {
    %c0_i32 = arith.constant 0 : i32
    %0 = arith.cmpi eq, %arg3, %c0_i32 : i32
    %1 = arith.extui %0 : i1 to i32
    %c0_i32_0 = arith.constant 0 : i32
    %2 = arith.cmpi ne, %1, %c0_i32_0 : i32
    scf.if %2 {
      %cst_103 = arith.constant 0xFF800000 : f32
      %165 = vector.broadcast %cst_103 : f32 to vector<4x8x1xf32>
      %c0_104 = arith.constant 0 : index
      %c0_105 = arith.constant 0 : index
      %c0_106 = arith.constant 0 : index
      %166 = vector.load %arg9[%c0_104, %c0_105, %c0_106] : memref<4x8x1xf32, #tpu.memory_space<vmem>>, vector<4x8x1xf32>
      tpu.vector_store %arg9[%c0_104, %c0_105, %c0_106], %165 {strides = array<i32>} : memref<4x8x1xf32, #tpu.memory_space<vmem>>, vector<4x8x1xf32>,
      %cst_107 = arith.constant 0.000000e+00 : f32
      %167 = vector.broadcast %cst_107 : f32 to vector<4x8x1xf32>
      %c0_108 = arith.constant 0 : index
      %c0_109 = arith.constant 0 : index
      %c0_110 = arith.constant 0 : index
      %168 = vector.load %arg10[%c0_108, %c0_109, %c0_110] : memref<4x8x1xf32, #tpu.memory_space<vmem>>, vector<4x8x1xf32>
      tpu.vector_store %arg10[%c0_108, %c0_109, %c0_110], %167 {strides = array<i32>} : memref<4x8x1xf32, #tpu.memory_space<vmem>>, vector<4x8x1xf32>,
      %cst_111 = arith.constant 0.000000e+00 : f32
      %169 = vector.broadcast %cst_111 : f32 to vector<4x8x8xf32>
      %c0_112 = arith.constant 0 : index
      %c0_113 = arith.constant 0 : index
      %c0_114 = arith.constant 0 : index
      %170 = vector.load %arg11[%c0_112, %c0_113, %c0_114] : memref<4x8x8xf32, #tpu.memory_space<vmem>>, vector<4x8x8xf32>
      tpu.vector_store %arg11[%c0_112, %c0_113, %c0_114], %169 {strides = array<i32>} : memref<4x8x8xf32, #tpu.memory_space<vmem>>, vector<4x8x8xf32>,
    } else {
    }
    %c0 = arith.constant 0 : index
    %c0_1 = arith.constant 0 : index
    %c0_2 = arith.constant 0 : index
    %3 = vector.load %arg4[%c0, %c0_1, %c0_2] : memref<1x8x32xf32, #tpu.memory_space<vmem>>, vector<1x8x32xf32>
    %4 = vector.shape_cast %3 : vector<1x8x32xf32> to vector<8x32xf32>
    %c0_3 = arith.constant 0 : index
    %c0_4 = arith.constant 0 : index
    %c0_5 = arith.constant 0 : index
    %5 = vector.load %arg5[%c0_3, %c0_4, %c0_5] : memref<1x8x32xf32, #tpu.memory_space<vmem>>, vector<1x8x32xf32>
    %6 = vector.shape_cast %5 : vector<1x8x32xf32> to vector<8x32xf32>
    %c0_6 = arith.constant 0 : index
    %c0_7 = arith.constant 0 : index
    %c0_8 = arith.constant 0 : index
    %7 = vector.load %arg6[%c0_6, %c0_7, %c0_8] : memref<1x8x32xf32, #tpu.memory_space<vmem>>, vector<1x8x32xf32>
    %8 = vector.shape_cast %7 : vector<1x8x32xf32> to vector<8x32xf32>
    %c0_9 = arith.constant 0 : index
    %c0_10 = arith.constant 0 : index
    %c0_11 = arith.constant 0 : index
    %9 = vector.load %arg7[%c0_9, %c0_10, %c0_11] : memref<1x8x8xi8, #tpu.memory_space<vmem>>, vector<1x8x8xi8>
    %10 = vector.shape_cast %9 : vector<1x8x8xi8> to vector<8x8xi8>
    %11 = arith.extsi %10 : vector<8x8xi8> to vector<8x8xi32>
    %c0_i32_12 = arith.constant 0 : i32
    %12 = vector.broadcast %c0_i32_12 : i32 to vector<8x8xi32>
    %13 = arith.cmpi eq, %11, %12 : vector<8x8xi32>
    %14 = vector.extract_strided_slice %4 {offsets = [0, 0], sizes = [8, 8], strides = [1, 1]} : vector<8x32xf32> to vector<8x8xf32>
    %15 = vector.extract_strided_slice %6 {offsets = [0, 0], sizes = [8, 8], strides = [1, 1]} : vector<8x32xf32> to vector<8x8xf32>
    %16 = vector.extract_strided_slice %8 {offsets = [0, 0], sizes = [8, 8], strides = [1, 1]} : vector<8x32xf32> to vector<8x8xf32>
    %cst = arith.constant dense<0.000000e+00> : vector<8x8xf32>
    %17 = tpu.matmul %14, %15, %cst {dimension_numbers = #tpu.dot_dimension_numbers<[1], [1], [0], [0], [0, 0, 1, 0], [], []>} : vector<8x8xf32>, vector<8x8xf32>, vector<8x8xf32> -> vector<8x8xf32>
    %cst_13 = arith.constant -1.000000e+09 : f32
    %18 = vector.broadcast %cst_13 : f32 to vector<8x8xf32>
    %19 = arith.select %13, %18, %17 : vector<8x8xi1>, vector<8x8xf32>
    %c0_14 = arith.constant 0 : index
    %c0_15 = arith.constant 0 : index
    %c0_16 = arith.constant 0 : index
    %20 = vector.load %arg9[%c0_14, %c0_15, %c0_16] : memref<4x8x1xf32, #tpu.memory_space<vmem>>, vector<1x8x1xf32>
    %21 = vector.shape_cast %20 : vector<1x8x1xf32> to vector<8x1xf32>
    %cst_17 = arith.constant dense<0xFF800000> : vector<8xf32>
    %22 = vector.multi_reduction <maximumf>, %19, %cst_17 [1] : vector<8x8xf32> to vector<8xf32>
    %23 = vector.shape_cast %22 : vector<8xf32> to vector<8x1xf32>
    %24 = arith.maximumf %21, %23 : vector<8x1xf32>
    %25 = arith.subf %21, %24 : vector<8x1xf32>
    %26 = math.exp %25 : vector<8x1xf32>
    %27 = vector.broadcast %24 : vector<8x1xf32> to vector<8x8xf32>
    %28 = arith.subf %19, %27 : vector<8x8xf32>
    %29 = math.exp %28 : vector<8x8xf32>
    %c0_18 = arith.constant 0 : index
    %c0_19 = arith.constant 0 : index
    %c0_20 = arith.constant 0 : index
    %30 = vector.load %arg10[%c0_18, %c0_19, %c0_20] : memref<4x8x1xf32, #tpu.memory_space<vmem>>, vector<1x8x1xf32>
    %31 = vector.shape_cast %30 : vector<1x8x1xf32> to vector<8x1xf32>
    %32 = arith.mulf %26, %31 : vector<8x1xf32>
    %cst_21 = arith.constant dense<0.000000e+00> : vector<8xf32>
    %33 = vector.multi_reduction <add>, %29, %cst_21 [1] : vector<8x8xf32> to vector<8xf32>
    %34 = vector.shape_cast %33 : vector<8xf32> to vector<8x1xf32>
    %35 = arith.addf %32, %34 : vector<8x1xf32>
    %c0_22 = arith.constant 0 : index
    %c0_23 = arith.constant 0 : index
    %c0_24 = arith.constant 0 : index
    %36 = vector.load %arg10[%c0_22, %c0_23, %c0_24] : memref<4x8x1xf32, #tpu.memory_space<vmem>>, vector<1x8x1xf32>
    %37 = vector.shape_cast %36 : vector<1x8x1xf32> to vector<8x1xf32>
    %38 = vector.shape_cast %35 : vector<8x1xf32> to vector<1x8x1xf32>
    tpu.vector_store %arg10[%c0_22, %c0_23, %c0_24], %38 {strides = array<i32>} : memref<4x8x1xf32, #tpu.memory_space<vmem>>, vector<1x8x1xf32>,
    %c0_25 = arith.constant 0 : index
    %c0_26 = arith.constant 0 : index
    %c0_27 = arith.constant 0 : index
    %39 = vector.load %arg11[%c0_25, %c0_26, %c0_27] : memref<4x8x8xf32, #tpu.memory_space<vmem>>, vector<1x8x8xf32>
    %40 = vector.shape_cast %39 : vector<1x8x8xf32> to vector<8x8xf32>
    %41 = vector.broadcast %26 : vector<8x1xf32> to vector<8x8xf32>
    %42 = arith.mulf %41, %40 : vector<8x8xf32>
    %cst_28 = arith.constant dense<0.000000e+00> : vector<8x8xf32>
    %43 = tpu.matmul %29, %16, %cst_28 {dimension_numbers = #tpu.dot_dimension_numbers<[1], [0], [0], [1], [0, 0, 1, 1], [], []>} : vector<8x8xf32>, vector<8x8xf32>, vector<8x8xf32> -> vector<8x8xf32>
    %44 = arith.addf %42, %43 : vector<8x8xf32>
    %c0_29 = arith.constant 0 : index
    %c0_30 = arith.constant 0 : index
    %c0_31 = arith.constant 0 : index
    %45 = vector.load %arg11[%c0_29, %c0_30, %c0_31] : memref<4x8x8xf32, #tpu.memory_space<vmem>>, vector<1x8x8xf32>
    %46 = vector.shape_cast %45 : vector<1x8x8xf32> to vector<8x8xf32>
    %47 = vector.shape_cast %44 : vector<8x8xf32> to vector<1x8x8xf32>
    tpu.vector_store %arg11[%c0_29, %c0_30, %c0_31], %47 {strides = array<i32>} : memref<4x8x8xf32, #tpu.memory_space<vmem>>, vector<1x8x8xf32>,
    %c0_32 = arith.constant 0 : index
    %c0_33 = arith.constant 0 : index
    %c0_34 = arith.constant 0 : index
    %48 = vector.load %arg9[%c0_32, %c0_33, %c0_34] : memref<4x8x1xf32, #tpu.memory_space<vmem>>, vector<1x8x1xf32>
    %49 = vector.shape_cast %48 : vector<1x8x1xf32> to vector<8x1xf32>
    %50 = vector.shape_cast %24 : vector<8x1xf32> to vector<1x8x1xf32>
    tpu.vector_store %arg9[%c0_32, %c0_33, %c0_34], %50 {strides = array<i32>} : memref<4x8x1xf32, #tpu.memory_space<vmem>>, vector<1x8x1xf32>,
    %51 = vector.extract_strided_slice %4 {offsets = [0, 8], sizes = [8, 8], strides = [1, 1]} : vector<8x32xf32> to vector<8x8xf32>
    %52 = vector.extract_strided_slice %6 {offsets = [0, 8], sizes = [8, 8], strides = [1, 1]} : vector<8x32xf32> to vector<8x8xf32>
    %53 = vector.extract_strided_slice %8 {offsets = [0, 8], sizes = [8, 8], strides = [1, 1]} : vector<8x32xf32> to vector<8x8xf32>
    %cst_35 = arith.constant dense<0.000000e+00> : vector<8x8xf32>
    %54 = tpu.matmul %51, %52, %cst_35 {dimension_numbers = #tpu.dot_dimension_numbers<[1], [1], [0], [0], [0, 0, 1, 0], [], []>} : vector<8x8xf32>, vector<8x8xf32>, vector<8x8xf32> -> vector<8x8xf32>
    %cst_36 = arith.constant -1.000000e+09 : f32
    %55 = vector.broadcast %cst_36 : f32 to vector<8x8xf32>
    %56 = arith.select %13, %55, %54 : vector<8x8xi1>, vector<8x8xf32>
    %c1 = arith.constant 1 : index
    %c0_37 = arith.constant 0 : index
    %c0_38 = arith.constant 0 : index
    %57 = vector.load %arg9[%c1, %c0_37, %c0_38] : memref<4x8x1xf32, #tpu.memory_space<vmem>>, vector<1x8x1xf32>
    %58 = vector.shape_cast %57 : vector<1x8x1xf32> to vector<8x1xf32>
    %cst_39 = arith.constant dense<0xFF800000> : vector<8xf32>
    %59 = vector.multi_reduction <maximumf>, %56, %cst_39 [1] : vector<8x8xf32> to vector<8xf32>
    %60 = vector.shape_cast %59 : vector<8xf32> to vector<8x1xf32>
    %61 = arith.maximumf %58, %60 : vector<8x1xf32>
    %62 = arith.subf %58, %61 : vector<8x1xf32>
    %63 = math.exp %62 : vector<8x1xf32>
    %64 = vector.broadcast %61 : vector<8x1xf32> to vector<8x8xf32>
    %65 = arith.subf %56, %64 : vector<8x8xf32>
    %66 = math.exp %65 : vector<8x8xf32>
    %c1_40 = arith.constant 1 : index
    %c0_41 = arith.constant 0 : index
    %c0_42 = arith.constant 0 : index
    %67 = vector.load %arg10[%c1_40, %c0_41, %c0_42] : memref<4x8x1xf32, #tpu.memory_space<vmem>>, vector<1x8x1xf32>
    %68 = vector.shape_cast %67 : vector<1x8x1xf32> to vector<8x1xf32>
    %69 = arith.mulf %63, %68 : vector<8x1xf32>
    %cst_43 = arith.constant dense<0.000000e+00> : vector<8xf32>
    %70 = vector.multi_reduction <add>, %66, %cst_43 [1] : vector<8x8xf32> to vector<8xf32>
    %71 = vector.shape_cast %70 : vector<8xf32> to vector<8x1xf32>
    %72 = arith.addf %69, %71 : vector<8x1xf32>
    %c1_44 = arith.constant 1 : index
    %c0_45 = arith.constant 0 : index
    %c0_46 = arith.constant 0 : index
    %73 = vector.load %arg10[%c1_44, %c0_45, %c0_46] : memref<4x8x1xf32, #tpu.memory_space<vmem>>, vector<1x8x1xf32>
    %74 = vector.shape_cast %73 : vector<1x8x1xf32> to vector<8x1xf32>
    %75 = vector.shape_cast %72 : vector<8x1xf32> to vector<1x8x1xf32>
    tpu.vector_store %arg10[%c1_44, %c0_45, %c0_46], %75 {strides = array<i32>} : memref<4x8x1xf32, #tpu.memory_space<vmem>>, vector<1x8x1xf32>,
    %c1_47 = arith.constant 1 : index
    %c0_48 = arith.constant 0 : index
    %c0_49 = arith.constant 0 : index
    %76 = vector.load %arg11[%c1_47, %c0_48, %c0_49] : memref<4x8x8xf32, #tpu.memory_space<vmem>>, vector<1x8x8xf32>
    %77 = vector.shape_cast %76 : vector<1x8x8xf32> to vector<8x8xf32>
    %78 = vector.broadcast %63 : vector<8x1xf32> to vector<8x8xf32>
    %79 = arith.mulf %78, %77 : vector<8x8xf32>
    %cst_50 = arith.constant dense<0.000000e+00> : vector<8x8xf32>
    %80 = tpu.matmul %66, %53, %cst_50 {dimension_numbers = #tpu.dot_dimension_numbers<[1], [0], [0], [1], [0, 0, 1, 1], [], []>} : vector<8x8xf32>, vector<8x8xf32>, vector<8x8xf32> -> vector<8x8xf32>
    %81 = arith.addf %79, %80 : vector<8x8xf32>
    %c1_51 = arith.constant 1 : index
    %c0_52 = arith.constant 0 : index
    %c0_53 = arith.constant 0 : index
    %82 = vector.load %arg11[%c1_51, %c0_52, %c0_53] : memref<4x8x8xf32, #tpu.memory_space<vmem>>, vector<1x8x8xf32>
    %83 = vector.shape_cast %82 : vector<1x8x8xf32> to vector<8x8xf32>
    %84 = vector.shape_cast %81 : vector<8x8xf32> to vector<1x8x8xf32>
    tpu.vector_store %arg11[%c1_51, %c0_52, %c0_53], %84 {strides = array<i32>} : memref<4x8x8xf32, #tpu.memory_space<vmem>>, vector<1x8x8xf32>,
    %c1_54 = arith.constant 1 : index
    %c0_55 = arith.constant 0 : index
    %c0_56 = arith.constant 0 : index
    %85 = vector.load %arg9[%c1_54, %c0_55, %c0_56] : memref<4x8x1xf32, #tpu.memory_space<vmem>>, vector<1x8x1xf32>
    %86 = vector.shape_cast %85 : vector<1x8x1xf32> to vector<8x1xf32>
    %87 = vector.shape_cast %61 : vector<8x1xf32> to vector<1x8x1xf32>
    tpu.vector_store %arg9[%c1_54, %c0_55, %c0_56], %87 {strides = array<i32>} : memref<4x8x1xf32, #tpu.memory_space<vmem>>, vector<1x8x1xf32>,
    %88 = vector.extract_strided_slice %4 {offsets = [0, 16], sizes = [8, 8], strides = [1, 1]} : vector<8x32xf32> to vector<8x8xf32>
    %89 = vector.extract_strided_slice %6 {offsets = [0, 16], sizes = [8, 8], strides = [1, 1]} : vector<8x32xf32> to vector<8x8xf32>
    %90 = vector.extract_strided_slice %8 {offsets = [0, 16], sizes = [8, 8], strides = [1, 1]} : vector<8x32xf32> to vector<8x8xf32>
    %cst_57 = arith.constant dense<0.000000e+00> : vector<8x8xf32>
    %91 = tpu.matmul %88, %89, %cst_57 {dimension_numbers = #tpu.dot_dimension_numbers<[1], [1], [0], [0], [0, 0, 1, 0], [], []>} : vector<8x8xf32>, vector<8x8xf32>, vector<8x8xf32> -> vector<8x8xf32>
    %cst_58 = arith.constant -1.000000e+09 : f32
    %92 = vector.broadcast %cst_58 : f32 to vector<8x8xf32>
    %93 = arith.select %13, %92, %91 : vector<8x8xi1>, vector<8x8xf32>
    %c2 = arith.constant 2 : index
    %c0_59 = arith.constant 0 : index
    %c0_60 = arith.constant 0 : index
    %94 = vector.load %arg9[%c2, %c0_59, %c0_60] : memref<4x8x1xf32, #tpu.memory_space<vmem>>, vector<1x8x1xf32>
    %95 = vector.shape_cast %94 : vector<1x8x1xf32> to vector<8x1xf32>
    %cst_61 = arith.constant dense<0xFF800000> : vector<8xf32>
    %96 = vector.multi_reduction <maximumf>, %93, %cst_61 [1] : vector<8x8xf32> to vector<8xf32>
    %97 = vector.shape_cast %96 : vector<8xf32> to vector<8x1xf32>
    %98 = arith.maximumf %95, %97 : vector<8x1xf32>
    %99 = arith.subf %95, %98 : vector<8x1xf32>
    %100 = math.exp %99 : vector<8x1xf32>
    %101 = vector.broadcast %98 : vector<8x1xf32> to vector<8x8xf32>
    %102 = arith.subf %93, %101 : vector<8x8xf32>
    %103 = math.exp %102 : vector<8x8xf32>
    %c2_62 = arith.constant 2 : index
    %c0_63 = arith.constant 0 : index
    %c0_64 = arith.constant 0 : index
    %104 = vector.load %arg10[%c2_62, %c0_63, %c0_64] : memref<4x8x1xf32, #tpu.memory_space<vmem>>, vector<1x8x1xf32>
    %105 = vector.shape_cast %104 : vector<1x8x1xf32> to vector<8x1xf32>
    %106 = arith.mulf %100, %105 : vector<8x1xf32>
    %cst_65 = arith.constant dense<0.000000e+00> : vector<8xf32>
    %107 = vector.multi_reduction <add>, %103, %cst_65 [1] : vector<8x8xf32> to vector<8xf32>
    %108 = vector.shape_cast %107 : vector<8xf32> to vector<8x1xf32>
    %109 = arith.addf %106, %108 : vector<8x1xf32>
    %c2_66 = arith.constant 2 : index
    %c0_67 = arith.constant 0 : index
    %c0_68 = arith.constant 0 : index
    %110 = vector.load %arg10[%c2_66, %c0_67, %c0_68] : memref<4x8x1xf32, #tpu.memory_space<vmem>>, vector<1x8x1xf32>
    %111 = vector.shape_cast %110 : vector<1x8x1xf32> to vector<8x1xf32>
    %112 = vector.shape_cast %109 : vector<8x1xf32> to vector<1x8x1xf32>
    tpu.vector_store %arg10[%c2_66, %c0_67, %c0_68], %112 {strides = array<i32>} : memref<4x8x1xf32, #tpu.memory_space<vmem>>, vector<1x8x1xf32>,
    %c2_69 = arith.constant 2 : index
    %c0_70 = arith.constant 0 : index
    %c0_71 = arith.constant 0 : index
    %113 = vector.load %arg11[%c2_69, %c0_70, %c0_71] : memref<4x8x8xf32, #tpu.memory_space<vmem>>, vector<1x8x8xf32>
    %114 = vector.shape_cast %113 : vector<1x8x8xf32> to vector<8x8xf32>
    %115 = vector.broadcast %100 : vector<8x1xf32> to vector<8x8xf32>
    %116 = arith.mulf %115, %114 : vector<8x8xf32>
    %cst_72 = arith.constant dense<0.000000e+00> : vector<8x8xf32>
    %117 = tpu.matmul %103, %90, %cst_72 {dimension_numbers = #tpu.dot_dimension_numbers<[1], [0], [0], [1], [0, 0, 1, 1], [], []>} : vector<8x8xf32>, vector<8x8xf32>, vector<8x8xf32> -> vector<8x8xf32>
    %118 = arith.addf %116, %117 : vector<8x8xf32>
    %c2_73 = arith.constant 2 : index
    %c0_74 = arith.constant 0 : index
    %c0_75 = arith.constant 0 : index
    %119 = vector.load %arg11[%c2_73, %c0_74, %c0_75] : memref<4x8x8xf32, #tpu.memory_space<vmem>>, vector<1x8x8xf32>
    %120 = vector.shape_cast %119 : vector<1x8x8xf32> to vector<8x8xf32>
    %121 = vector.shape_cast %118 : vector<8x8xf32> to vector<1x8x8xf32>
    tpu.vector_store %arg11[%c2_73, %c0_74, %c0_75], %121 {strides = array<i32>} : memref<4x8x8xf32, #tpu.memory_space<vmem>>, vector<1x8x8xf32>,
    %c2_76 = arith.constant 2 : index
    %c0_77 = arith.constant 0 : index
    %c0_78 = arith.constant 0 : index
    %122 = vector.load %arg9[%c2_76, %c0_77, %c0_78] : memref<4x8x1xf32, #tpu.memory_space<vmem>>, vector<1x8x1xf32>
    %123 = vector.shape_cast %122 : vector<1x8x1xf32> to vector<8x1xf32>
    %124 = vector.shape_cast %98 : vector<8x1xf32> to vector<1x8x1xf32>
    tpu.vector_store %arg9[%c2_76, %c0_77, %c0_78], %124 {strides = array<i32>} : memref<4x8x1xf32, #tpu.memory_space<vmem>>, vector<1x8x1xf32>,
    %125 = vector.extract_strided_slice %4 {offsets = [0, 24], sizes = [8, 8], strides = [1, 1]} : vector<8x32xf32> to vector<8x8xf32>
    %126 = vector.extract_strided_slice %6 {offsets = [0, 24], sizes = [8, 8], strides = [1, 1]} : vector<8x32xf32> to vector<8x8xf32>
    %127 = vector.extract_strided_slice %8 {offsets = [0, 24], sizes = [8, 8], strides = [1, 1]} : vector<8x32xf32> to vector<8x8xf32>
    %cst_79 = arith.constant dense<0.000000e+00> : vector<8x8xf32>
    %128 = tpu.matmul %125, %126, %cst_79 {dimension_numbers = #tpu.dot_dimension_numbers<[1], [1], [0], [0], [0, 0, 1, 0], [], []>} : vector<8x8xf32>, vector<8x8xf32>, vector<8x8xf32> -> vector<8x8xf32>
    %cst_80 = arith.constant -1.000000e+09 : f32
    %129 = vector.broadcast %cst_80 : f32 to vector<8x8xf32>
    %130 = arith.select %13, %129, %128 : vector<8x8xi1>, vector<8x8xf32>
    %c3 = arith.constant 3 : index
    %c0_81 = arith.constant 0 : index
    %c0_82 = arith.constant 0 : index
    %131 = vector.load %arg9[%c3, %c0_81, %c0_82] : memref<4x8x1xf32, #tpu.memory_space<vmem>>, vector<1x8x1xf32>
    %132 = vector.shape_cast %131 : vector<1x8x1xf32> to vector<8x1xf32>
    %cst_83 = arith.constant dense<0xFF800000> : vector<8xf32>
    %133 = vector.multi_reduction <maximumf>, %130, %cst_83 [1] : vector<8x8xf32> to vector<8xf32>
    %134 = vector.shape_cast %133 : vector<8xf32> to vector<8x1xf32>
    %135 = arith.maximumf %132, %134 : vector<8x1xf32>
    %136 = arith.subf %132, %135 : vector<8x1xf32>
    %137 = math.exp %136 : vector<8x1xf32>
    %138 = vector.broadcast %135 : vector<8x1xf32> to vector<8x8xf32>
    %139 = arith.subf %130, %138 : vector<8x8xf32>
    %140 = math.exp %139 : vector<8x8xf32>
    %c3_84 = arith.constant 3 : index
    %c0_85 = arith.constant 0 : index
    %c0_86 = arith.constant 0 : index
    %141 = vector.load %arg10[%c3_84, %c0_85, %c0_86] : memref<4x8x1xf32, #tpu.memory_space<vmem>>, vector<1x8x1xf32>
    %142 = vector.shape_cast %141 : vector<1x8x1xf32> to vector<8x1xf32>
    %143 = arith.mulf %137, %142 : vector<8x1xf32>
    %cst_87 = arith.constant dense<0.000000e+00> : vector<8xf32>
    %144 = vector.multi_reduction <add>, %140, %cst_87 [1] : vector<8x8xf32> to vector<8xf32>
    %145 = vector.shape_cast %144 : vector<8xf32> to vector<8x1xf32>
    %146 = arith.addf %143, %145 : vector<8x1xf32>
    %c3_88 = arith.constant 3 : index
    %c0_89 = arith.constant 0 : index
    %c0_90 = arith.constant 0 : index
    %147 = vector.load %arg10[%c3_88, %c0_89, %c0_90] : memref<4x8x1xf32, #tpu.memory_space<vmem>>, vector<1x8x1xf32>
    %148 = vector.shape_cast %147 : vector<1x8x1xf32> to vector<8x1xf32>
    %149 = vector.shape_cast %146 : vector<8x1xf32> to vector<1x8x1xf32>
    tpu.vector_store %arg10[%c3_88, %c0_89, %c0_90], %149 {strides = array<i32>} : memref<4x8x1xf32, #tpu.memory_space<vmem>>, vector<1x8x1xf32>,
    %c3_91 = arith.constant 3 : index
    %c0_92 = arith.constant 0 : index
    %c0_93 = arith.constant 0 : index
    %150 = vector.load %arg11[%c3_91, %c0_92, %c0_93] : memref<4x8x8xf32, #tpu.memory_space<vmem>>, vector<1x8x8xf32>
    %151 = vector.shape_cast %150 : vector<1x8x8xf32> to vector<8x8xf32>
    %152 = vector.broadcast %137 : vector<8x1xf32> to vector<8x8xf32>
    %153 = arith.mulf %152, %151 : vector<8x8xf32>
    %cst_94 = arith.constant dense<0.000000e+00> : vector<8x8xf32>
    %154 = tpu.matmul %140, %127, %cst_94 {dimension_numbers = #tpu.dot_dimension_numbers<[1], [0], [0], [1], [0, 0, 1, 1], [], []>} : vector<8x8xf32>, vector<8x8xf32>, vector<8x8xf32> -> vector<8x8xf32>
    %155 = arith.addf %153, %154 : vector<8x8xf32>
    %c3_95 = arith.constant 3 : index
    %c0_96 = arith.constant 0 : index
    %c0_97 = arith.constant 0 : index
    %156 = vector.load %arg11[%c3_95, %c0_96, %c0_97] : memref<4x8x8xf32, #tpu.memory_space<vmem>>, vector<1x8x8xf32>
    %157 = vector.shape_cast %156 : vector<1x8x8xf32> to vector<8x8xf32>
    %158 = vector.shape_cast %155 : vector<8x8xf32> to vector<1x8x8xf32>
    tpu.vector_store %arg11[%c3_95, %c0_96, %c0_97], %158 {strides = array<i32>} : memref<4x8x8xf32, #tpu.memory_space<vmem>>, vector<1x8x8xf32>,
    %c3_98 = arith.constant 3 : index
    %c0_99 = arith.constant 0 : index
    %c0_100 = arith.constant 0 : index
    %159 = vector.load %arg9[%c3_98, %c0_99, %c0_100] : memref<4x8x1xf32, #tpu.memory_space<vmem>>, vector<1x8x1xf32>
    %160 = vector.shape_cast %159 : vector<1x8x1xf32> to vector<8x1xf32>
    %161 = vector.shape_cast %135 : vector<8x1xf32> to vector<1x8x1xf32>
    tpu.vector_store %arg9[%c3_98, %c0_99, %c0_100], %161 {strides = array<i32>} : memref<4x8x1xf32, #tpu.memory_space<vmem>>, vector<1x8x1xf32>,
    %c0_i32_101 = arith.constant 0 : i32
    %162 = arith.cmpi eq, %arg3, %c0_i32_101 : i32
    %163 = arith.extui %162 : i1 to i32
    %c0_i32_102 = arith.constant 0 : i32
    %164 = arith.cmpi ne, %163, %c0_i32_102 : i32
    scf.if %164 {
      %c0_103 = arith.constant 0 : index
      %c0_104 = arith.constant 0 : index
      %c0_105 = arith.constant 0 : index
      %165 = vector.load %arg10[%c0_103, %c0_104, %c0_105] : memref<4x8x1xf32, #tpu.memory_space<vmem>>, vector<1x8x1xf32>
      %166 = vector.shape_cast %165 : vector<1x8x1xf32> to vector<8x1xf32>
      %cst_106 = arith.constant 1.000000e+00 : f32
      %167 = vector.broadcast %cst_106 : f32 to vector<8x1xf32>
      %168 = arith.divf %167, %166 : vector<8x1xf32>
      %c0_107 = arith.constant 0 : index
      %c0_108 = arith.constant 0 : index
      %c0_109 = arith.constant 0 : index
      %169 = vector.load %arg11[%c0_107, %c0_108, %c0_109] : memref<4x8x8xf32, #tpu.memory_space<vmem>>, vector<1x8x8xf32>
      %170 = vector.shape_cast %169 : vector<1x8x8xf32> to vector<8x8xf32>
      %171 = vector.broadcast %168 : vector<8x1xf32> to vector<8x8xf32>
      %172 = arith.mulf %170, %171 : vector<8x8xf32>
      %c0_110 = arith.constant 0 : index
      %c0_111 = arith.constant 0 : index
      %c0_112 = arith.constant 0 : index
      %173 = vector.load %arg8[%c0_110, %c0_111, %c0_112] : memref<1x8x32xf32, #tpu.memory_space<vmem>>, vector<1x8x8xf32>
      %174 = vector.shape_cast %173 : vector<1x8x8xf32> to vector<8x8xf32>
      %175 = vector.shape_cast %172 : vector<8x8xf32> to vector<1x8x8xf32>
      tpu.vector_store %arg8[%c0_110, %c0_111, %c0_112], %175 {strides = array<i32>} : memref<1x8x32xf32, #tpu.memory_space<vmem>>, vector<1x8x8xf32>,
      %c1_113 = arith.constant 1 : index
      %c0_114 = arith.constant 0 : index
      %c0_115 = arith.constant 0 : index
      %176 = vector.load %arg10[%c1_113, %c0_114, %c0_115] : memref<4x8x1xf32, #tpu.memory_space<vmem>>, vector<1x8x1xf32>
      %177 = vector.shape_cast %176 : vector<1x8x1xf32> to vector<8x1xf32>
      %cst_116 = arith.constant 1.000000e+00 : f32
      %178 = vector.broadcast %cst_116 : f32 to vector<8x1xf32>
      %179 = arith.divf %178, %177 : vector<8x1xf32>
      %c1_117 = arith.constant 1 : index
      %c0_118 = arith.constant 0 : index
      %c0_119 = arith.constant 0 : index
      %180 = vector.load %arg11[%c1_117, %c0_118, %c0_119] : memref<4x8x8xf32, #tpu.memory_space<vmem>>, vector<1x8x8xf32>
      %181 = vector.shape_cast %180 : vector<1x8x8xf32> to vector<8x8xf32>
      %182 = vector.broadcast %179 : vector<8x1xf32> to vector<8x8xf32>
      %183 = arith.mulf %181, %182 : vector<8x8xf32>
      %c0_120 = arith.constant 0 : index
      %c0_121 = arith.constant 0 : index
      %c8 = arith.constant 8 : index
      %184 = vector.load %arg8[%c0_120, %c0_121, %c8] : memref<1x8x32xf32, #tpu.memory_space<vmem>>, vector<1x8x8xf32>
      %185 = vector.shape_cast %184 : vector<1x8x8xf32> to vector<8x8xf32>
      %186 = vector.shape_cast %183 : vector<8x8xf32> to vector<1x8x8xf32>
      tpu.vector_store %arg8[%c0_120, %c0_121, %c8], %186 {strides = array<i32>} : memref<1x8x32xf32, #tpu.memory_space<vmem>>, vector<1x8x8xf32>,
      %c2_122 = arith.constant 2 : index
      %c0_123 = arith.constant 0 : index
      %c0_124 = arith.constant 0 : index
      %187 = vector.load %arg10[%c2_122, %c0_123, %c0_124] : memref<4x8x1xf32, #tpu.memory_space<vmem>>, vector<1x8x1xf32>
      %188 = vector.shape_cast %187 : vector<1x8x1xf32> to vector<8x1xf32>
      %cst_125 = arith.constant 1.000000e+00 : f32
      %189 = vector.broadcast %cst_125 : f32 to vector<8x1xf32>
      %190 = arith.divf %189, %188 : vector<8x1xf32>
      %c2_126 = arith.constant 2 : index
      %c0_127 = arith.constant 0 : index
      %c0_128 = arith.constant 0 : index
      %191 = vector.load %arg11[%c2_126, %c0_127, %c0_128] : memref<4x8x8xf32, #tpu.memory_space<vmem>>, vector<1x8x8xf32>
      %192 = vector.shape_cast %191 : vector<1x8x8xf32> to vector<8x8xf32>
      %193 = vector.broadcast %190 : vector<8x1xf32> to vector<8x8xf32>
      %194 = arith.mulf %192, %193 : vector<8x8xf32>
      %c0_129 = arith.constant 0 : index
      %c0_130 = arith.constant 0 : index
      %c16 = arith.constant 16 : index
      %195 = vector.load %arg8[%c0_129, %c0_130, %c16] : memref<1x8x32xf32, #tpu.memory_space<vmem>>, vector<1x8x8xf32>
      %196 = vector.shape_cast %195 : vector<1x8x8xf32> to vector<8x8xf32>
      %197 = vector.shape_cast %194 : vector<8x8xf32> to vector<1x8x8xf32>
      tpu.vector_store %arg8[%c0_129, %c0_130, %c16], %197 {strides = array<i32>} : memref<1x8x32xf32, #tpu.memory_space<vmem>>, vector<1x8x8xf32>,
      %c3_131 = arith.constant 3 : index
      %c0_132 = arith.constant 0 : index
      %c0_133 = arith.constant 0 : index
      %198 = vector.load %arg10[%c3_131, %c0_132, %c0_133] : memref<4x8x1xf32, #tpu.memory_space<vmem>>, vector<1x8x1xf32>
      %199 = vector.shape_cast %198 : vector<1x8x1xf32> to vector<8x1xf32>
      %cst_134 = arith.constant 1.000000e+00 : f32
      %200 = vector.broadcast %cst_134 : f32 to vector<8x1xf32>
      %201 = arith.divf %200, %199 : vector<8x1xf32>
      %c3_135 = arith.constant 3 : index
      %c0_136 = arith.constant 0 : index
      %c0_137 = arith.constant 0 : index
      %202 = vector.load %arg11[%c3_135, %c0_136, %c0_137] : memref<4x8x8xf32, #tpu.memory_space<vmem>>, vector<1x8x8xf32>
      %203 = vector.shape_cast %202 : vector<1x8x8xf32> to vector<8x8xf32>
      %204 = vector.broadcast %201 : vector<8x1xf32> to vector<8x8xf32>
      %205 = arith.mulf %203, %204 : vector<8x8xf32>
      %c0_138 = arith.constant 0 : index
      %c0_139 = arith.constant 0 : index
      %c24 = arith.constant 24 : index
      %206 = vector.load %arg8[%c0_138, %c0_139, %c24] : memref<1x8x32xf32, #tpu.memory_space<vmem>>, vector<1x8x8xf32>
      %207 = vector.shape_cast %206 : vector<1x8x8xf32> to vector<8x8xf32>
      %208 = vector.shape_cast %205 : vector<8x8xf32> to vector<1x8x8xf32>
      tpu.vector_store %arg8[%c0_138, %c0_139, %c24], %208 {strides = array<i32>} : memref<1x8x32xf32, #tpu.memory_space<vmem>>, vector<1x8x8xf32>,
    } else {
    }
    return
  }
  func.func @transform_0(%arg0: i32, %arg1: i32, %arg2: i32, %arg3: i32) -> (i32, i32, i32) {
    %c0_i32 = arith.constant 0 : i32
    return %arg0, %arg2, %arg1 : i32, i32, i32
  }
  func.func @transform_1(%arg0: i32, %arg1: i32, %arg2: i32, %arg3: i32) -> (i32, i32, i32) {
    %c0_i32 = arith.constant 0 : i32
    return %arg0, %arg3, %arg1 : i32, i32, i32
  }
  func.func @transform_2(%arg0: i32, %arg1: i32, %arg2: i32, %arg3: i32) -> (i32, i32, i32) {
    %c0_i32 = arith.constant 0 : i32
    return %arg0, %arg3, %arg1 : i32, i32, i32
  }
  func.func @transform_3(%arg0: i32, %arg1: i32, %arg2: i32, %arg3: i32) -> (i32, i32, i32) {
    %c0_i32 = arith.constant 0 : i32
    return %arg0, %arg2, %arg3 : i32, i32, i32
  }
  func.func @transform_4(%arg0: i32, %arg1: i32, %arg2: i32, %arg3: i32) -> (i32, i32, i32) {
    %c0_i32 = arith.constant 0 : i32
    return %arg0, %arg2, %arg1 : i32, i32, i32
  }
}

module attributes {stable_mosaic.version = 11 : i64} {
  func.func @_fused_matmul_kernel(%arg0: i32, %arg1: i32, %arg2: memref<16x32xf32, #tpu.memory_space<vmem>>, %arg3: memref<1x32xf32, #tpu.memory_space<vmem>>, %arg4: memref<1x32xf32, #tpu.memory_space<vmem>>, %arg5: memref<32x32xf32, #tpu.memory_space<vmem>>, %arg6: memref<1x32xf32, #tpu.memory_space<vmem>>, %arg7: memref<16x32xf32, #tpu.memory_space<vmem>>) attributes {dimension_semantics = [#tpu.dimension_semantics<parallel>, #tpu.dimension_semantics<parallel>], iteration_bounds = array<i64: 1, 1>, scalar_prefetch = 0 : i64, scratch_operands = 0 : i64, tpu.core_type = #tpu.core_type<tc>, window_params = [{transform_indices = @transform_0, window_bounds = array<i64: 16, 32>}, {pipeline_mode = #tpu.pipeline_mode<synchronous>, transform_indices = @transform_1, window_bounds = array<i64: 1, 32>}, {pipeline_mode = #tpu.pipeline_mode<synchronous>, transform_indices = @transform_2, window_bounds = array<i64: 1, 32>}, {transform_indices = @transform_3, window_bounds = array<i64: 32, 32>}, {transform_indices = @transform_4, window_bounds = array<i64: 1, 32>}, {transform_indices = @transform_5, window_bounds = array<i64: 16, 32>}]} {
    %c0 = arith.constant 0 : index
    %c0_0 = arith.constant 0 : index
    %0 = vector.load %arg2[%c0, %c0_0] : memref<16x32xf32, #tpu.memory_space<vmem>>, vector<16x32xf32>
    %cst = arith.constant dense<0.000000e+00> : vector<16xf32>
    %1 = vector.multi_reduction <add>, %0, %cst [1] : vector<16x32xf32> to vector<16xf32>
    %2 = vector.shape_cast %1 : vector<16xf32> to vector<16x1xf32>
    %cst_1 = arith.constant 3.200000e+01 : f32
    %3 = vector.broadcast %cst_1 : f32 to vector<16x1xf32>
    %4 = arith.divf %2, %3 : vector<16x1xf32>
    %5 = vector.broadcast %4 : vector<16x1xf32> to vector<16x32xf32>
    %6 = arith.subf %0, %5 : vector<16x32xf32>
    %7 = arith.mulf %6, %6 : vector<16x32xf32>
    %cst_2 = arith.constant dense<0.000000e+00> : vector<16xf32>
    %8 = vector.multi_reduction <add>, %7, %cst_2 [1] : vector<16x32xf32> to vector<16xf32>
    %9 = vector.shape_cast %8 : vector<16xf32> to vector<16x1xf32>
    %cst_3 = arith.constant 0.0322580636 : f32
    %10 = vector.broadcast %cst_3 : f32 to vector<16x1xf32>
    %11 = arith.mulf %9, %10 : vector<16x1xf32>
    %12 = math.sqrt %11 : vector<16x1xf32>
    %cst_4 = arith.constant 9.99999997E-7 : f32
    %13 = vector.broadcast %cst_4 : f32 to vector<16x1xf32>
    %14 = arith.addf %12, %13 : vector<16x1xf32>
    %cst_5 = arith.constant 1.000000e+00 : f32
    %15 = vector.broadcast %cst_5 : f32 to vector<16x1xf32>
    %16 = arith.divf %15, %14 : vector<16x1xf32>
    %c0_6 = arith.constant 0 : index
    %c0_7 = arith.constant 0 : index
    %17 = vector.load %arg3[%c0_6, %c0_7] : memref<1x32xf32, #tpu.memory_space<vmem>>, vector<1x32xf32>
    %18 = vector.broadcast %4 : vector<16x1xf32> to vector<16x32xf32>
    %19 = arith.subf %0, %18 : vector<16x32xf32>
    %20 = vector.broadcast %17 : vector<1x32xf32> to vector<16x32xf32>
    %21 = arith.mulf %20, %19 : vector<16x32xf32>
    %22 = vector.broadcast %16 : vector<16x1xf32> to vector<16x32xf32>
    %23 = arith.mulf %21, %22 : vector<16x32xf32>
    %c0_8 = arith.constant 0 : index
    %c0_9 = arith.constant 0 : index
    %24 = vector.load %arg4[%c0_8, %c0_9] : memref<1x32xf32, #tpu.memory_space<vmem>>, vector<1x32xf32>
    %25 = vector.broadcast %24 : vector<1x32xf32> to vector<16x32xf32>
    %26 = arith.addf %23, %25 : vector<16x32xf32>
    %c0_10 = arith.constant 0 : index
    %c0_11 = arith.constant 0 : index
    %27 = vector.load %arg5[%c0_10, %c0_11] : memref<32x32xf32, #tpu.memory_space<vmem>>, vector<32x32xf32>
    %cst_12 = arith.constant dense<0.000000e+00> : vector<16x32xf32>
    %28 = tpu.matmul %26, %27, %cst_12 {dimension_numbers = #tpu.dot_dimension_numbers<[1], [0], [0], [1], [0, 0, 1, 1], [], []>} : vector<16x32xf32>, vector<32x32xf32>, vector<16x32xf32> -> vector<16x32xf32>
    %c0_13 = arith.constant 0 : index
    %c0_14 = arith.constant 0 : index
    %29 = vector.load %arg6[%c0_13, %c0_14] : memref<1x32xf32, #tpu.memory_space<vmem>>, vector<1x32xf32>
    %30 = vector.broadcast %29 : vector<1x32xf32> to vector<16x32xf32>
    %31 = arith.addf %28, %30 : vector<16x32xf32>
    %c0_15 = arith.constant 0 : index
    %c0_16 = arith.constant 0 : index
    %32 = vector.load %arg7[%c0_15, %c0_16] : memref<16x32xf32, #tpu.memory_space<vmem>>, vector<16x32xf32>
    tpu.vector_store %arg7[%c0_15, %c0_16], %31 {strides = array<i32>} : memref<16x32xf32, #tpu.memory_space<vmem>>, vector<16x32xf32>,
    return
  }
  func.func @transform_0(%arg0: i32, %arg1: i32) -> (i32, i32) {
    %c0_i32 = arith.constant 0 : i32
    %c0_i32_0 = arith.constant 0 : i32
    return %arg0, %c0_i32 : i32, i32
  }
  func.func @transform_1(%arg0: i32, %arg1: i32) -> (i32, i32) {
    %c0_i32 = arith.constant 0 : i32
    %c0_i32_0 = arith.constant 0 : i32
    %c0_i32_1 = arith.constant 0 : i32
    return %c0_i32, %c0_i32_0 : i32, i32
  }
  func.func @transform_2(%arg0: i32, %arg1: i32) -> (i32, i32) {
    %c0_i32 = arith.constant 0 : i32
    %c0_i32_0 = arith.constant 0 : i32
    %c0_i32_1 = arith.constant 0 : i32
    return %c0_i32, %c0_i32_0 : i32, i32
  }
  func.func @transform_3(%arg0: i32, %arg1: i32) -> (i32, i32) {
    %c0_i32 = arith.constant 0 : i32
    %c0_i32_0 = arith.constant 0 : i32
    return %c0_i32, %arg1 : i32, i32
  }
  func.func @transform_4(%arg0: i32, %arg1: i32) -> (i32, i32) {
    %c0_i32 = arith.constant 0 : i32
    %c0_i32_0 = arith.constant 0 : i32
    return %c0_i32, %arg1 : i32, i32
  }
  func.func @transform_5(%arg0: i32, %arg1: i32) -> (i32, i32) {
    %c0_i32 = arith.constant 0 : i32
    return %arg0, %arg1 : i32, i32
  }
}

module attributes {stable_mosaic.version = 11 : i64} {
  func.func @_fused_matmul_kernel(%arg0: i32, %arg1: i32, %arg2: memref<16x32xf32, #tpu.memory_space<vmem>>, %arg3: memref<32x64xf32, #tpu.memory_space<vmem>>, %arg4: memref<1x64xf32, #tpu.memory_space<vmem>>, %arg5: memref<16x64xf32, #tpu.memory_space<vmem>>) attributes {dimension_semantics = [#tpu.dimension_semantics<parallel>, #tpu.dimension_semantics<parallel>], iteration_bounds = array<i64: 1, 1>, scalar_prefetch = 0 : i64, scratch_operands = 0 : i64, tpu.core_type = #tpu.core_type<tc>, window_params = [{transform_indices = @transform_0, window_bounds = array<i64: 16, 32>}, {transform_indices = @transform_1, window_bounds = array<i64: 32, 64>}, {transform_indices = @transform_2, window_bounds = array<i64: 1, 64>}, {transform_indices = @transform_3, window_bounds = array<i64: 16, 64>}]} {
    %c0 = arith.constant 0 : index
    %c0_0 = arith.constant 0 : index
    %0 = vector.load %arg2[%c0, %c0_0] : memref<16x32xf32, #tpu.memory_space<vmem>>, vector<16x32xf32>
    %c0_1 = arith.constant 0 : index
    %c0_2 = arith.constant 0 : index
    %1 = vector.load %arg3[%c0_1, %c0_2] : memref<32x64xf32, #tpu.memory_space<vmem>>, vector<32x64xf32>
    %cst = arith.constant dense<0.000000e+00> : vector<16x64xf32>
    %2 = tpu.matmul %0, %1, %cst {dimension_numbers = #tpu.dot_dimension_numbers<[1], [0], [0], [1], [0, 0, 1, 1], [], []>} : vector<16x32xf32>, vector<32x64xf32>, vector<16x64xf32> -> vector<16x64xf32>
    %c0_3 = arith.constant 0 : index
    %c0_4 = arith.constant 0 : index
    %3 = vector.load %arg4[%c0_3, %c0_4] : memref<1x64xf32, #tpu.memory_space<vmem>>, vector<1x64xf32>
    %4 = vector.broadcast %3 : vector<1x64xf32> to vector<16x64xf32>
    %5 = arith.addf %2, %4 : vector<16x64xf32>
    %c0_5 = arith.constant 0 : index
    %c0_6 = arith.constant 0 : index
    %6 = vector.load %arg5[%c0_5, %c0_6] : memref<16x64xf32, #tpu.memory_space<vmem>>, vector<16x64xf32>
    tpu.vector_store %arg5[%c0_5, %c0_6], %5 {strides = array<i32>} : memref<16x64xf32, #tpu.memory_space<vmem>>, vector<16x64xf32>,
    return
  }
  func.func @transform_0(%arg0: i32, %arg1: i32) -> (i32, i32) {
    %c0_i32 = arith.constant 0 : i32
    %c0_i32_0 = arith.constant 0 : i32
    return %arg0, %c0_i32 : i32, i32
  }
  func.func @transform_1(%arg0: i32, %arg1: i32) -> (i32, i32) {
    %c0_i32 = arith.constant 0 : i32
    %c0_i32_0 = arith.constant 0 : i32
    return %c0_i32, %arg1 : i32, i32
  }
  func.func @transform_2(%arg0: i32, %arg1: i32) -> (i32, i32) {
    %c0_i32 = arith.constant 0 : i32
    %c0_i32_0 = arith.constant 0 : i32
    return %c0_i32, %arg1 : i32, i32
  }
  func.func @transform_3(%arg0: i32, %arg1: i32) -> (i32, i32) {
    %c0_i32 = arith.constant 0 : i32
    return %arg0, %arg1 : i32, i32
  }
}

module attributes {stable_mosaic.version = 11 : i64} {
  func.func @_fused_matmul_kernel(%arg0: i32, %arg1: i32, %arg2: memref<16x32xf32, #tpu.memory_space<vmem>>, %arg3: memref<1x32xf32, #tpu.memory_space<vmem>>, %arg4: memref<1x32xf32, #tpu.memory_space<vmem>>, %arg5: memref<32x64xf32, #tpu.memory_space<vmem>>, %arg6: memref<1x64xf32, #tpu.memory_space<vmem>>, %arg7: memref<16x64xf32, #tpu.memory_space<vmem>>) attributes {dimension_semantics = [#tpu.dimension_semantics<parallel>, #tpu.dimension_semantics<parallel>], iteration_bounds = array<i64: 1, 1>, scalar_prefetch = 0 : i64, scratch_operands = 0 : i64, tpu.core_type = #tpu.core_type<tc>, window_params = [{transform_indices = @transform_0, window_bounds = array<i64: 16, 32>}, {pipeline_mode = #tpu.pipeline_mode<synchronous>, transform_indices = @transform_1, window_bounds = array<i64: 1, 32>}, {pipeline_mode = #tpu.pipeline_mode<synchronous>, transform_indices = @transform_2, window_bounds = array<i64: 1, 32>}, {transform_indices = @transform_3, window_bounds = array<i64: 32, 64>}, {transform_indices = @transform_4, window_bounds = array<i64: 1, 64>}, {transform_indices = @transform_5, window_bounds = array<i64: 16, 64>}]} {
    %c0 = arith.constant 0 : index
    %c0_0 = arith.constant 0 : index
    %0 = vector.load %arg2[%c0, %c0_0] : memref<16x32xf32, #tpu.memory_space<vmem>>, vector<16x32xf32>
    %cst = arith.constant dense<0.000000e+00> : vector<16xf32>
    %1 = vector.multi_reduction <add>, %0, %cst [1] : vector<16x32xf32> to vector<16xf32>
    %2 = vector.shape_cast %1 : vector<16xf32> to vector<16x1xf32>
    %cst_1 = arith.constant 3.200000e+01 : f32
    %3 = vector.broadcast %cst_1 : f32 to vector<16x1xf32>
    %4 = arith.divf %2, %3 : vector<16x1xf32>
    %5 = vector.broadcast %4 : vector<16x1xf32> to vector<16x32xf32>
    %6 = arith.subf %0, %5 : vector<16x32xf32>
    %7 = arith.mulf %6, %6 : vector<16x32xf32>
    %cst_2 = arith.constant dense<0.000000e+00> : vector<16xf32>
    %8 = vector.multi_reduction <add>, %7, %cst_2 [1] : vector<16x32xf32> to vector<16xf32>
    %9 = vector.shape_cast %8 : vector<16xf32> to vector<16x1xf32>
    %cst_3 = arith.constant 0.0322580636 : f32
    %10 = vector.broadcast %cst_3 : f32 to vector<16x1xf32>
    %11 = arith.mulf %9, %10 : vector<16x1xf32>
    %12 = math.sqrt %11 : vector<16x1xf32>
    %cst_4 = arith.constant 9.99999997E-7 : f32
    %13 = vector.broadcast %cst_4 : f32 to vector<16x1xf32>
    %14 = arith.addf %12, %13 : vector<16x1xf32>
    %cst_5 = arith.constant 1.000000e+00 : f32
    %15 = vector.broadcast %cst_5 : f32 to vector<16x1xf32>
    %16 = arith.divf %15, %14 : vector<16x1xf32>
    %c0_6 = arith.constant 0 : index
    %c0_7 = arith.constant 0 : index
    %17 = vector.load %arg3[%c0_6, %c0_7] : memref<1x32xf32, #tpu.memory_space<vmem>>, vector<1x32xf32>
    %18 = vector.broadcast %4 : vector<16x1xf32> to vector<16x32xf32>
    %19 = arith.subf %0, %18 : vector<16x32xf32>
    %20 = vector.broadcast %17 : vector<1x32xf32> to vector<16x32xf32>
    %21 = arith.mulf %20, %19 : vector<16x32xf32>
    %22 = vector.broadcast %16 : vector<16x1xf32> to vector<16x32xf32>
    %23 = arith.mulf %21, %22 : vector<16x32xf32>
    %c0_8 = arith.constant 0 : index
    %c0_9 = arith.constant 0 : index
    %24 = vector.load %arg4[%c0_8, %c0_9] : memref<1x32xf32, #tpu.memory_space<vmem>>, vector<1x32xf32>
    %25 = vector.broadcast %24 : vector<1x32xf32> to vector<16x32xf32>
    %26 = arith.addf %23, %25 : vector<16x32xf32>
    %c0_10 = arith.constant 0 : index
    %c0_11 = arith.constant 0 : index
    %27 = vector.load %arg5[%c0_10, %c0_11] : memref<32x64xf32, #tpu.memory_space<vmem>>, vector<32x64xf32>
    %cst_12 = arith.constant dense<0.000000e+00> : vector<16x64xf32>
    %28 = tpu.matmul %26, %27, %cst_12 {dimension_numbers = #tpu.dot_dimension_numbers<[1], [0], [0], [1], [0, 0, 1, 1], [], []>} : vector<16x32xf32>, vector<32x64xf32>, vector<16x64xf32> -> vector<16x64xf32>
    %c0_13 = arith.constant 0 : index
    %c0_14 = arith.constant 0 : index
    %29 = vector.load %arg6[%c0_13, %c0_14] : memref<1x64xf32, #tpu.memory_space<vmem>>, vector<1x64xf32>
    %30 = vector.broadcast %29 : vector<1x64xf32> to vector<16x64xf32>
    %31 = arith.addf %28, %30 : vector<16x64xf32>
    %cst_15 = arith.constant 0.000000e+00 : f32
    %32 = vector.broadcast %cst_15 : f32 to vector<16x64xf32>
    %33 = arith.maximumf %31, %32 : vector<16x64xf32>
    %c0_16 = arith.constant 0 : index
    %c0_17 = arith.constant 0 : index
    %34 = vector.load %arg7[%c0_16, %c0_17] : memref<16x64xf32, #tpu.memory_space<vmem>>, vector<16x64xf32>
    tpu.vector_store %arg7[%c0_16, %c0_17], %33 {strides = array<i32>} : memref<16x64xf32, #tpu.memory_space<vmem>>, vector<16x64xf32>,
    return
  }
  func.func @transform_0(%arg0: i32, %arg1: i32) -> (i32, i32) {
    %c0_i32 = arith.constant 0 : i32
    %c0_i32_0 = arith.constant 0 : i32
    return %arg0, %c0_i32 : i32, i32
  }
  func.func @transform_1(%arg0: i32, %arg1: i32) -> (i32, i32) {
    %c0_i32 = arith.constant 0 : i32
    %c0_i32_0 = arith.constant 0 : i32
    %c0_i32_1 = arith.constant 0 : i32
    return %c0_i32, %c0_i32_0 : i32, i32
  }
  func.func @transform_2(%arg0: i32, %arg1: i32) -> (i32, i32) {
    %c0_i32 = arith.constant 0 : i32
    %c0_i32_0 = arith.constant 0 : i32
    %c0_i32_1 = arith.constant 0 : i32
    return %c0_i32, %c0_i32_0 : i32, i32
  }
  func.func @transform_3(%arg0: i32, %arg1: i32) -> (i32, i32) {
    %c0_i32 = arith.constant 0 : i32
    %c0_i32_0 = arith.constant 0 : i32
    return %c0_i32, %arg1 : i32, i32
  }
  func.func @transform_4(%arg0: i32, %arg1: i32) -> (i32, i32) {
    %c0_i32 = arith.constant 0 : i32
    %c0_i32_0 = arith.constant 0 : i32
    return %c0_i32, %arg1 : i32, i32
  }
  func.func @transform_5(%arg0: i32, %arg1: i32) -> (i32, i32) {
    %c0_i32 = arith.constant 0 : i32
    return %arg0, %arg1 : i32, i32
  }
}

module attributes {stable_mosaic.version = 11 : i64} {
  func.func @_attention_kernel(%arg0: i32, %arg1: i32, %arg2: i32, %arg3: i32, %arg4: memref<1x8x32xf32, #tpu.memory_space<vmem>>, %arg5: memref<1x8x32xf32, #tpu.memory_space<vmem>>, %arg6: memref<1x8x32xf32, #tpu.memory_space<vmem>>, %arg7: memref<1x1x8xi8, #tpu.memory_space<vmem>>, %arg8: memref<1x8x32xf32, #tpu.memory_space<vmem>>, %arg9: memref<4x8x1xf32, #tpu.memory_space<vmem>>, %arg10: memref<4x8x1xf32, #tpu.memory_space<vmem>>, %arg11: memref<4x8x8xf32, #tpu.memory_space<vmem>>) attributes {dimension_semantics = [#tpu.dimension_semantics<parallel>, #tpu.dimension_semantics<parallel>, #tpu.dimension_semantics<parallel>, #tpu.dimension_semantics<arbitrary>], iteration_bounds = array<i64: 2, 1, 1, 1>, scalar_prefetch = 0 : i64, scratch_operands = 3 : i64, tpu.core_type = #tpu.core_type<tc>, window_params = [{transform_indices = @transform_0, window_bounds = array<i64: 1, 8, 32>}, {transform_indices = @transform_1, window_bounds = array<i64: 1, 8, 32>}, {transform_indices = @transform_2, window_bounds = array<i64: 1, 8, 32>}, {transform_indices = @transform_3, window_bounds = array<i64: 1, 1, 8>}, {transform_indices = @transform_4, window_bounds = array<i64: 1, 8, 32>}]} {
    %c0_i32 = arith.constant 0 : i32
    %0 = arith.cmpi eq, %arg3, %c0_i32 : i32
    %1 = arith.extui %0 : i1 to i32
    %c0_i32_0 = arith.constant 0 : i32
    %2 = arith.cmpi ne, %1, %c0_i32_0 : i32
    scf.if %2 {
      %cst_103 = arith.constant 0xFF800000 : f32
      %173 = vector.broadcast %cst_103 : f32 to vector<4x8x1xf32>
      %c0_104 = arith.constant 0 : index
      %c0_105 = arith.constant 0 : index
      %c0_106 = arith.constant 0 : index
      %174 = vector.load %arg9[%c0_104, %c0_105, %c0_106] : memref<4x8x1xf32, #tpu.memory_space<vmem>>, vector<4x8x1xf32>
      tpu.vector_store %arg9[%c0_104, %c0_105, %c0_106], %173 {strides = array<i32>} : memref<4x8x1xf32, #tpu.memory_space<vmem>>, vector<4x8x1xf32>,
      %cst_107 = arith.constant 0.000000e+00 : f32
      %175 = vector.broadcast %cst_107 : f32 to vector<4x8x1xf32>
      %c0_108 = arith.constant 0 : index
      %c0_109 = arith.constant 0 : index
      %c0_110 = arith.constant 0 : index
      %176 = vector.load %arg10[%c0_108, %c0_109, %c0_110] : memref<4x8x1xf32, #tpu.memory_space<vmem>>, vector<4x8x1xf32>
      tpu.vector_store %arg10[%c0_108, %c0_109, %c0_110], %175 {strides = array<i32>} : memref<4x8x1xf32, #tpu.memory_space<vmem>>, vector<4x8x1xf32>,
      %cst_111 = arith.constant 0.000000e+00 : f32
      %177 = vector.broadcast %cst_111 : f32 to vector<4x8x8xf32>
      %c0_112 = arith.constant 0 : index
      %c0_113 = arith.constant 0 : index
      %c0_114 = arith.constant 0 : index
      %178 = vector.load %arg11[%c0_112, %c0_113, %c0_114] : memref<4x8x8xf32, #tpu.memory_space<vmem>>, vector<4x8x8xf32>
      tpu.vector_store %arg11[%c0_112, %c0_113, %c0_114], %177 {strides = array<i32>} : memref<4x8x8xf32, #tpu.memory_space<vmem>>, vector<4x8x8xf32>,
    } else {
    }
    %c0 = arith.constant 0 : index
    %c0_1 = arith.constant 0 : index
    %c0_2 = arith.constant 0 : index
    %3 = vector.load %arg4[%c0, %c0_1, %c0_2] : memref<1x8x32xf32, #tpu.memory_space<vmem>>, vector<1x8x32xf32>
    %4 = vector.shape_cast %3 : vector<1x8x32xf32> to vector<8x32xf32>
    %c0_3 = arith.constant 0 : index
    %c0_4 = arith.constant 0 : index
    %c0_5 = arith.constant 0 : index
    %5 = vector.load %arg5[%c0_3, %c0_4, %c0_5] : memref<1x8x32xf32, #tpu.memory_space<vmem>>, vector<1x8x32xf32>
    %6 = vector.shape_cast %5 : vector<1x8x32xf32> to vector<8x32xf32>
    %c0_6 = arith.constant 0 : index
    %c0_7 = arith.constant 0 : index
    %c0_8 = arith.constant 0 : index
    %7 = vector.load %arg6[%c0_6, %c0_7, %c0_8] : memref<1x8x32xf32, #tpu.memory_space<vmem>>, vector<1x8x32xf32>
    %8 = vector.shape_cast %7 : vector<1x8x32xf32> to vector<8x32xf32>
    %c0_9 = arith.constant 0 : index
    %c0_10 = arith.constant 0 : index
    %c0_11 = arith.constant 0 : index
    %9 = vector.load %arg7[%c0_9, %c0_10, %c0_11] : memref<1x1x8xi8, #tpu.memory_space<vmem>>, vector<1x1x8xi8>
    %10 = vector.shape_cast %9 : vector<1x1x8xi8> to vector<1x8xi8>
    %11 = arith.extsi %10 : vector<1x8xi8> to vector<1x8xi32>
    %c0_i32_12 = arith.constant 0 : i32
    %12 = vector.broadcast %c0_i32_12 : i32 to vector<1x8xi32>
    %13 = arith.cmpi eq, %11, %12 : vector<1x8xi32>
    %14 = vector.extract_strided_slice %4 {offsets = [0, 0], sizes = [8, 8], strides = [1, 1]} : vector<8x32xf32> to vector<8x8xf32>
    %15 = vector.extract_strided_slice %6 {offsets = [0, 0], sizes = [8, 8], strides = [1, 1]} : vector<8x32xf32> to vector<8x8xf32>
    %16 = vector.extract_strided_slice %8 {offsets = [0, 0], sizes = [8, 8], strides = [1, 1]} : vector<8x32xf32> to vector<8x8xf32>
    %cst = arith.constant dense<0.000000e+00> : vector<8x8xf32>
    %17 = tpu.matmul %14, %15, %cst {dimension_numbers = #tpu.dot_dimension_numbers<[1], [1], [0], [0], [0, 0, 1, 0], [], []>} : vector<8x8xf32>, vector<8x8xf32>, vector<8x8xf32> -> vector<8x8xf32>
    %cst_13 = arith.constant -1.000000e+09 : f32
    %18 = vector.shape_cast %13 : vector<1x8xi1> to vector<1x8xi1>
    %19 = vector.broadcast %18 : vector<1x8xi1> to vector<8x8xi1>
    %20 = vector.broadcast %cst_13 : f32 to vector<8x8xf32>
    %21 = arith.select %19, %20, %17 : vector<8x8xi1>, vector<8x8xf32>
    %c0_14 = arith.constant 0 : index
    %c0_15 = arith.constant 0 : index
    %c0_16 = arith.constant 0 : index
    %22 = vector.load %arg9[%c0_14, %c0_15, %c0_16] : memref<4x8x1xf32, #tpu.memory_space<vmem>>, vector<1x8x1xf32>
    %23 = vector.shape_cast %22 : vector<1x8x1xf32> to vector<8x1xf32>
    %cst_17 = arith.constant dense<0xFF800000> : vector<8xf32>
    %24 = vector.multi_reduction <maximumf>, %21, %cst_17 [1] : vector<8x8xf32> to vector<8xf32>
    %25 = vector.shape_cast %24 : vector<8xf32> to vector<8x1xf32>
    %26 = arith.maximumf %23, %25 : vector<8x1xf32>
    %27 = arith.subf %23, %26 : vector<8x1xf32>
    %28 = math.exp %27 : vector<8x1xf32>
    %29 = vector.broadcast %26 : vector<8x1xf32> to vector<8x8xf32>
    %30 = arith.subf %21, %29 : vector<8x8xf32>
    %31 = math.exp %30 : vector<8x8xf32>
    %c0_18 = arith.constant 0 : index
    %c0_19 = arith.constant 0 : index
    %c0_20 = arith.constant 0 : index
    %32 = vector.load %arg10[%c0_18, %c0_19, %c0_20] : memref<4x8x1xf32, #tpu.memory_space<vmem>>, vector<1x8x1xf32>
    %33 = vector.shape_cast %32 : vector<1x8x1xf32> to vector<8x1xf32>
    %34 = arith.mulf %28, %33 : vector<8x1xf32>
    %cst_21 = arith.constant dense<0.000000e+00> : vector<8xf32>
    %35 = vector.multi_reduction <add>, %31, %cst_21 [1] : vector<8x8xf32> to vector<8xf32>
    %36 = vector.shape_cast %35 : vector<8xf32> to vector<8x1xf32>
    %37 = arith.addf %34, %36 : vector<8x1xf32>
    %c0_22 = arith.constant 0 : index
    %c0_23 = arith.constant 0 : index
    %c0_24 = arith.constant 0 : index
    %38 = vector.load %arg10[%c0_22, %c0_23, %c0_24] : memref<4x8x1xf32, #tpu.memory_space<vmem>>, vector<1x8x1xf32>
    %39 = vector.shape_cast %38 : vector<1x8x1xf32> to vector<8x1xf32>
    %40 = vector.shape_cast %37 : vector<8x1xf32> to vector<1x8x1xf32>
    tpu.vector_store %arg10[%c0_22, %c0_23, %c0_24], %40 {strides = array<i32>} : memref<4x8x1xf32, #tpu.memory_space<vmem>>, vector<1x8x1xf32>,
    %c0_25 = arith.constant 0 : index
    %c0_26 = arith.constant 0 : index
    %c0_27 = arith.constant 0 : index
    %41 = vector.load %arg11[%c0_25, %c0_26, %c0_27] : memref<4x8x8xf32, #tpu.memory_space<vmem>>, vector<1x8x8xf32>
    %42 = vector.shape_cast %41 : vector<1x8x8xf32> to vector<8x8xf32>
    %43 = vector.broadcast %28 : vector<8x1xf32> to vector<8x8xf32>
    %44 = arith.mulf %43, %42 : vector<8x8xf32>
    %cst_28 = arith.constant dense<0.000000e+00> : vector<8x8xf32>
    %45 = tpu.matmul %31, %16, %cst_28 {dimension_numbers = #tpu.dot_dimension_numbers<[1], [0], [0], [1], [0, 0, 1, 1], [], []>} : vector<8x8xf32>, vector<8x8xf32>, vector<8x8xf32> -> vector<8x8xf32>
    %46 = arith.addf %44, %45 : vector<8x8xf32>
    %c0_29 = arith.constant 0 : index
    %c0_30 = arith.constant 0 : index
    %c0_31 = arith.constant 0 : index
    %47 = vector.load %arg11[%c0_29, %c0_30, %c0_31] : memref<4x8x8xf32, #tpu.memory_space<vmem>>, vector<1x8x8xf32>
    %48 = vector.shape_cast %47 : vector<1x8x8xf32> to vector<8x8xf32>
    %49 = vector.shape_cast %46 : vector<8x8xf32> to vector<1x8x8xf32>
    tpu.vector_store %arg11[%c0_29, %c0_30, %c0_31], %49 {strides = array<i32>} : memref<4x8x8xf32, #tpu.memory_space<vmem>>, vector<1x8x8xf32>,
    %c0_32 = arith.constant 0 : index
    %c0_33 = arith.constant 0 : index
    %c0_34 = arith.constant 0 : index
    %50 = vector.load %arg9[%c0_32, %c0_33, %c0_34] : memref<4x8x1xf32, #tpu.memory_space<vmem>>, vector<1x8x1xf32>
    %51 = vector.shape_cast %50 : vector<1x8x1xf32> to vector<8x1xf32>
    %52 = vector.shape_cast %26 : vector<8x1xf32> to vector<1x8x1xf32>
    tpu.vector_store %arg9[%c0_32, %c0_33, %c0_34], %52 {strides = array<i32>} : memref<4x8x1xf32, #tpu.memory_space<vmem>>, vector<1x8x1xf32>,
    %53 = vector.extract_strided_slice %4 {offsets = [0, 8], sizes = [8, 8], strides = [1, 1]} : vector<8x32xf32> to vector<8x8xf32>
    %54 = vector.extract_strided_slice %6 {offsets = [0, 8], sizes = [8, 8], strides = [1, 1]} : vector<8x32xf32> to vector<8x8xf32>
    %55 = vector.extract_strided_slice %8 {offsets = [0, 8], sizes = [8, 8], strides = [1, 1]} : vector<8x32xf32> to vector<8x8xf32>
    %cst_35 = arith.constant dense<0.000000e+00> : vector<8x8xf32>
    %56 = tpu.matmul %53, %54, %cst_35 {dimension_numbers = #tpu.dot_dimension_numbers<[1], [1], [0], [0], [0, 0, 1, 0], [], []>} : vector<8x8xf32>, vector<8x8xf32>, vector<8x8xf32> -> vector<8x8xf32>
    %cst_36 = arith.constant -1.000000e+09 : f32
    %57 = vector.shape_cast %13 : vector<1x8xi1> to vector<1x8xi1>
    %58 = vector.broadcast %57 : vector<1x8xi1> to vector<8x8xi1>
    %59 = vector.broadcast %cst_36 : f32 to vector<8x8xf32>
    %60 = arith.select %58, %59, %56 : vector<8x8xi1>, vector<8x8xf32>
    %c1 = arith.constant 1 : index
    %c0_37 = arith.constant 0 : index
    %c0_38 = arith.constant 0 : index
    %61 = vector.load %arg9[%c1, %c0_37, %c0_38] : memref<4x8x1xf32, #tpu.memory_space<vmem>>, vector<1x8x1xf32>
    %62 = vector.shape_cast %61 : vector<1x8x1xf32> to vector<8x1xf32>
    %cst_39 = arith.constant dense<0xFF800000> : vector<8xf32>
    %63 = vector.multi_reduction <maximumf>, %60, %cst_39 [1] : vector<8x8xf32> to vector<8xf32>
    %64 = vector.shape_cast %63 : vector<8xf32> to vector<8x1xf32>
    %65 = arith.maximumf %62, %64 : vector<8x1xf32>
    %66 = arith.subf %62, %65 : vector<8x1xf32>
    %67 = math.exp %66 : vector<8x1xf32>
    %68 = vector.broadcast %65 : vector<8x1xf32> to vector<8x8xf32>
    %69 = arith.subf %60, %68 : vector<8x8xf32>
    %70 = math.exp %69 : vector<8x8xf32>
    %c1_40 = arith.constant 1 : index
    %c0_41 = arith.constant 0 : index
    %c0_42 = arith.constant 0 : index
    %71 = vector.load %arg10[%c1_40, %c0_41, %c0_42] : memref<4x8x1xf32, #tpu.memory_space<vmem>>, vector<1x8x1xf32>
    %72 = vector.shape_cast %71 : vector<1x8x1xf32> to vector<8x1xf32>
    %73 = arith.mulf %67, %72 : vector<8x1xf32>
    %cst_43 = arith.constant dense<0.000000e+00> : vector<8xf32>
    %74 = vector.multi_reduction <add>, %70, %cst_43 [1] : vector<8x8xf32> to vector<8xf32>
    %75 = vector.shape_cast %74 : vector<8xf32> to vector<8x1xf32>
    %76 = arith.addf %73, %75 : vector<8x1xf32>
    %c1_44 = arith.constant 1 : index
    %c0_45 = arith.constant 0 : index
    %c0_46 = arith.constant 0 : index
    %77 = vector.load %arg10[%c1_44, %c0_45, %c0_46] : memref<4x8x1xf32, #tpu.memory_space<vmem>>, vector<1x8x1xf32>
    %78 = vector.shape_cast %77 : vector<1x8x1xf32> to vector<8x1xf32>
    %79 = vector.shape_cast %76 : vector<8x1xf32> to vector<1x8x1xf32>
    tpu.vector_store %arg10[%c1_44, %c0_45, %c0_46], %79 {strides = array<i32>} : memref<4x8x1xf32, #tpu.memory_space<vmem>>, vector<1x8x1xf32>,
    %c1_47 = arith.constant 1 : index
    %c0_48 = arith.constant 0 : index
    %c0_49 = arith.constant 0 : index
    %80 = vector.load %arg11[%c1_47, %c0_48, %c0_49] : memref<4x8x8xf32, #tpu.memory_space<vmem>>, vector<1x8x8xf32>
    %81 = vector.shape_cast %80 : vector<1x8x8xf32> to vector<8x8xf32>
    %82 = vector.broadcast %67 : vector<8x1xf32> to vector<8x8xf32>
    %83 = arith.mulf %82, %81 : vector<8x8xf32>
    %cst_50 = arith.constant dense<0.000000e+00> : vector<8x8xf32>
    %84 = tpu.matmul %70, %55, %cst_50 {dimension_numbers = #tpu.dot_dimension_numbers<[1], [0], [0], [1], [0, 0, 1, 1], [], []>} : vector<8x8xf32>, vector<8x8xf32>, vector<8x8xf32> -> vector<8x8xf32>
    %85 = arith.addf %83, %84 : vector<8x8xf32>
    %c1_51 = arith.constant 1 : index
    %c0_52 = arith.constant 0 : index
    %c0_53 = arith.constant 0 : index
    %86 = vector.load %arg11[%c1_51, %c0_52, %c0_53] : memref<4x8x8xf32, #tpu.memory_space<vmem>>, vector<1x8x8xf32>
    %87 = vector.shape_cast %86 : vector<1x8x8xf32> to vector<8x8xf32>
    %88 = vector.shape_cast %85 : vector<8x8xf32> to vector<1x8x8xf32>
    tpu.vector_store %arg11[%c1_51, %c0_52, %c0_53], %88 {strides = array<i32>} : memref<4x8x8xf32, #tpu.memory_space<vmem>>, vector<1x8x8xf32>,
    %c1_54 = arith.constant 1 : index
    %c0_55 = arith.constant 0 : index
    %c0_56 = arith.constant 0 : index
    %89 = vector.load %arg9[%c1_54, %c0_55, %c0_56] : memref<4x8x1xf32, #tpu.memory_space<vmem>>, vector<1x8x1xf32>
    %90 = vector.shape_cast %89 : vector<1x8x1xf32> to vector<8x1xf32>
    %91 = vector.shape_cast %65 : vector<8x1xf32> to vector<1x8x1xf32>
    tpu.vector_store %arg9[%c1_54, %c0_55, %c0_56], %91 {strides = array<i32>} : memref<4x8x1xf32, #tpu.memory_space<vmem>>, vector<1x8x1xf32>,
    %92 = vector.extract_strided_slice %4 {offsets = [0, 16], sizes = [8, 8], strides = [1, 1]} : vector<8x32xf32> to vector<8x8xf32>
    %93 = vector.extract_strided_slice %6 {offsets = [0, 16], sizes = [8, 8], strides = [1, 1]} : vector<8x32xf32> to vector<8x8xf32>
    %94 = vector.extract_strided_slice %8 {offsets = [0, 16], sizes = [8, 8], strides = [1, 1]} : vector<8x32xf32> to vector<8x8xf32>
    %cst_57 = arith.constant dense<0.000000e+00> : vector<8x8xf32>
    %95 = tpu.matmul %92, %93, %cst_57 {dimension_numbers = #tpu.dot_dimension_numbers<[1], [1], [0], [0], [0, 0, 1, 0], [], []>} : vector<8x8xf32>, vector<8x8xf32>, vector<8x8xf32> -> vector<8x8xf32>
    %cst_58 = arith.constant -1.000000e+09 : f32
    %96 = vector.shape_cast %13 : vector<1x8xi1> to vector<1x8xi1>
    %97 = vector.broadcast %96 : vector<1x8xi1> to vector<8x8xi1>
    %98 = vector.broadcast %cst_58 : f32 to vector<8x8xf32>
    %99 = arith.select %97, %98, %95 : vector<8x8xi1>, vector<8x8xf32>
    %c2 = arith.constant 2 : index
    %c0_59 = arith.constant 0 : index
    %c0_60 = arith.constant 0 : index
    %100 = vector.load %arg9[%c2, %c0_59, %c0_60] : memref<4x8x1xf32, #tpu.memory_space<vmem>>, vector<1x8x1xf32>
    %101 = vector.shape_cast %100 : vector<1x8x1xf32> to vector<8x1xf32>
    %cst_61 = arith.constant dense<0xFF800000> : vector<8xf32>
    %102 = vector.multi_reduction <maximumf>, %99, %cst_61 [1] : vector<8x8xf32> to vector<8xf32>
    %103 = vector.shape_cast %102 : vector<8xf32> to vector<8x1xf32>
    %104 = arith.maximumf %101, %103 : vector<8x1xf32>
    %105 = arith.subf %101, %104 : vector<8x1xf32>
    %106 = math.exp %105 : vector<8x1xf32>
    %107 = vector.broadcast %104 : vector<8x1xf32> to vector<8x8xf32>
    %108 = arith.subf %99, %107 : vector<8x8xf32>
    %109 = math.exp %108 : vector<8x8xf32>
    %c2_62 = arith.constant 2 : index
    %c0_63 = arith.constant 0 : index
    %c0_64 = arith.constant 0 : index
    %110 = vector.load %arg10[%c2_62, %c0_63, %c0_64] : memref<4x8x1xf32, #tpu.memory_space<vmem>>, vector<1x8x1xf32>
    %111 = vector.shape_cast %110 : vector<1x8x1xf32> to vector<8x1xf32>
    %112 = arith.mulf %106, %111 : vector<8x1xf32>
    %cst_65 = arith.constant dense<0.000000e+00> : vector<8xf32>
    %113 = vector.multi_reduction <add>, %109, %cst_65 [1] : vector<8x8xf32> to vector<8xf32>
    %114 = vector.shape_cast %113 : vector<8xf32> to vector<8x1xf32>
    %115 = arith.addf %112, %114 : vector<8x1xf32>
    %c2_66 = arith.constant 2 : index
    %c0_67 = arith.constant 0 : index
    %c0_68 = arith.constant 0 : index
    %116 = vector.load %arg10[%c2_66, %c0_67, %c0_68] : memref<4x8x1xf32, #tpu.memory_space<vmem>>, vector<1x8x1xf32>
    %117 = vector.shape_cast %116 : vector<1x8x1xf32> to vector<8x1xf32>
    %118 = vector.shape_cast %115 : vector<8x1xf32> to vector<1x8x1xf32>
    tpu.vector_store %arg10[%c2_66, %c0_67, %c0_68], %118 {strides = array<i32>} : memref<4x8x1xf32, #tpu.memory_space<vmem>>, vector<1x8x1xf32>,
    %c2_69 = arith.constant 2 : index
    %c0_70 = arith.constant 0 : index
    %c0_71 = arith.constant 0 : index
    %119 = vector.load %arg11[%c2_69, %c0_70, %c0_71] : memref<4x8x8xf32, #tpu.memory_space<vmem>>, vector<1x8x8xf32>
    %120 = vector.shape_cast %119 : vector<1x8x8xf32> to vector<8x8xf32>
    %121 = vector.broadcast %106 : vector<8x1xf32> to vector<8x8xf32>
    %122 = arith.mulf %121, %120 : vector<8x8xf32>
    %cst_72 = arith.constant dense<0.000000e+00> : vector<8x8xf32>
    %123 = tpu.matmul %109, %94, %cst_72 {dimension_numbers = #tpu.dot_dimension_numbers<[1], [0], [0], [1], [0, 0, 1, 1], [], []>} : vector<8x8xf32>, vector<8x8xf32>, vector<8x8xf32> -> vector<8x8xf32>
    %124 = arith.addf %122, %123 : vector<8x8xf32>
    %c2_73 = arith.constant 2 : index
    %c0_74 = arith.constant 0 : index
    %c0_75 = arith.constant 0 : index
    %125 = vector.load %arg11[%c2_73, %c0_74, %c0_75] : memref<4x8x8xf32, #tpu.memory_space<vmem>>, vector<1x8x8xf32>
    %126 = vector.shape_cast %125 : vector<1x8x8xf32> to vector<8x8xf32>
    %127 = vector.shape_cast %124 : vector<8x8xf32> to vector<1x8x8xf32>
    tpu.vector_store %arg11[%c2_73, %c0_74, %c0_75], %127 {strides = array<i32>} : memref<4x8x8xf32, #tpu.memory_space<vmem>>, vector<1x8x8xf32>,
    %c2_76 = arith.constant 2 : index
    %c0_77 = arith.constant 0 : index
    %c0_78 = arith.constant 0 : index
    %128 = vector.load %arg9[%c2_76, %c0_77, %c0_78] : memref<4x8x1xf32, #tpu.memory_space<vmem>>, vector<1x8x1xf32>
    %129 = vector.shape_cast %128 : vector<1x8x1xf32> to vector<8x1xf32>
    %130 = vector.shape_cast %104 : vector<8x1xf32> to vector<1x8x1xf32>
    tpu.vector_store %arg9[%c2_76, %c0_77, %c0_78], %130 {strides = array<i32>} : memref<4x8x1xf32, #tpu.memory_space<vmem>>, vector<1x8x1xf32>,
    %131 = vector.extract_strided_slice %4 {offsets = [0, 24], sizes = [8, 8], strides = [1, 1]} : vector<8x32xf32> to vector<8x8xf32>
    %132 = vector.extract_strided_slice %6 {offsets = [0, 24], sizes = [8, 8], strides = [1, 1]} : vector<8x32xf32> to vector<8x8xf32>
    %133 = vector.extract_strided_slice %8 {offsets = [0, 24], sizes = [8, 8], strides = [1, 1]} : vector<8x32xf32> to vector<8x8xf32>
    %cst_79 = arith.constant dense<0.000000e+00> : vector<8x8xf32>
    %134 = tpu.matmul %131, %132, %cst_79 {dimension_numbers = #tpu.dot_dimension_numbers<[1], [1], [0], [0], [0, 0, 1, 0], [], []>} : vector<8x8xf32>, vector<8x8xf32>, vector<8x8xf32> -> vector<8x8xf32>
    %cst_80 = arith.constant -1.000000e+09 : f32
    %135 = vector.shape_cast %13 : vector<1x8xi1> to vector<1x8xi1>
    %136 = vector.broadcast %135 : vector<1x8xi1> to vector<8x8xi1>
    %137 = vector.broadcast %cst_80 : f32 to vector<8x8xf32>
    %138 = arith.select %136, %137, %134 : vector<8x8xi1>, vector<8x8xf32>
    %c3 = arith.constant 3 : index
    %c0_81 = arith.constant 0 : index
    %c0_82 = arith.constant 0 : index
    %139 = vector.load %arg9[%c3, %c0_81, %c0_82] : memref<4x8x1xf32, #tpu.memory_space<vmem>>, vector<1x8x1xf32>
    %140 = vector.shape_cast %139 : vector<1x8x1xf32> to vector<8x1xf32>
    %cst_83 = arith.constant dense<0xFF800000> : vector<8xf32>
    %141 = vector.multi_reduction <maximumf>, %138, %cst_83 [1] : vector<8x8xf32> to vector<8xf32>
    %142 = vector.shape_cast %141 : vector<8xf32> to vector<8x1xf32>
    %143 = arith.maximumf %140, %142 : vector<8x1xf32>
    %144 = arith.subf %140, %143 : vector<8x1xf32>
    %145 = math.exp %144 : vector<8x1xf32>
    %146 = vector.broadcast %143 : vector<8x1xf32> to vector<8x8xf32>
    %147 = arith.subf %138, %146 : vector<8x8xf32>
    %148 = math.exp %147 : vector<8x8xf32>
    %c3_84 = arith.constant 3 : index
    %c0_85 = arith.constant 0 : index
    %c0_86 = arith.constant 0 : index
    %149 = vector.load %arg10[%c3_84, %c0_85, %c0_86] : memref<4x8x1xf32, #tpu.memory_space<vmem>>, vector<1x8x1xf32>
    %150 = vector.shape_cast %149 : vector<1x8x1xf32> to vector<8x1xf32>
    %151 = arith.mulf %145, %150 : vector<8x1xf32>
    %cst_87 = arith.constant dense<0.000000e+00> : vector<8xf32>
    %152 = vector.multi_reduction <add>, %148, %cst_87 [1] : vector<8x8xf32> to vector<8xf32>
    %153 = vector.shape_cast %152 : vector<8xf32> to vector<8x1xf32>
    %154 = arith.addf %151, %153 : vector<8x1xf32>
    %c3_88 = arith.constant 3 : index
    %c0_89 = arith.constant 0 : index
    %c0_90 = arith.constant 0 : index
    %155 = vector.load %arg10[%c3_88, %c0_89, %c0_90] : memref<4x8x1xf32, #tpu.memory_space<vmem>>, vector<1x8x1xf32>
    %156 = vector.shape_cast %155 : vector<1x8x1xf32> to vector<8x1xf32>
    %157 = vector.shape_cast %154 : vector<8x1xf32> to vector<1x8x1xf32>
    tpu.vector_store %arg10[%c3_88, %c0_89, %c0_90], %157 {strides = array<i32>} : memref<4x8x1xf32, #tpu.memory_space<vmem>>, vector<1x8x1xf32>,
    %c3_91 = arith.constant 3 : index
    %c0_92 = arith.constant 0 : index
    %c0_93 = arith.constant 0 : index
    %158 = vector.load %arg11[%c3_91, %c0_92, %c0_93] : memref<4x8x8xf32, #tpu.memory_space<vmem>>, vector<1x8x8xf32>
    %159 = vector.shape_cast %158 : vector<1x8x8xf32> to vector<8x8xf32>
    %160 = vector.broadcast %145 : vector<8x1xf32> to vector<8x8xf32>
    %161 = arith.mulf %160, %159 : vector<8x8xf32>
    %cst_94 = arith.constant dense<0.000000e+00> : vector<8x8xf32>
    %162 = tpu.matmul %148, %133, %cst_94 {dimension_numbers = #tpu.dot_dimension_numbers<[1], [0], [0], [1], [0, 0, 1, 1], [], []>} : vector<8x8xf32>, vector<8x8xf32>, vector<8x8xf32> -> vector<8x8xf32>
    %163 = arith.addf %161, %162 : vector<8x8xf32>
    %c3_95 = arith.constant 3 : index
    %c0_96 = arith.constant 0 : index
    %c0_97 = arith.constant 0 : index
    %164 = vector.load %arg11[%c3_95, %c0_96, %c0_97] : memref<4x8x8xf32, #tpu.memory_space<vmem>>, vector<1x8x8xf32>
    %165 = vector.shape_cast %164 : vector<1x8x8xf32> to vector<8x8xf32>
    %166 = vector.shape_cast %163 : vector<8x8xf32> to vector<1x8x8xf32>
    tpu.vector_store %arg11[%c3_95, %c0_96, %c0_97], %166 {strides = array<i32>} : memref<4x8x8xf32, #tpu.memory_space<vmem>>, vector<1x8x8xf32>,
    %c3_98 = arith.constant 3 : index
    %c0_99 = arith.constant 0 : index
    %c0_100 = arith.constant 0 : index
    %167 = vector.load %arg9[%c3_98, %c0_99, %c0_100] : memref<4x8x1xf32, #tpu.memory_space<vmem>>, vector<1x8x1xf32>
    %168 = vector.shape_cast %167 : vector<1x8x1xf32> to vector<8x1xf32>
    %169 = vector.shape_cast %143 : vector<8x1xf32> to vector<1x8x1xf32>
    tpu.vector_store %arg9[%c3_98, %c0_99, %c0_100], %169 {strides = array<i32>} : memref<4x8x1xf32, #tpu.memory_space<vmem>>, vector<1x8x1xf32>,
    %c0_i32_101 = arith.constant 0 : i32
    %170 = arith.cmpi eq, %arg3, %c0_i32_101 : i32
    %171 = arith.extui %170 : i1 to i32
    %c0_i32_102 = arith.constant 0 : i32
    %172 = arith.cmpi ne, %171, %c0_i32_102 : i32
    scf.if %172 {
      %c0_103 = arith.constant 0 : index
      %c0_104 = arith.constant 0 : index
      %c0_105 = arith.constant 0 : index
      %173 = vector.load %arg10[%c0_103, %c0_104, %c0_105] : memref<4x8x1xf32, #tpu.memory_space<vmem>>, vector<1x8x1xf32>
      %174 = vector.shape_cast %173 : vector<1x8x1xf32> to vector<8x1xf32>
      %cst_106 = arith.constant 1.000000e+00 : f32
      %175 = vector.broadcast %cst_106 : f32 to vector<8x1xf32>
      %176 = arith.divf %175, %174 : vector<8x1xf32>
      %c0_107 = arith.constant 0 : index
      %c0_108 = arith.constant 0 : index
      %c0_109 = arith.constant 0 : index
      %177 = vector.load %arg11[%c0_107, %c0_108, %c0_109] : memref<4x8x8xf32, #tpu.memory_space<vmem>>, vector<1x8x8xf32>
      %178 = vector.shape_cast %177 : vector<1x8x8xf32> to vector<8x8xf32>
      %179 = vector.broadcast %176 : vector<8x1xf32> to vector<8x8xf32>
      %180 = arith.mulf %178, %179 : vector<8x8xf32>
      %c0_110 = arith.constant 0 : index
      %c0_111 = arith.constant 0 : index
      %c0_112 = arith.constant 0 : index
      %181 = vector.load %arg8[%c0_110, %c0_111, %c0_112] : memref<1x8x32xf32, #tpu.memory_space<vmem>>, vector<1x8x8xf32>
      %182 = vector.shape_cast %181 : vector<1x8x8xf32> to vector<8x8xf32>
      %183 = vector.shape_cast %180 : vector<8x8xf32> to vector<1x8x8xf32>
      tpu.vector_store %arg8[%c0_110, %c0_111, %c0_112], %183 {strides = array<i32>} : memref<1x8x32xf32, #tpu.memory_space<vmem>>, vector<1x8x8xf32>,
      %c1_113 = arith.constant 1 : index
      %c0_114 = arith.constant 0 : index
      %c0_115 = arith.constant 0 : index
      %184 = vector.load %arg10[%c1_113, %c0_114, %c0_115] : memref<4x8x1xf32, #tpu.memory_space<vmem>>, vector<1x8x1xf32>
      %185 = vector.shape_cast %184 : vector<1x8x1xf32> to vector<8x1xf32>
      %cst_116 = arith.constant 1.000000e+00 : f32
      %186 = vector.broadcast %cst_116 : f32 to vector<8x1xf32>
      %187 = arith.divf %186, %185 : vector<8x1xf32>
      %c1_117 = arith.constant 1 : index
      %c0_118 = arith.constant 0 : index
      %c0_119 = arith.constant 0 : index
      %188 = vector.load %arg11[%c1_117, %c0_118, %c0_119] : memref<4x8x8xf32, #tpu.memory_space<vmem>>, vector<1x8x8xf32>
      %189 = vector.shape_cast %188 : vector<1x8x8xf32> to vector<8x8xf32>
      %190 = vector.broadcast %187 : vector<8x1xf32> to vector<8x8xf32>
      %191 = arith.mulf %189, %190 : vector<8x8xf32>
      %c0_120 = arith.constant 0 : index
      %c0_121 = arith.constant 0 : index
      %c8 = arith.constant 8 : index
      %192 = vector.load %arg8[%c0_120, %c0_121, %c8] : memref<1x8x32xf32, #tpu.memory_space<vmem>>, vector<1x8x8xf32>
      %193 = vector.shape_cast %192 : vector<1x8x8xf32> to vector<8x8xf32>
      %194 = vector.shape_cast %191 : vector<8x8xf32> to vector<1x8x8xf32>
      tpu.vector_store %arg8[%c0_120, %c0_121, %c8], %194 {strides = array<i32>} : memref<1x8x32xf32, #tpu.memory_space<vmem>>, vector<1x8x8xf32>,
      %c2_122 = arith.constant 2 : index
      %c0_123 = arith.constant 0 : index
      %c0_124 = arith.constant 0 : index
      %195 = vector.load %arg10[%c2_122, %c0_123, %c0_124] : memref<4x8x1xf32, #tpu.memory_space<vmem>>, vector<1x8x1xf32>
      %196 = vector.shape_cast %195 : vector<1x8x1xf32> to vector<8x1xf32>
      %cst_125 = arith.constant 1.000000e+00 : f32
      %197 = vector.broadcast %cst_125 : f32 to vector<8x1xf32>
      %198 = arith.divf %197, %196 : vector<8x1xf32>
      %c2_126 = arith.constant 2 : index
      %c0_127 = arith.constant 0 : index
      %c0_128 = arith.constant 0 : index
      %199 = vector.load %arg11[%c2_126, %c0_127, %c0_128] : memref<4x8x8xf32, #tpu.memory_space<vmem>>, vector<1x8x8xf32>
      %200 = vector.shape_cast %199 : vector<1x8x8xf32> to vector<8x8xf32>
      %201 = vector.broadcast %198 : vector<8x1xf32> to vector<8x8xf32>
      %202 = arith.mulf %200, %201 : vector<8x8xf32>
      %c0_129 = arith.constant 0 : index
      %c0_130 = arith.constant 0 : index
      %c16 = arith.constant 16 : index
      %203 = vector.load %arg8[%c0_129, %c0_130, %c16] : memref<1x8x32xf32, #tpu.memory_space<vmem>>, vector<1x8x8xf32>
      %204 = vector.shape_cast %203 : vector<1x8x8xf32> to vector<8x8xf32>
      %205 = vector.shape_cast %202 : vector<8x8xf32> to vector<1x8x8xf32>
      tpu.vector_store %arg8[%c0_129, %c0_130, %c16], %205 {strides = array<i32>} : memref<1x8x32xf32, #tpu.memory_space<vmem>>, vector<1x8x8xf32>,
      %c3_131 = arith.constant 3 : index
      %c0_132 = arith.constant 0 : index
      %c0_133 = arith.constant 0 : index
      %206 = vector.load %arg10[%c3_131, %c0_132, %c0_133] : memref<4x8x1xf32, #tpu.memory_space<vmem>>, vector<1x8x1xf32>
      %207 = vector.shape_cast %206 : vector<1x8x1xf32> to vector<8x1xf32>
      %cst_134 = arith.constant 1.000000e+00 : f32
      %208 = vector.broadcast %cst_134 : f32 to vector<8x1xf32>
      %209 = arith.divf %208, %207 : vector<8x1xf32>
      %c3_135 = arith.constant 3 : index
      %c0_136 = arith.constant 0 : index
      %c0_137 = arith.constant 0 : index
      %210 = vector.load %arg11[%c3_135, %c0_136, %c0_137] : memref<4x8x8xf32, #tpu.memory_space<vmem>>, vector<1x8x8xf32>
      %211 = vector.shape_cast %210 : vector<1x8x8xf32> to vector<8x8xf32>
      %212 = vector.broadcast %209 : vector<8x1xf32> to vector<8x8xf32>
      %213 = arith.mulf %211, %212 : vector<8x8xf32>
      %c0_138 = arith.constant 0 : index
      %c0_139 = arith.constant 0 : index
      %c24 = arith.constant 24 : index
      %214 = vector.load %arg8[%c0_138, %c0_139, %c24] : memref<1x8x32xf32, #tpu.memory_space<vmem>>, vector<1x8x8xf32>
      %215 = vector.shape_cast %214 : vector<1x8x8xf32> to vector<8x8xf32>
      %216 = vector.shape_cast %213 : vector<8x8xf32> to vector<1x8x8xf32>
      tpu.vector_store %arg8[%c0_138, %c0_139, %c24], %216 {strides = array<i32>} : memref<1x8x32xf32, #tpu.memory_space<vmem>>, vector<1x8x8xf32>,
    } else {
    }
    return
  }
  func.func @transform_0(%arg0: i32, %arg1: i32, %arg2: i32, %arg3: i32) -> (i32, i32, i32) {
    %c0_i32 = arith.constant 0 : i32
    return %arg0, %arg2, %arg1 : i32, i32, i32
  }
  func.func @transform_1(%arg0: i32, %arg1: i32, %arg2: i32, %arg3: i32) -> (i32, i32, i32) {
    %c0_i32 = arith.constant 0 : i32
    return %arg0, %arg3, %arg1 : i32, i32, i32
  }
  func.func @transform_2(%arg0: i32, %arg1: i32, %arg2: i32, %arg3: i32) -> (i32, i32, i32) {
    %c0_i32 = arith.constant 0 : i32
    return %arg0, %arg3, %arg1 : i32, i32, i32
  }
  func.func @transform_3(%arg0: i32, %arg1: i32, %arg2: i32, %arg3: i32) -> (i32, i32, i32) {
    %c0_i32 = arith.constant 0 : i32
    %c0_i32_0 = arith.constant 0 : i32
    return %arg0, %c0_i32, %arg3 : i32, i32, i32
  }
  func.func @transform_4(%arg0: i32, %arg1: i32, %arg2: i32, %arg3: i32) -> (i32, i32, i32) {
    %c0_i32 = arith.constant 0 : i32
    return %arg0, %arg2, %arg1 : i32, i32, i32
  }
}

module attributes {stable_mosaic.version = 11 : i64} {
  func.func @_fused_matmul_kernel(%arg0: i32, %arg1: i32, %arg2: memref<16x64xf32, #tpu.memory_space<vmem>>, %arg3: memref<64x32xf32, #tpu.memory_space<vmem>>, %arg4: memref<1x32xf32, #tpu.memory_space<vmem>>, %arg5: memref<16x32xf32, #tpu.memory_space<vmem>>, %arg6: memref<16x32xf32, #tpu.memory_space<vmem>>) attributes {dimension_semantics = [#tpu.dimension_semantics<parallel>, #tpu.dimension_semantics<parallel>], iteration_bounds = array<i64: 1, 1>, scalar_prefetch = 0 : i64, scratch_operands = 0 : i64, tpu.core_type = #tpu.core_type<tc>, window_params = [{transform_indices = @transform_0, window_bounds = array<i64: 16, 64>}, {transform_indices = @transform_1, window_bounds = array<i64: 64, 32>}, {transform_indices = @transform_2, window_bounds = array<i64: 1, 32>}, {transform_indices = @transform_3, window_bounds = array<i64: 16, 32>}, {transform_indices = @transform_4, window_bounds = array<i64: 16, 32>}]} {
    %c0 = arith.constant 0 : index
    %c0_0 = arith.constant 0 : index
    %0 = vector.load %arg2[%c0, %c0_0] : memref<16x64xf32, #tpu.memory_space<vmem>>, vector<16x64xf32>
    %c0_1 = arith.constant 0 : index
    %c0_2 = arith.constant 0 : index
    %1 = vector.load %arg3[%c0_1, %c0_2] : memref<64x32xf32, #tpu.memory_space<vmem>>, vector<64x32xf32>
    %cst = arith.constant dense<0.000000e+00> : vector<16x32xf32>
    %2 = tpu.matmul %0, %1, %cst {dimension_numbers = #tpu.dot_dimension_numbers<[1], [0], [0], [1], [0, 0, 1, 1], [], []>} : vector<16x64xf32>, vector<64x32xf32>, vector<16x32xf32> -> vector<16x32xf32>
    %c0_3 = arith.constant 0 : index
    %c0_4 = arith.constant 0 : index
    %3 = vector.load %arg4[%c0_3, %c0_4] : memref<1x32xf32, #tpu.memory_space<vmem>>, vector<1x32xf32>
    %4 = vector.broadcast %3 : vector<1x32xf32> to vector<16x32xf32>
    %5 = arith.addf %2, %4 : vector<16x32xf32>
    %c0_5 = arith.constant 0 : index
    %c0_6 = arith.constant 0 : index
    %6 = vector.load %arg5[%c0_5, %c0_6] : memref<16x32xf32, #tpu.memory_space<vmem>>, vector<16x32xf32>
    %7 = arith.addf %5, %6 : vector<16x32xf32>
    %c0_7 = arith.constant 0 : index
    %c0_8 = arith.constant 0 : index
    %8 = vector.load %arg6[%c0_7, %c0_8] : memref<16x32xf32, #tpu.memory_space<vmem>>, vector<16x32xf32>
    tpu.vector_store %arg6[%c0_7, %c0_8], %7 {strides = array<i32>} : memref<16x32xf32, #tpu.memory_space<vmem>>, vector<16x32xf32>,
    return
  }
  func.func @transform_0(%arg0: i32, %arg1: i32) -> (i32, i32) {
    %c0_i32 = arith.constant 0 : i32
    %c0_i32_0 = arith.constant 0 : i32
    return %arg0, %c0_i32 : i32, i32
  }
  func.func @transform_1(%arg0: i32, %arg1: i32) -> (i32, i32) {
    %c0_i32 = arith.constant 0 : i32
    %c0_i32_0 = arith.constant 0 : i32
    return %c0_i32, %arg1 : i32, i32
  }
  func.func @transform_2(%arg0: i32, %arg1: i32) -> (i32, i32) {
    %c0_i32 = arith.constant 0 : i32
    %c0_i32_0 = arith.constant 0 : i32
    return %c0_i32, %arg1 : i32, i32
  }
  func.func @transform_3(%arg0: i32, %arg1: i32) -> (i32, i32) {
    %c0_i32 = arith.constant 0 : i32
    return %arg0, %arg1 : i32, i32
  }
  func.func @transform_4(%arg0: i32, %arg1: i32) -> (i32, i32) {
    %c0_i32 = arith.constant 0 : i32
    return %arg0, %arg1 : i32, i32
  }
}

module attributes {stable_mosaic.version = 11 : i64} {
  func.func @_layernorm_kernel(%arg0: i32, %arg1: memref<16x32xf32, #tpu.memory_space<vmem>>, %arg2: memref<1x32xf32, #tpu.memory_space<vmem>>, %arg3: memref<1x32xf32, #tpu.memory_space<vmem>>, %arg4: memref<16x32xf32, #tpu.memory_space<vmem>>) attributes {dimension_semantics = [#tpu.dimension_semantics<parallel>], iteration_bounds = array<i64: 1>, scalar_prefetch = 0 : i64, scratch_operands = 0 : i64, tpu.core_type = #tpu.core_type<tc>, window_params = [{transform_indices = @transform_0, window_bounds = array<i64: 16, 32>}, {pipeline_mode = #tpu.pipeline_mode<synchronous>, transform_indices = @transform_1, window_bounds = array<i64: 1, 32>}, {pipeline_mode = #tpu.pipeline_mode<synchronous>, transform_indices = @transform_2, window_bounds = array<i64: 1, 32>}, {transform_indices = @transform_3, window_bounds = array<i64: 16, 32>}]} {
    %c0 = arith.constant 0 : index
    %c0_0 = arith.constant 0 : index
    %0 = vector.load %arg1[%c0, %c0_0] : memref<16x32xf32, #tpu.memory_space<vmem>>, vector<16x32xf32>
    %cst = arith.constant dense<0.000000e+00> : vector<16xf32>
    %1 = vector.multi_reduction <add>, %0, %cst [1] : vector<16x32xf32> to vector<16xf32>
    %2 = vector.shape_cast %1 : vector<16xf32> to vector<16x1xf32>
    %cst_1 = arith.constant 3.200000e+01 : f32
    %3 = vector.broadcast %cst_1 : f32 to vector<16x1xf32>
    %4 = arith.divf %2, %3 : vector<16x1xf32>
    %5 = vector.broadcast %4 : vector<16x1xf32> to vector<16x32xf32>
    %6 = arith.subf %0, %5 : vector<16x32xf32>
    %7 = arith.mulf %6, %6 : vector<16x32xf32>
    %cst_2 = arith.constant dense<0.000000e+00> : vector<16xf32>
    %8 = vector.multi_reduction <add>, %7, %cst_2 [1] : vector<16x32xf32> to vector<16xf32>
    %9 = vector.shape_cast %8 : vector<16xf32> to vector<16x1xf32>
    %cst_3 = arith.constant 0.0322580636 : f32
    %10 = vector.broadcast %cst_3 : f32 to vector<16x1xf32>
    %11 = arith.mulf %9, %10 : vector<16x1xf32>
    %12 = math.sqrt %11 : vector<16x1xf32>
    %cst_4 = arith.constant 9.99999997E-7 : f32
    %13 = vector.broadcast %cst_4 : f32 to vector<16x1xf32>
    %14 = arith.addf %12, %13 : vector<16x1xf32>
    %cst_5 = arith.constant 1.000000e+00 : f32
    %15 = vector.broadcast %cst_5 : f32 to vector<16x1xf32>
    %16 = arith.divf %15, %14 : vector<16x1xf32>
    %c0_6 = arith.constant 0 : index
    %c0_7 = arith.constant 0 : index
    %17 = vector.load %arg2[%c0_6, %c0_7] : memref<1x32xf32, #tpu.memory_space<vmem>>, vector<1x32xf32>
    %18 = vector.broadcast %4 : vector<16x1xf32> to vector<16x32xf32>
    %19 = arith.subf %0, %18 : vector<16x32xf32>
    %20 = vector.broadcast %17 : vector<1x32xf32> to vector<16x32xf32>
    %21 = arith.mulf %20, %19 : vector<16x32xf32>
    %22 = vector.broadcast %16 : vector<16x1xf32> to vector<16x32xf32>
    %23 = arith.mulf %21, %22 : vector<16x32xf32>
    %c0_8 = arith.constant 0 : index
    %c0_9 = arith.constant 0 : index
    %24 = vector.load %arg3[%c0_8, %c0_9] : memref<1x32xf32, #tpu.memory_space<vmem>>, vector<1x32xf32>
    %25 = vector.broadcast %24 : vector<1x32xf32> to vector<16x32xf32>
    %26 = arith.addf %23, %25 : vector<16x32xf32>
    %c0_10 = arith.constant 0 : index
    %c0_11 = arith.constant 0 : index
    %27 = vector.load %arg4[%c0_10, %c0_11] : memref<16x32xf32, #tpu.memory_space<vmem>>, vector<16x32xf32>
    tpu.vector_store %arg4[%c0_10, %c0_11], %26 {strides = array<i32>} : memref<16x32xf32, #tpu.memory_space<vmem>>, vector<16x32xf32>,
    return
  }
  func.func @transform_0(%arg0: i32) -> (i32, i32) {
    %c0_i32 = arith.constant 0 : i32
    %c0_i32_0 = arith.constant 0 : i32
    return %arg0, %c0_i32 : i32, i32
  }
  func.func @transform_1(%arg0: i32) -> (i32, i32) {
    %c0_i32 = arith.constant 0 : i32
    %c0_i32_0 = arith.constant 0 : i32
    %c0_i32_1 = arith.constant 0 : i32
    return %c0_i32, %c0_i32_0 : i32, i32
  }
  func.func @transform_2(%arg0: i32) -> (i32, i32) {
    %c0_i32 = arith.constant 0 : i32
    %c0_i32_0 = arith.constant 0 : i32
    %c0_i32_1 = arith.constant 0 : i32
    return %c0_i32, %c0_i32_0 : i32, i32
  }
  func.func @transform_3(%arg0: i32) -> (i32, i32) {
    %c0_i32 = arith.constant 0 : i32
    %c0_i32_0 = arith.constant 0 : i32
    return %arg0, %c0_i32 : i32, i32
  }
}

</mosaic_0001>

<llo_original>
// kernel: decoder_forward.19
$region0: #{decoder_forward.19}
  #allocation0 [shape = 'u32[]', space=smem, size = 0x4, offset = 0x4, fixed_abs, tag = 'smem constant byte address 0x4 - core index']
  #allocation1 [shape = 'u32[144,128]{1,0:T(1,128)}', space=vmem, size = 0x12000, scoped, tag = 'internal scratch']
  %s0 = inlined_call_operand.vmem [shape: f32[16,32], index: 0, kind: input, shape index: {}]
  %s1 = inlined_call_operand.vmem [shape: f32[1,32], index: 1, kind: input, shape index: {}]
  %s2 = inlined_call_operand.vmem [shape: f32[1,32], index: 2, kind: input, shape index: {}]
  %s3 = inlined_call_operand.vmem [shape: f32[32,96], index: 3, kind: input, shape index: {}]
  %s4 = inlined_call_operand.vmem [shape: f32[1,96], index: 4, kind: input, shape index: {}]
  %s5 = inlined_call_operand.vmem [shape: f32[16,96], index: 5, kind: output, shape index: {}]
  %s6 = sld [smem:[#allocation0]]
  $region30: #{decoder_forward.19} parent=0
    _
  %s8 = ssub.s32 1, %s6
  %s9 = scalar_select 0, %s8, %s6
  // Predicated region
  $region2: #{decoder_forward.19} parent=0 // pred_check
    _
  $region3: #{decoder_forward.19} parent=0 // pred_check_branch
    %11 = sbr.rel (0) target = $region5
  $region4: #{decoder_forward.19} parent=0 // pred_region
    _
  $region5: #{decoder_forward.19} parent=0 // pred_fallthru
    _
  // Predicated region
  $region6: #{decoder_forward.19} parent=0 // pred_check
    _
  $region7: #{decoder_forward.19} parent=0 // pred_check_branch
    %13 = sbr.rel (0) target = $region9
  $region8: #{decoder_forward.19} parent=0 // pred_region
    _
  $region9: #{decoder_forward.19} parent=0 // pred_fallthru
    _
  // Predicated region
  $region10: #{decoder_forward.19} parent=0 // pred_check
    _
  $region11: #{decoder_forward.19} parent=0 // pred_check_branch
    %15 = sbr.rel (0) target = $region13
  $region12: #{decoder_forward.19} parent=0 // pred_region
    _
  $region13: #{decoder_forward.19} parent=0 // pred_fallthru
    _
  // Predicated region
  $region14: #{decoder_forward.19} parent=0 // pred_check
    _
  $region15: #{decoder_forward.19} parent=0 // pred_check_branch
    %17 = sbr.rel (0) target = $region17
  $region16: #{decoder_forward.19} parent=0 // pred_region
    _
  $region17: #{decoder_forward.19} parent=0 // pred_fallthru
    _
  // Predicated region
  $region18: #{decoder_forward.19} parent=0 // pred_check
    _
  $region19: #{decoder_forward.19} parent=0 // pred_check_branch
    %19 = sbr.rel (0) target = $region21
  $region20: #{decoder_forward.19} parent=0 // pred_region
    _
  $region21: #{decoder_forward.19} parent=0 // pred_fallthru
    _
  %v20 = vld [vmem:[%s0] sm:$0xff]
  %v21 = vld [vmem:[%s0 + $0x8] sm:$0xff]
  %vm22 = vcmask 261120
  %v23 = vsel %vm22, %v20, 0.0
  %24 = vadd.xlane.f32.xlu0 %v23
  %v25 = vpop.xlane.xlu0 %24
  %v26 = vsel %vm22, %v21, 0.0
  %27 = vadd.xlane.f32.xlu0 %v26
  %v28 = vpop.xlane.xlu0 %27
  %v29 = vrcp.pop 32.0
  %v30 = vmul.f32 %v25, %v29
  %v31 = vmul.f32 %v28, %v29
  %v32 = vsub.f32 %v20, %v30
  %v33 = vsub.f32 %v21, %v31
  %v34 = vmul.f32 %v32, %v32
  %v35 = vmul.f32 %v33, %v33
  %v36 = vsel %vm22, %v34, 0.0
  %37 = vadd.xlane.f32.xlu0 %v36
  %v38 = vpop.xlane.xlu0 %37
  %v39 = vsel %vm22, %v35, 0.0
  %40 = vadd.xlane.f32.xlu0 %v39
  %v41 = vpop.xlane.xlu0 %40
  %v42 = vmul.f32 %v38, 0.032258064
  %v43 = vmul.f32 %v41, 0.032258064
  %v44 = vrsqrt.pop %v42
  %v45 = vmul.f32 %v42, %v44
  %vm46 = vcmp.eq.f32.partialorder %v42, inf
  %v47 = vsel %vm46, %v42, %v45
  %vm48 = vcmp.eq.f32.partialorder %v42, 0.0
  %v49 = vand.u32 %v42, 2147483648
  %v50 = vsel %vm48, %v49, %v47
  %v51 = vrsqrt.pop %v43
  %v52 = vmul.f32 %v43, %v51
  %vm53 = vcmp.eq.f32.partialorder %v43, inf
  %v54 = vsel %vm53, %v43, %v52
  %vm55 = vcmp.eq.f32.partialorder %v43, 0.0
  %v56 = vand.u32 %v43, 2147483648
  %v57 = vsel %vm55, %v56, %v54
  %v58 = vadd.f32 %v50, 1e-06
  %v59 = vadd.f32 %v57, 1e-06
  %v60 = vrcp.pop %v58
  %v61 = vmul.f32 1.0, %v60
  %v62 = vrcp.pop %v59
  %v63 = vmul.f32 1.0, %v62
  %v64 = vld [vmem:[%s1] sm:$0x1]
  %v66 = vlaneseq
  %v67 = vshrl.u32 %v66, 7
  %v68 = vsub.s32 0, %v67
  %v69 = vrot.slane %v64, %v68
  %v71 = vmul.f32 %v69, %v32
  %v72 = vmul.f32 %v69, %v33
  %v73 = vmul.f32 %v71, %v61
  %v74 = vmul.f32 %v72, %v63
  %v75 = vld [vmem:[%s2] sm:$0x1]
  %v77 = vlaneseq
  %v78 = vshrl.u32 %v77, 7
  %v79 = vsub.s32 0, %v78
  %v80 = vrot.slane %v75, %v79
  %v82 = vadd.f32 %v73, %v80
  %v83 = vadd.f32 %v74, %v80
  %v84 = vld [vmem:[%s3] sm:$0xff]
  %v85 = vld [vmem:[%s3 + $0x8] sm:$0xff]
  %v86 = vld [vmem:[%s3 + $0x10] sm:$0xff]
  %v87 = vld [vmem:[%s3 + $0x18] sm:$0xff]
  %v88 = vld [vmem:[%s4] sm:$0x1]
  %v90 = vlaneseq
  %v91 = vshrl.u32 %v90, 7
  %v92 = vsub.s32 0, %v91
  %v93 = vrot.slane %v88, %v92
  %v96 = vsel %vm22, %v82, 0
  %v99 = vsel %vm22, %v83, 0
  %101 = vmatprep.subr.mxu0 0.0
  %102 = vmatpush1.msra.mxu0 %v84
  %103 = vmatprep.subr.mxu0 0.0
  %104 = vmatpush1.msra.mxu0 %v85
  %105 = vmatprep.subr.mxu0 0.0
  %106 = vmatpush1.msra.mxu0 %v86
  %107 = vmatprep.subr.mxu0 0.0
  %108 = vmatpush1.msra.mxu0 %v87
  %109 = vmatprep.subr.mxu0 0.0
  %110 = vmatpush1.msra.mxu0 0.0
  %111 = vmatprep.subr.mxu0 0.0
  %112 = vmatpush1.msra.mxu0 0.0
  %113 = vmatprep.subr.mxu0 0.0
  %114 = vmatpush1.msra.mxu0 0.0
  %115 = vmatprep.subr.mxu0 0.0
  %116 = vmatpush1.msra.mxu0 0.0
  %117 = vmatprep.subr.mxu0 0.0
  %118 = vmatpush1.msra.mxu0 0.0
  %119 = vmatprep.subr.mxu0 0.0
  %120 = vmatpush1.msra.mxu0 0.0
  %121 = vmatprep.subr.mxu0 0.0
  %122 = vmatpush1.msra.mxu0 0.0
  %123 = vmatprep.subr.mxu0 0.0
  %124 = vmatpush1.msra.mxu0 0.0
  %125 = vmatprep.subr.mxu0 0.0
  %126 = vmatpush1.msra.mxu0 0.0
  %127 = vmatprep.subr.mxu0 0.0
  %128 = vmatpush1.msra.mxu0 0.0
  %129 = vmatprep.subr.mxu0 0.0
  %130 = vmatpush1.msra.mxu0 0.0
  %131 = vmatprep.subr.mxu0 0.0
  %132 = vmatpush1.msra.mxu0 0.0
  %133 = vmatprep.subr.mxu0 0.0
  %134 = vmatpush1.msra.mxu0 0.0
  %135 = vmatprep.subr.mxu0 0.0
  %136 = vmatpush1.msra.mxu0 0.0
  %137 = vmatprep.subr.mxu0 0.0
  %138 = vmatpush1.msra.mxu0 0.0
  %139 = vmatprep.subr.mxu0 0.0
  %140 = vmatpush1.msra.mxu0 0.0
  %141 = vmatprep.subr.mxu0 0.0
  %142 = vmatpush1.msra.mxu0 0.0
  %143 = vmatprep.subr.mxu0 0.0
  %144 = vmatpush1.msra.mxu0 0.0
  %145 = vmatprep.subr.mxu0 0.0
  %146 = vmatpush1.msra.mxu0 0.0
  %147 = vmatprep.subr.mxu0 0.0
  %148 = vmatpush1.msra.mxu0 0.0
  %149 = vmatprep.subr.mxu0 0.0
  %150 = vmatpush1.msra.mxu0 0.0
  %151 = vmatprep.subr.mxu0 0.0
  %152 = vmatpush1.msra.mxu0 0.0
  %153 = vmatprep.subr.mxu0 0.0
  %154 = vmatpush1.msra.mxu0 0.0
  %155 = vmatprep.subr.mxu0 0.0
  %156 = vmatpush1.msra.mxu0 0.0
  %157 = vmatprep.subr.mxu0 0.0
  %158 = vmatpush1.msra.mxu0 0.0
  %159 = vmatprep.subr.mxu0 0.0
  %160 = vmatpush1.msra.mxu0 0.0
  %161 = vmatprep.subr.mxu0 0.0
  %162 = vmatpush1.msra.mxu0 0.0
  %163 = vmatprep.subr.mxu0 0.0
  %164 = vmatpush1.msra.mxu0 0.0
  %165 = vmatprep.mubr.f32.mxu0 0.0
  %166 = vmatmul.mubr.f32.gmra.mrb[0].mxu0 %v96
  %v167 = vpop.f32.mrb[0].mxu0
  %v168 = vadd.f32 %v93, %v167
  %v169 = vpop.f32.mrb[0].mxu0
  %170 = vmatprep.mubr.f32.mxu0 0.0
  %171 = vmatmul.mubr.f32.gmra.mrb[0].mxu0 %v99
  %v172 = vpop.f32.mrb[0].mxu0
  %v173 = vadd.f32 %v93, %v172
  %v174 = vpop.f32.mrb[0].mxu0
  %175 = vdwg.mxu0
  %vm176 = vcmask 785408
  %177 = vst.msk [vmem:[%s5] sm:$0xff] %vm176, %v168
  %178 = vst.msk [vmem:[%s5 + $0x8] sm:$0xff] %vm176, %v173
  // Predicated region
  $region22: #{decoder_forward.19} parent=0 // pred_check
    _
  $region23: #{decoder_forward.19} parent=0 // pred_check_branch
    %180 = sbr.rel (0) target = $region25
  $region24: #{decoder_forward.19} parent=0 // pred_region
    _
  $region25: #{decoder_forward.19} parent=0 // pred_fallthru
    _
  // Predicated region
  $region26: #{decoder_forward.19} parent=0 // pred_check
    _
  $region27: #{decoder_forward.19} parent=0 // pred_check_branch
    %182 = sbr.rel (0) target = $region29
  $region28: #{decoder_forward.19} parent=0 // pred_region
    _
  $region29: #{decoder_forward.19} parent=0 // pred_fallthru
    _

// kernel: decoder_forward.21
$region0: #{decoder_forward.21}
  #allocation0 [shape = 'u32[]', space=smem, size = 0x4, offset = 0x4, fixed_abs, tag = 'smem constant byte address 0x4 - core index']
  #allocation1 [shape = 'u32[144,128]{1,0:T(1,128)}', space=vmem, size = 0x12000, scoped, tag = 'internal scratch']
  %s0 = inlined_call_operand.vmem [shape: f32[16,32], index: 0, kind: input, shape index: {}]
  %s1 = inlined_call_operand.vmem [shape: f32[32,32], index: 1, kind: input, shape index: {}]
  %s2 = inlined_call_operand.vmem [shape: f32[1,32], index: 2, kind: input, shape index: {}]
  %s3 = inlined_call_operand.vmem [shape: f32[16,32], index: 3, kind: input, shape index: {}]
  %s4 = inlined_call_operand.vmem [shape: f32[16,32], index: 4, kind: output, shape index: {}]
  %s5 = sld [smem:[#allocation0]]
  $region26: #{decoder_forward.21} parent=0
    _
  %s7 = ssub.s32 1, %s5
  %s8 = scalar_select 0, %s7, %s5
  // Predicated region
  $region2: #{decoder_forward.21} parent=0 // pred_check
    _
  $region3: #{decoder_forward.21} parent=0 // pred_check_branch
    %10 = sbr.rel (0) target = $region5
  $region4: #{decoder_forward.21} parent=0 // pred_region
    _
  $region5: #{decoder_forward.21} parent=0 // pred_fallthru
    _
  // Predicated region
  $region6: #{decoder_forward.21} parent=0 // pred_check
    _
  $region7: #{decoder_forward.21} parent=0 // pred_check_branch
    %12 = sbr.rel (0) target = $region9
  $region8: #{decoder_forward.21} parent=0 // pred_region
    _
  $region9: #{decoder_forward.21} parent=0 // pred_fallthru
    _
  // Predicated region
  $region10: #{decoder_forward.21} parent=0 // pred_check
    _
  $region11: #{decoder_forward.21} parent=0 // pred_check_branch
    %14 = sbr.rel (0) target = $region13
  $region12: #{decoder_forward.21} parent=0 // pred_region
    _
  $region13: #{decoder_forward.21} parent=0 // pred_fallthru
    _
  // Predicated region
  $region14: #{decoder_forward.21} parent=0 // pred_check
    _
  $region15: #{decoder_forward.21} parent=0 // pred_check_branch
    %16 = sbr.rel (0) target = $region17
  $region16: #{decoder_forward.21} parent=0 // pred_region
    _
  $region17: #{decoder_forward.21} parent=0 // pred_fallthru
    _
  %v17 = vld [vmem:[%s0] sm:$0xff]
  %v18 = vld [vmem:[%s0 + $0x8] sm:$0xff]
  %v19 = vld [vmem:[%s1] sm:$0xff]
  %v20 = vld [vmem:[%s1 + $0x8] sm:$0xff]
  %v21 = vld [vmem:[%s1 + $0x10] sm:$0xff]
  %v22 = vld [vmem:[%s1 + $0x18] sm:$0xff]
  %v23 = vld [vmem:[%s2] sm:$0x1]
  %v25 = vlaneseq
  %v26 = vshrl.u32 %v25, 7
  %v27 = vsub.s32 0, %v26
  %v28 = vrot.slane %v23, %v27
  %vm30 = vcmask 261120
  %v32 = vsel %vm30, %v17, 0
  %v35 = vsel %vm30, %v18, 0
  %37 = vmatprep.subr.mxu0 0.0
  %38 = vmatpush1.msra.mxu0 %v19
  %39 = vmatprep.subr.mxu0 0.0
  %40 = vmatpush1.msra.mxu0 %v20
  %41 = vmatprep.subr.mxu0 0.0
  %42 = vmatpush1.msra.mxu0 %v21
  %43 = vmatprep.subr.mxu0 0.0
  %44 = vmatpush1.msra.mxu0 %v22
  %45 = vmatprep.subr.mxu0 0.0
  %46 = vmatpush1.msra.mxu0 0.0
  %47 = vmatprep.subr.mxu0 0.0
  %48 = vmatpush1.msra.mxu0 0.0
  %49 = vmatprep.subr.mxu0 0.0
  %50 = vmatpush1.msra.mxu0 0.0
  %51 = vmatprep.subr.mxu0 0.0
  %52 = vmatpush1.msra.mxu0 0.0
  %53 = vmatprep.subr.mxu0 0.0
  %54 = vmatpush1.msra.mxu0 0.0
  %55 = vmatprep.subr.mxu0 0.0
  %56 = vmatpush1.msra.mxu0 0.0
  %57 = vmatprep.subr.mxu0 0.0
  %58 = vmatpush1.msra.mxu0 0.0
  %59 = vmatprep.subr.mxu0 0.0
  %60 = vmatpush1.msra.mxu0 0.0
  %61 = vmatprep.subr.mxu0 0.0
  %62 = vmatpush1.msra.mxu0 0.0
  %63 = vmatprep.subr.mxu0 0.0
  %64 = vmatpush1.msra.mxu0 0.0
  %65 = vmatprep.subr.mxu0 0.0
  %66 = vmatpush1.msra.mxu0 0.0
  %67 = vmatprep.subr.mxu0 0.0
  %68 = vmatpush1.msra.mxu0 0.0
  %69 = vmatprep.subr.mxu0 0.0
  %70 = vmatpush1.msra.mxu0 0.0
  %71 = vmatprep.subr.mxu0 0.0
  %72 = vmatpush1.msra.mxu0 0.0
  %73 = vmatprep.subr.mxu0 0.0
  %74 = vmatpush1.msra.mxu0 0.0
  %75 = vmatprep.subr.mxu0 0.0
  %76 = vmatpush1.msra.mxu0 0.0
  %77 = vmatprep.subr.mxu0 0.0
  %78 = vmatpush1.msra.mxu0 0.0
  %79 = vmatprep.subr.mxu0 0.0
  %80 = vmatpush1.msra.mxu0 0.0
  %81 = vmatprep.subr.mxu0 0.0
  %82 = vmatpush1.msra.mxu0 0.0
  %83 = vmatprep.subr.mxu0 0.0
  %84 = vmatpush1.msra.mxu0 0.0
  %85 = vmatprep.subr.mxu0 0.0
  %86 = vmatpush1.msra.mxu0 0.0
  %87 = vmatprep.subr.mxu0 0.0
  %88 = vmatpush1.msra.mxu0 0.0
  %89 = vmatprep.subr.mxu0 0.0
  %90 = vmatpush1.msra.mxu0 0.0
  %91 = vmatprep.subr.mxu0 0.0
  %92 = vmatpush1.msra.mxu0 0.0
  %93 = vmatprep.subr.mxu0 0.0
  %94 = vmatpush1.msra.mxu0 0.0
  %95 = vmatprep.subr.mxu0 0.0
  %96 = vmatpush1.msra.mxu0 0.0
  %97 = vmatprep.subr.mxu0 0.0
  %98 = vmatpush1.msra.mxu0 0.0
  %99 = vmatprep.subr.mxu0 0.0
  %100 = vmatpush1.msra.mxu0 0.0
  %101 = vmatprep.mubr.f32.mxu0 0.0
  %102 = vmatmul.mubr.f32.gmra.mrb[0].mxu0 %v32
  %v103 = vpop.f32.mrb[0].mxu0
  %v104 = vadd.f32 %v28, %v103
  %v105 = vpop.f32.mrb[0].mxu0
  %106 = vmatprep.mubr.f32.mxu0 0.0
  %107 = vmatmul.mubr.f32.gmra.mrb[0].mxu0 %v35
  %v108 = vpop.f32.mrb[0].mxu0
  %v109 = vadd.f32 %v28, %v108
  %v110 = vpop.f32.mrb[0].mxu0
  %111 = vdwg.mxu0
  %v112 = vld [vmem:[%s3] sm:$0xff]
  %v113 = vld [vmem:[%s3 + $0x8] sm:$0xff]
  %v114 = vadd.f32 %v104, %v112
  %v115 = vadd.f32 %v109, %v113
  %116 = vst.msk [vmem:[%s4] sm:$0xff] %vm30, %v114
  %117 = vst.msk [vmem:[%s4 + $0x8] sm:$0xff] %vm30, %v115
  // Predicated region
  $region18: #{decoder_forward.21} parent=0 // pred_check
    _
  $region19: #{decoder_forward.21} parent=0 // pred_check_branch
    %119 = sbr.rel (0) target = $region21
  $region20: #{decoder_forward.21} parent=0 // pred_region
    _
  $region21: #{decoder_forward.21} parent=0 // pred_fallthru
    _
  // Predicated region
  $region22: #{decoder_forward.21} parent=0 // pred_check
    _
  $region23: #{decoder_forward.21} parent=0 // pred_check_branch
    %121 = sbr.rel (0) target = $region25
  $region24: #{decoder_forward.21} parent=0 // pred_region
    _
  $region25: #{decoder_forward.21} parent=0 // pred_fallthru
    _

// kernel: decoder_forward.22
$region0: #{decoder_forward.22}
  #allocation0 [shape = 'u32[]', space=smem, size = 0x4, offset = 0x4, fixed_abs, tag = 'smem constant byte address 0x4 - core index']
  #allocation1 [shape = 'u32[144,128]{1,0:T(1,128)}', space=vmem, size = 0x12000, scoped, tag = 'internal scratch']
  %s0 = inlined_call_operand.vmem [shape: f32[16,32], index: 0, kind: input, shape index: {}]
  %s1 = inlined_call_operand.vmem [shape: f32[1,32], index: 1, kind: input, shape index: {}]
  %s2 = inlined_call_operand.vmem [shape: f32[1,32], index: 2, kind: input, shape index: {}]
  %s3 = inlined_call_operand.vmem [shape: f32[32,32], index: 3, kind: input, shape index: {}]
  %s4 = inlined_call_operand.vmem [shape: f32[1,32], index: 4, kind: input, shape index: {}]
  %s5 = inlined_call_operand.vmem [shape: f32[16,32], index: 5, kind: output, shape index: {}]
  %s6 = sld [smem:[#allocation0]]
  $region30: #{decoder_forward.22} parent=0
    _
  %s8 = ssub.s32 1, %s6
  %s9 = scalar_select 0, %s8, %s6
  // Predicated region
  $region2: #{decoder_forward.22} parent=0 // pred_check
    _
  $region3: #{decoder_forward.22} parent=0 // pred_check_branch
    %11 = sbr.rel (0) target = $region5
  $region4: #{decoder_forward.22} parent=0 // pred_region
    _
  $region5: #{decoder_forward.22} parent=0 // pred_fallthru
    _
  // Predicated region
  $region6: #{decoder_forward.22} parent=0 // pred_check
    _
  $region7: #{decoder_forward.22} parent=0 // pred_check_branch
    %13 = sbr.rel (0) target = $region9
  $region8: #{decoder_forward.22} parent=0 // pred_region
    _
  $region9: #{decoder_forward.22} parent=0 // pred_fallthru
    _
  // Predicated region
  $region10: #{decoder_forward.22} parent=0 // pred_check
    _
  $region11: #{decoder_forward.22} parent=0 // pred_check_branch
    %15 = sbr.rel (0) target = $region13
  $region12: #{decoder_forward.22} parent=0 // pred_region
    _
  $region13: #{decoder_forward.22} parent=0 // pred_fallthru
    _
  // Predicated region
  $region14: #{decoder_forward.22} parent=0 // pred_check
    _
  $region15: #{decoder_forward.22} parent=0 // pred_check_branch
    %17 = sbr.rel (0) target = $region17
  $region16: #{decoder_forward.22} parent=0 // pred_region
    _
  $region17: #{decoder_forward.22} parent=0 // pred_fallthru
    _
  // Predicated region
  $region18: #{decoder_forward.22} parent=0 // pred_check
    _
  $region19: #{decoder_forward.22} parent=0 // pred_check_branch
    %19 = sbr.rel (0) target = $region21
  $region20: #{decoder_forward.22} parent=0 // pred_region
    _
  $region21: #{decoder_forward.22} parent=0 // pred_fallthru
    _
  %v20 = vld [vmem:[%s0] sm:$0xff]
  %v21 = vld [vmem:[%s0 + $0x8] sm:$0xff]
  %vm22 = vcmask 261120
  %v23 = vsel %vm22, %v20, 0.0
  %24 = vadd.xlane.f32.xlu0 %v23
  %v25 = vpop.xlane.xlu0 %24
  %v26 = vsel %vm22, %v21, 0.0
  %27 = vadd.xlane.f32.xlu0 %v26
  %v28 = vpop.xlane.xlu0 %27
  %v29 = vrcp.pop 32.0
  %v30 = vmul.f32 %v25, %v29
  %v31 = vmul.f32 %v28, %v29
  %v32 = vsub.f32 %v20, %v30
  %v33 = vsub.f32 %v21, %v31
  %v34 = vmul.f32 %v32, %v32
  %v35 = vmul.f32 %v33, %v33
  %v36 = vsel %vm22, %v34, 0.0
  %37 = vadd.xlane.f32.xlu0 %v36
  %v38 = vpop.xlane.xlu0 %37
  %v39 = vsel %vm22, %v35, 0.0
  %40 = vadd.xlane.f32.xlu0 %v39
  %v41 = vpop.xlane.xlu0 %40
  %v42 = vmul.f32 %v38, 0.032258064
  %v43 = vmul.f32 %v41, 0.032258064
  %v44 = vrsqrt.pop %v42
  %v45 = vmul.f32 %v42, %v44
  %vm46 = vcmp.eq.f32.partialorder %v42, inf
  %v47 = vsel %vm46, %v42, %v45
  %vm48 = vcmp.eq.f32.partialorder %v42, 0.0
  %v49 = vand.u32 %v42, 2147483648
  %v50 = vsel %vm48, %v49, %v47
  %v51 = vrsqrt.pop %v43
  %v52 = vmul.f32 %v43, %v51
  %vm53 = vcmp.eq.f32.partialorder %v43, inf
  %v54 = vsel %vm53, %v43, %v52
  %vm55 = vcmp.eq.f32.partialorder %v43, 0.0
  %v56 = vand.u32 %v43, 2147483648
  %v57 = vsel %vm55, %v56, %v54
  %v58 = vadd.f32 %v50, 1e-06
  %v59 = vadd.f32 %v57, 1e-06
  %v60 = vrcp.pop %v58
  %v61 = vmul.f32 1.0, %v60
  %v62 = vrcp.pop %v59
  %v63 = vmul.f32 1.0, %v62
  %v64 = vld [vmem:[%s1] sm:$0x1]
  %v66 = vlaneseq
  %v67 = vshrl.u32 %v66, 7
  %v68 = vsub.s32 0, %v67
  %v69 = vrot.slane %v64, %v68
  %v71 = vmul.f32 %v69, %v32
  %v72 = vmul.f32 %v69, %v33
  %v73 = vmul.f32 %v71, %v61
  %v74 = vmul.f32 %v72, %v63
  %v75 = vld [vmem:[%s2] sm:$0x1]
  %v77 = vlaneseq
  %v78 = vshrl.u32 %v77, 7
  %v79 = vsub.s32 0, %v78
  %v80 = vrot.slane %v75, %v79
  %v82 = vadd.f32 %v73, %v80
  %v83 = vadd.f32 %v74, %v80
  %v84 = vld [vmem:[%s3] sm:$0xff]
  %v85 = vld [vmem:[%s3 + $0x8] sm:$0xff]
  %v86 = vld [vmem:[%s3 + $0x10] sm:$0xff]
  %v87 = vld [vmem:[%s3 + $0x18] sm:$0xff]
  %v88 = vld [vmem:[%s4] sm:$0x1]
  %v90 = vlaneseq
  %v91 = vshrl.u32 %v90, 7
  %v92 = vsub.s32 0, %v91
  %v93 = vrot.slane %v88, %v92
  %v96 = vsel %vm22, %v82, 0
  %v99 = vsel %vm22, %v83, 0
  %101 = vmatprep.subr.mxu0 0.0
  %102 = vmatpush1.msra.mxu0 %v84
  %103 = vmatprep.subr.mxu0 0.0
  %104 = vmatpush1.msra.mxu0 %v85
  %105 = vmatprep.subr.mxu0 0.0
  %106 = vmatpush1.msra.mxu0 %v86
  %107 = vmatprep.subr.mxu0 0.0
  %108 = vmatpush1.msra.mxu0 %v87
  %109 = vmatprep.subr.mxu0 0.0
  %110 = vmatpush1.msra.mxu0 0.0
  %111 = vmatprep.subr.mxu0 0.0
  %112 = vmatpush1.msra.mxu0 0.0
  %113 = vmatprep.subr.mxu0 0.0
  %114 = vmatpush1.msra.mxu0 0.0
  %115 = vmatprep.subr.mxu0 0.0
  %116 = vmatpush1.msra.mxu0 0.0
  %117 = vmatprep.subr.mxu0 0.0
  %118 = vmatpush1.msra.mxu0 0.0
  %119 = vmatprep.subr.mxu0 0.0
  %120 = vmatpush1.msra.mxu0 0.0
  %121 = vmatprep.subr.mxu0 0.0
  %122 = vmatpush1.msra.mxu0 0.0
  %123 = vmatprep.subr.mxu0 0.0
  %124 = vmatpush1.msra.mxu0 0.0
  %125 = vmatprep.subr.mxu0 0.0
  %126 = vmatpush1.msra.mxu0 0.0
  %127 = vmatprep.subr.mxu0 0.0
  %128 = vmatpush1.msra.mxu0 0.0
  %129 = vmatprep.subr.mxu0 0.0
  %130 = vmatpush1.msra.mxu0 0.0
  %131 = vmatprep.subr.mxu0 0.0
  %132 = vmatpush1.msra.mxu0 0.0
  %133 = vmatprep.subr.mxu0 0.0
  %134 = vmatpush1.msra.mxu0 0.0
  %135 = vmatprep.subr.mxu0 0.0
  %136 = vmatpush1.msra.mxu0 0.0
  %137 = vmatprep.subr.mxu0 0.0
  %138 = vmatpush1.msra.mxu0 0.0
  %139 = vmatprep.subr.mxu0 0.0
  %140 = vmatpush1.msra.mxu0 0.0
  %141 = vmatprep.subr.mxu0 0.0
  %142 = vmatpush1.msra.mxu0 0.0
  %143 = vmatprep.subr.mxu0 0.0
  %144 = vmatpush1.msra.mxu0 0.0
  %145 = vmatprep.subr.mxu0 0.0
  %146 = vmatpush1.msra.mxu0 0.0
  %147 = vmatprep.subr.mxu0 0.0
  %148 = vmatpush1.msra.mxu0 0.0
  %149 = vmatprep.subr.mxu0 0.0
  %150 = vmatpush1.msra.mxu0 0.0
  %151 = vmatprep.subr.mxu0 0.0
  %152 = vmatpush1.msra.mxu0 0.0
  %153 = vmatprep.subr.mxu0 0.0
  %154 = vmatpush1.msra.mxu0 0.0
  %155 = vmatprep.subr.mxu0 0.0
  %156 = vmatpush1.msra.mxu0 0.0
  %157 = vmatprep.subr.mxu0 0.0
  %158 = vmatpush1.msra.mxu0 0.0
  %159 = vmatprep.subr.mxu0 0.0
  %160 = vmatpush1.msra.mxu0 0.0
  %161 = vmatprep.subr.mxu0 0.0
  %162 = vmatpush1.msra.mxu0 0.0
  %163 = vmatprep.subr.mxu0 0.0
  %164 = vmatpush1.msra.mxu0 0.0
  %165 = vmatprep.mubr.f32.mxu0 0.0
  %166 = vmatmul.mubr.f32.gmra.mrb[0].mxu0 %v96
  %v167 = vpop.f32.mrb[0].mxu0
  %v168 = vadd.f32 %v93, %v167
  %v169 = vpop.f32.mrb[0].mxu0
  %170 = vmatprep.mubr.f32.mxu0 0.0
  %171 = vmatmul.mubr.f32.gmra.mrb[0].mxu0 %v99
  %v172 = vpop.f32.mrb[0].mxu0
  %v173 = vadd.f32 %v93, %v172
  %v174 = vpop.f32.mrb[0].mxu0
  %175 = vdwg.mxu0
  %176 = vst.msk [vmem:[%s5] sm:$0xff] %vm22, %v168
  %177 = vst.msk [vmem:[%s5 + $0x8] sm:$0xff] %vm22, %v173
  // Predicated region
  $region22: #{decoder_forward.22} parent=0 // pred_check
    _
  $region23: #{decoder_forward.22} parent=0 // pred_check_branch
    %179 = sbr.rel (0) target = $region25
  $region24: #{decoder_forward.22} parent=0 // pred_region
    _
  $region25: #{decoder_forward.22} parent=0 // pred_fallthru
    _
  // Predicated region
  $region26: #{decoder_forward.22} parent=0 // pred_check
    _
  $region27: #{decoder_forward.22} parent=0 // pred_check_branch
    %181 = sbr.rel (0) target = $region29
  $region28: #{decoder_forward.22} parent=0 // pred_region
    _
  $region29: #{decoder_forward.22} parent=0 // pred_fallthru
    _

// kernel: decoder_forward.23
$region0: #{decoder_forward.23}
  #allocation0 [shape = 'u32[]', space=smem, size = 0x4, offset = 0x4, fixed_abs, tag = 'smem constant byte address 0x4 - core index']
  #allocation1 [shape = 'u32[144,128]{1,0:T(1,128)}', space=vmem, size = 0x12000, scoped, tag = 'internal scratch']
  %s0 = inlined_call_operand.vmem [shape: f32[16,32], index: 0, kind: input, shape index: {}]
  %s1 = inlined_call_operand.vmem [shape: f32[32,64], index: 1, kind: input, shape index: {}]
  %s2 = inlined_call_operand.vmem [shape: f32[1,64], index: 2, kind: input, shape index: {}]
  %s3 = inlined_call_operand.vmem [shape: f32[16,64], index: 3, kind: output, shape index: {}]
  %s4 = sld [smem:[#allocation0]]
  $region22: #{decoder_forward.23} parent=0
    _
  %s6 = ssub.s32 1, %s4
  %s7 = scalar_select 0, %s6, %s4
  // Predicated region
  $region2: #{decoder_forward.23} parent=0 // pred_check
    _
  $region3: #{decoder_forward.23} parent=0 // pred_check_branch
    %9 = sbr.rel (0) target = $region5
  $region4: #{decoder_forward.23} parent=0 // pred_region
    _
  $region5: #{decoder_forward.23} parent=0 // pred_fallthru
    _
  // Predicated region
  $region6: #{decoder_forward.23} parent=0 // pred_check
    _
  $region7: #{decoder_forward.23} parent=0 // pred_check_branch
    %11 = sbr.rel (0) target = $region9
  $region8: #{decoder_forward.23} parent=0 // pred_region
    _
  $region9: #{decoder_forward.23} parent=0 // pred_fallthru
    _
  // Predicated region
  $region10: #{decoder_forward.23} parent=0 // pred_check
    _
  $region11: #{decoder_forward.23} parent=0 // pred_check_branch
    %13 = sbr.rel (0) target = $region13
  $region12: #{decoder_forward.23} parent=0 // pred_region
    _
  $region13: #{decoder_forward.23} parent=0 // pred_fallthru
    _
  %v14 = vld [vmem:[%s0] sm:$0xff]
  %v15 = vld [vmem:[%s0 + $0x8] sm:$0xff]
  %v16 = vld [vmem:[%s1] sm:$0xff]
  %v17 = vld [vmem:[%s1 + $0x8] sm:$0xff]
  %v18 = vld [vmem:[%s1 + $0x10] sm:$0xff]
  %v19 = vld [vmem:[%s1 + $0x18] sm:$0xff]
  %v20 = vld [vmem:[%s2] sm:$0x1]
  %v22 = vlaneseq
  %v23 = vshrl.u32 %v22, 7
  %v24 = vsub.s32 0, %v23
  %v25 = vrot.slane %v20, %v24
  %vm27 = vcmask 261120
  %v29 = vsel %vm27, %v14, 0
  %v32 = vsel %vm27, %v15, 0
  %34 = vmatprep.subr.mxu0 0.0
  %35 = vmatpush1.msra.mxu0 %v16
  %36 = vmatprep.subr.mxu0 0.0
  %37 = vmatpush1.msra.mxu0 %v17
  %38 = vmatprep.subr.mxu0 0.0
  %39 = vmatpush1.msra.mxu0 %v18
  %40 = vmatprep.subr.mxu0 0.0
  %41 = vmatpush1.msra.mxu0 %v19
  %42 = vmatprep.subr.mxu0 0.0
  %43 = vmatpush1.msra.mxu0 0.0
  %44 = vmatprep.subr.mxu0 0.0
  %45 = vmatpush1.msra.mxu0 0.0
  %46 = vmatprep.subr.mxu0 0.0
  %47 = vmatpush1.msra.mxu0 0.0
  %48 = vmatprep.subr.mxu0 0.0
  %49 = vmatpush1.msra.mxu0 0.0
  %50 = vmatprep.subr.mxu0 0.0
  %51 = vmatpush1.msra.mxu0 0.0
  %52 = vmatprep.subr.mxu0 0.0
  %53 = vmatpush1.msra.mxu0 0.0
  %54 = vmatprep.subr.mxu0 0.0
  %55 = vmatpush1.msra.mxu0 0.0
  %56 = vmatprep.subr.mxu0 0.0
  %57 = vmatpush1.msra.mxu0 0.0
  %58 = vmatprep.subr.mxu0 0.0
  %59 = vmatpush1.msra.mxu0 0.0
  %60 = vmatprep.subr.mxu0 0.0
  %61 = vmatpush1.msra.mxu0 0.0
  %62 = vmatprep.subr.mxu0 0.0
  %63 = vmatpush1.msra.mxu0 0.0
  %64 = vmatprep.subr.mxu0 0.0
  %65 = vmatpush1.msra.mxu0 0.0
  %66 = vmatprep.subr.mxu0 0.0
  %67 = vmatpush1.msra.mxu0 0.0
  %68 = vmatprep.subr.mxu0 0.0
  %69 = vmatpush1.msra.mxu0 0.0
  %70 = vmatprep.subr.mxu0 0.0
  %71 = vmatpush1.msra.mxu0 0.0
  %72 = vmatprep.subr.mxu0 0.0
  %73 = vmatpush1.msra.mxu0 0.0
  %74 = vmatprep.subr.mxu0 0.0
  %75 = vmatpush1.msra.mxu0 0.0
  %76 = vmatprep.subr.mxu0 0.0
  %77 = vmatpush1.msra.mxu0 0.0
  %78 = vmatprep.subr.mxu0 0.0
  %79 = vmatpush1.msra.mxu0 0.0
  %80 = vmatprep.subr.mxu0 0.0
  %81 = vmatpush1.msra.mxu0 0.0
  %82 = vmatprep.subr.mxu0 0.0
  %83 = vmatpush1.msra.mxu0 0.0
  %84 = vmatprep.subr.mxu0 0.0
  %85 = vmatpush1.msra.mxu0 0.0
  %86 = vmatprep.subr.mxu0 0.0
  %87 = vmatpush1.msra.mxu0 0.0
  %88 = vmatprep.subr.mxu0 0.0
  %89 = vmatpush1.msra.mxu0 0.0
  %90 = vmatprep.subr.mxu0 0.0
  %91 = vmatpush1.msra.mxu0 0.0
  %92 = vmatprep.subr.mxu0 0.0
  %93 = vmatpush1.msra.mxu0 0.0
  %94 = vmatprep.subr.mxu0 0.0
  %95 = vmatpush1.msra.mxu0 0.0
  %96 = vmatprep.subr.mxu0 0.0
  %97 = vmatpush1.msra.mxu0 0.0
  %98 = vmatprep.mubr.f32.mxu0 0.0
  %99 = vmatmul.mubr.f32.gmra.mrb[0].mxu0 %v29
  %v100 = vpop.f32.mrb[0].mxu0
  %v101 = vadd.f32 %v25, %v100
  %v102 = vpop.f32.mrb[0].mxu0
  %103 = vmatprep.mubr.f32.mxu0 0.0
  %104 = vmatmul.mubr.f32.gmra.mrb[0].mxu0 %v32
  %v105 = vpop.f32.mrb[0].mxu0
  %v106 = vadd.f32 %v25, %v105
  %v107 = vpop.f32.mrb[0].mxu0
  %108 = vdwg.mxu0
  %vm109 = vcmask 523264
  %110 = vst.msk [vmem:[%s3] sm:$0xff] %vm109, %v101
  %111 = vst.msk [vmem:[%s3 + $0x8] sm:$0xff] %vm109, %v106
  // Predicated region
  $region14: #{decoder_forward.23} parent=0 // pred_check
    _
  $region15: #{decoder_forward.23} parent=0 // pred_check_branch
    %113 = sbr.rel (0) target = $region17
  $region16: #{decoder_forward.23} parent=0 // pred_region
    _
  $region17: #{decoder_forward.23} parent=0 // pred_fallthru
    _
  // Predicated region
  $region18: #{decoder_forward.23} parent=0 // pred_check
    _
  $region19: #{decoder_forward.23} parent=0 // pred_check_branch
    %115 = sbr.rel (0) target = $region21
  $region20: #{decoder_forward.23} parent=0 // pred_region
    _
  $region21: #{decoder_forward.23} parent=0 // pred_fallthru
    _

// kernel: decoder_forward.20
$region0: #{decoder_forward.20}
  #allocation0 [shape = 'u32[]', space=smem, size = 0x4, offset = 0x4, fixed_abs, tag = 'smem constant byte address 0x4 - core index']
  #allocation1 [shape = 'u32[144,128]{1,0:T(1,128)}', space=vmem, size = 0x12000, scoped, tag = 'internal scratch']
  #allocation2 [shape = 'f32[4,8,1]{2,1,0:T(8,128)}', space=vmem, size = 0x4000, scoped, tag = 'scratch operand']
  #allocation3 [shape = 'f32[4,8,1]{2,1,0:T(8,128)}', space=vmem, size = 0x4000, scoped, tag = 'scratch operand']
  #allocation4 [shape = 'f32[4,8,8]{2,1,0:T(8,128)}', space=vmem, size = 0x4000, scoped, tag = 'scratch operand']
  %s0 = inlined_call_operand.vmem [shape: f32[2,8,32], index: 0, kind: input, shape index: {}]
  %s1 = inlined_call_operand.vmem [shape: f32[2,8,32], index: 1, kind: input, shape index: {}]
  %s2 = inlined_call_operand.vmem [shape: f32[2,8,32], index: 2, kind: input, shape index: {}]
  %s3 = inlined_call_operand.vmem [shape: s8[2,8,8], index: 3, kind: input, shape index: {}]
  %s4 = inlined_call_operand.vmem [shape: f32[2,8,32], index: 4, kind: output, shape index: {}]
  %s5 = sld [smem:[#allocation0]]
  $region57: #{decoder_forward.20} parent=0
    _
  %s7 = ssub.s32 1, %s5
  %s8 = scalar_select 0, %s7, %s5
  loop: start=0, step=1, limit=4
  $region2: #{decoder_forward.20} parent=0 // loop_pre_header
    _
  $region3: #{decoder_forward.20} parent=0 // loop_header
    %s10 = sphi 0, %s14
    %p11 = scmp.ge.s32.totalorder %s10, 4
    %s17 = sphi 0, %s43
    %s18 = sphi 0, %s39
    %s19 = sphi 0, %s35
    %s20 = sphi 0, %s31
    %s21 = sphi 0, %s17
    %s22 = sphi 0, %s18
    %s23 = sphi 0, %s19
    %s24 = sphi 0, %s20
    %s25 = sphi 0, %s21
    %s26 = sphi 0, %s22
    %s27 = sphi 0, %s23
    %s28 = sphi 0, %s24
    %s50 = sphi 0, %s52
    %s53 = sphi 0, %s50
    %s54 = sphi 0, %s53
    %s70 = sphi 0, %s54
    %s80 = sphi 0, %s82
    %s83 = sphi 0, %s80
    %s84 = sphi 0, %s83
    %s100 = sphi 0, %s84
    %s110 = sphi 0, %s112
    %s113 = sphi 0, %s110
    %s114 = sphi 0, %s113
    %s130 = sphi 0, %s114
    %s140 = sphi 0, %s142
    %s143 = sphi 0, %s140
    %s144 = sphi 0, %s143
    %s160 = sphi 0, %s144
    %s170 = sphi 0, %s172
    %s173 = sphi 0, %s170
    %s174 = sphi 0, %s173
    %s190 = sphi 0, %s174
  $region4: #{decoder_forward.20} parent=0 // loop_header_branch
    %13 = sbr.rel (%p11) target = $region8
  $region5: #{decoder_forward.20} parent=0 // loop_body
    %s15 = ssub.s32 %s10, 1
    %s16 = ssub.s32 %s10, 2
    %s29 = sadd.s32 1, %s20
    %p30 = scmp.ge.s32.totalorder %s29, 1
    %s31 = scalar_select %p30, 0, %s29
    %s32 = sadd.s32 1, %s19
    %s33 = scalar_select %p30, %s32, %s19
    %p34 = scmp.ge.s32.totalorder %s33, 1
    %s35 = scalar_select %p34, 0, %s33
    %s36 = sadd.s32 1, %s18
    %s37 = scalar_select %p34, %s36, %s18
    %p38 = scmp.ge.s32.totalorder %s37, 1
    %s39 = scalar_select %p38, 0, %s37
    %s40 = sadd.s32 1, %s17
    %s41 = scalar_select %p38, %s40, %s17
    %p42 = scmp.ge.s32.totalorder %s41, 2
    %s43 = scalar_select %p42, 0, %s41
    %s44 = ssub.s32 %s17, %s43
    %s45 = ssub.s32 %s19, %s35
    %s46 = sor.u32 %s44, %s45
    %s47 = ssub.s32 %s18, %s39
    %s48 = sor.u32 %s46, %s47
    %p49 = scmp.eq.s32.totalorder %s48, 0
    %s51 = sadd.s32 %s50, 1
    %s52 = scalar_select %p49, %s50, %s51
    %p55 = pneg %p49
    %p56 = scmp.eq.s32.totalorder %s10, 1
    %p57 = por %p55, %p56
    %p58 = scmp.ne.s32.totalorder %s50, %s53
    %p59 = scmp.eq.s32.totalorder %s10, 0
    %p60 = por %p58, %p59
    %p61 = scmp.ne.s32.totalorder %s50, %s53
    %p62 = scmp.eq.s32.totalorder %s15, 1
    %p63 = por %p61, %p62
    %p64 = scmp.ne.s32.totalorder %s53, %s54
    %p65 = scmp.eq.s32.totalorder %s15, 0
    %p66 = por %p64, %p65
    %p67 = scmp.ne.s32.totalorder %s53, %s54
    %p68 = scmp.eq.s32.totalorder %s16, 1
    %p69 = por %p67, %p68
    %p71 = scmp.ne.s32.totalorder %s54, %s70
    %p72 = scmp.eq.s32.totalorder %s16, 0
    %p73 = por %p71, %p72
    %s74 = ssub.s32 %s17, %s43
    %s75 = ssub.s32 %s20, %s31
    %s76 = sor.u32 %s74, %s75
    %s77 = ssub.s32 %s18, %s39
    %s78 = sor.u32 %s76, %s77
    %p79 = scmp.eq.s32.totalorder %s78, 0
    %s81 = sadd.s32 %s80, 1
    %s82 = scalar_select %p79, %s80, %s81
    %p85 = pneg %p79
    %p86 = scmp.eq.s32.totalorder %s10, 1
    %p87 = por %p85, %p86
    %p88 = scmp.ne.s32.totalorder %s80, %s83
    %p89 = scmp.eq.s32.totalorder %s10, 0
    %p90 = por %p88, %p89
    %p91 = scmp.ne.s32.totalorder %s80, %s83
    %p92 = scmp.eq.s32.totalorder %s15, 1
    %p93 = por %p91, %p92
    %p94 = scmp.ne.s32.totalorder %s83, %s84
    %p95 = scmp.eq.s32.totalorder %s15, 0
    %p96 = por %p94, %p95
    %p97 = scmp.ne.s32.totalorder %s83, %s84
    %p98 = scmp.eq.s32.totalorder %s16, 1
    %p99 = por %p97, %p98
    %p101 = scmp.ne.s32.totalorder %s84, %s100
    %p102 = scmp.eq.s32.totalorder %s16, 0
    %p103 = por %p101, %p102
    %s104 = ssub.s32 %s17, %s43
    %s105 = ssub.s32 %s20, %s31
    %s106 = sor.u32 %s104, %s105
    %s107 = ssub.s32 %s18, %s39
    %s108 = sor.u32 %s106, %s107
    %p109 = scmp.eq.s32.totalorder %s108, 0
    %s111 = sadd.s32 %s110, 1
    %s112 = scalar_select %p109, %s110, %s111
    %p115 = pneg %p109
    %p116 = scmp.eq.s32.totalorder %s10, 1
    %p117 = por %p115, %p116
    %p118 = scmp.ne.s32.totalorder %s110, %s113
    %p119 = scmp.eq.s32.totalorder %s10, 0
    %p120 = por %p118, %p119
    %p121 = scmp.ne.s32.totalorder %s110, %s113
    %p122 = scmp.eq.s32.totalorder %s15, 1
    %p123 = por %p121, %p122
    %p124 = scmp.ne.s32.totalorder %s113, %s114
    %p125 = scmp.eq.s32.totalorder %s15, 0
    %p126 = por %p124, %p125
    %p127 = scmp.ne.s32.totalorder %s113, %s114
    %p128 = scmp.eq.s32.totalorder %s16, 1
    %p129 = por %p127, %p128
    %p131 = scmp.ne.s32.totalorder %s114, %s130
    %p132 = scmp.eq.s32.totalorder %s16, 0
    %p133 = por %p131, %p132
    %s134 = ssub.s32 %s17, %s43
    %s135 = ssub.s32 %s19, %s35
    %s136 = sor.u32 %s134, %s135
    %s137 = ssub.s32 %s20, %s31
    %s138 = sor.u32 %s136, %s137
    %p139 = scmp.eq.s32.totalorder %s138, 0
    %s141 = sadd.s32 %s140, 1
    %s142 = scalar_select %p139, %s140, %s141
    %p145 = pneg %p139
    %p146 = scmp.eq.s32.totalorder %s10, 1
    %p147 = por %p145, %p146
    %p148 = scmp.ne.s32.totalorder %s140, %s143
    %p149 = scmp.eq.s32.totalorder %s10, 0
    %p150 = por %p148, %p149
    %p151 = scmp.ne.s32.totalorder %s140, %s143
    %p152 = scmp.eq.s32.totalorder %s15, 1
    %p153 = por %p151, %p152
    %p154 = scmp.ne.s32.totalorder %s143, %s144
    %p155 = scmp.eq.s32.totalorder %s15, 0
    %p156 = por %p154, %p155
    %p157 = scmp.ne.s32.totalorder %s143, %s144
    %p158 = scmp.eq.s32.totalorder %s16, 1
    %p159 = por %p157, %p158
    %p161 = scmp.ne.s32.totalorder %s144, %s160
    %p162 = scmp.eq.s32.totalorder %s16, 0
    %p163 = por %p161, %p162
    %s164 = ssub.s32 %s17, %s43
    %s165 = ssub.s32 %s19, %s35
    %s166 = sor.u32 %s164, %s165
    %s167 = ssub.s32 %s18, %s39
    %s168 = sor.u32 %s166, %s167
    %p169 = scmp.eq.s32.totalorder %s168, 0
    %s171 = sadd.s32 %s170, 1
    %s172 = scalar_select %p169, %s170, %s171
    %p175 = pneg %p169
    %p176 = scmp.eq.s32.totalorder %s10, 1
    %p177 = por %p175, %p176
    %p178 = scmp.ne.s32.totalorder %s170, %s173
    %p179 = scmp.eq.s32.totalorder %s10, 0
    %p180 = por %p178, %p179
    %p181 = scmp.ne.s32.totalorder %s170, %s173
    %p182 = scmp.eq.s32.totalorder %s15, 1
    %p183 = por %p181, %p182
    %p184 = scmp.ne.s32.totalorder %s173, %s174
    %p185 = scmp.eq.s32.totalorder %s15, 0
    %p186 = por %p184, %p185
    %p187 = scmp.ne.s32.totalorder %s173, %s174
    %p188 = scmp.eq.s32.totalorder %s16, 1
    %p189 = por %p187, %p188
    %p191 = scmp.ne.s32.totalorder %s174, %s190
    %p192 = scmp.eq.s32.totalorder %s16, 0
    %p193 = por %p191, %p192
    %p194 = scmp.le.s32.totalorder 1, %s10
    %p195 = scmp.lt.s32.totalorder %s10, 3
    %p196 = pnand %p194, %p195
    %p197 = pneg %p196
    // Predicated region
    $region9: #{decoder_forward.20} parent=5 // pred_check
      _
    $region10: #{decoder_forward.20} parent=5 // pred_check_branch
      %199 = sbr.rel (%p196) target = $region12
    $region11: #{decoder_forward.20} parent=5 // pred_region
      %s200 = ssub.s32 %s10, 1
    $region12: #{decoder_forward.20} parent=5 // pred_fallthru
      _
    %p201 = scmp.lt.s32.totalorder %s10, 2
    // Predicated region
    $region13: #{decoder_forward.20} parent=5 // pred_check
      %p202 = pneg %p201
    $region14: #{decoder_forward.20} parent=5 // pred_check_branch
      %204 = sbr.rel (%p202) target = $region16
    $region15: #{decoder_forward.20} parent=5 // pred_region
      // Predicated region
      $region17: #{decoder_forward.20} parent=15 // pred_check
        %p205 = pneg %p60
      $region18: #{decoder_forward.20} parent=15 // pred_check_branch
        %207 = sbr.rel (%p205) target = $region20
      $region19: #{decoder_forward.20} parent=15 // pred_region
        %p208 = scmp.lt.s32.totalorder %s17, 1
        %s209 = scalar_select %p208, %s17, 1
        %p210 = scmp.lt.s32.totalorder %s19, 0
        %s211 = scalar_select %p210, %s19, 0
        %p212 = scmp.lt.s32.totalorder %s18, 0
        %s213 = scalar_select %p212, %s18, 0
        %s214 = sadd.s32 %s213, %s211
        %s215 = sadd.s32 %s214, %s209
        %s216 = smul.addr %s215, 8
        %s217 = scalar_lea.vmem %s0, %s216
      $region20: #{decoder_forward.20} parent=15 // pred_fallthru
        _
      // Predicated region
      $region21: #{decoder_forward.20} parent=15 // pred_check
        %p218 = pneg %p90
      $region22: #{decoder_forward.20} parent=15 // pred_check_branch
        %220 = sbr.rel (%p218) target = $region24
      $region23: #{decoder_forward.20} parent=15 // pred_region
        %p221 = scmp.lt.s32.totalorder %s17, 1
        %s222 = scalar_select %p221, %s17, 1
        %p223 = scmp.lt.s32.totalorder %s20, 0
        %s224 = scalar_select %p223, %s20, 0
        %p225 = scmp.lt.s32.totalorder %s18, 0
        %s226 = scalar_select %p225, %s18, 0
        %s227 = sadd.s32 %s226, %s224
        %s228 = sadd.s32 %s227, %s222
        %s229 = smul.addr %s228, 8
        %s230 = scalar_lea.vmem %s1, %s229
      $region24: #{decoder_forward.20} parent=15 // pred_fallthru
        _
      // Predicated region
      $region25: #{decoder_forward.20} parent=15 // pred_check
        %p231 = pneg %p120
      $region26: #{decoder_forward.20} parent=15 // pred_check_branch
        %233 = sbr.rel (%p231) target = $region28
      $region27: #{decoder_forward.20} parent=15 // pred_region
        %p234 = scmp.lt.s32.totalorder %s17, 1
        %s235 = scalar_select %p234, %s17, 1
        %p236 = scmp.lt.s32.totalorder %s20, 0
        %s237 = scalar_select %p236, %s20, 0
        %p238 = scmp.lt.s32.totalorder %s18, 0
        %s239 = scalar_select %p238, %s18, 0
        %s240 = sadd.s32 %s239, %s237
        %s241 = sadd.s32 %s240, %s235
        %s242 = smul.addr %s241, 8
        %s243 = scalar_lea.vmem %s2, %s242
      $region28: #{decoder_forward.20} parent=15 // pred_fallthru
        _
      // Predicated region
      $region29: #{decoder_forward.20} parent=15 // pred_check
        %p244 = pneg %p150
      $region30: #{decoder_forward.20} parent=15 // pred_check_branch
        %246 = sbr.rel (%p244) target = $region32
      $region31: #{decoder_forward.20} parent=15 // pred_region
        %p247 = scmp.lt.s32.totalorder %s17, 1
        %s248 = scalar_select %p247, %s17, 1
        %p249 = scmp.lt.s32.totalorder %s19, 0
        %s250 = scalar_select %p249, %s19, 0
        %p251 = scmp.lt.s32.totalorder %s20, 0
        %s252 = scalar_select %p251, %s20, 0
        %s253 = sadd.s32 %s252, %s250
        %s254 = sadd.s32 %s253, %s248
        %s255 = smul.addr %s254, 2
        %s256 = scalar_lea.vmem %s3, %s255
      $region32: #{decoder_forward.20} parent=15 // pred_fallthru
        _
    $region16: #{decoder_forward.20} parent=5 // pred_fallthru
      _
    %p257 = scmp.le.s32.totalorder 1, %s10
    %p258 = scmp.lt.s32.totalorder %s10, 3
    %p259 = pnand %p257, %p258
    %p260 = pneg %p259
    // Predicated region
    $region33: #{decoder_forward.20} parent=5 // pred_check
      _
    $region34: #{decoder_forward.20} parent=5 // pred_check_branch
      %262 = sbr.rel (%p259) target = $region36
    $region35: #{decoder_forward.20} parent=5 // pred_region
      %s263 = ssub.s32 %s10, 1
      %p264 = scmp.lt.s32.totalorder %s21, 1
      %s265 = scalar_select %p264, %s21, 1
      %p266 = scmp.lt.s32.totalorder %s23, 0
      %s267 = scalar_select %p266, %s23, 0
      %p268 = scmp.lt.s32.totalorder %s22, 0
      %s269 = scalar_select %p268, %s22, 0
      %s270 = sadd.s32 %s269, %s267
      %s271 = sadd.s32 %s270, %s265
      %s272 = smul.addr %s271, 8
      %s273 = scalar_lea.vmem %s0, %s272
      %p274 = pneg %p66
      %p275 = pneg %p63
      %p276 = scmp.lt.s32.totalorder %s21, 1
      %s277 = scalar_select %p276, %s21, 1
      %p278 = scmp.lt.s32.totalorder %s24, 0
      %s279 = scalar_select %p278, %s24, 0
      %p280 = scmp.lt.s32.totalorder %s22, 0
      %s281 = scalar_select %p280, %s22, 0
      %s282 = sadd.s32 %s281, %s279
      %s283 = sadd.s32 %s282, %s277
      %s284 = smul.addr %s283, 8
      %s285 = scalar_lea.vmem %s1, %s284
      %p286 = pneg %p96
      %p287 = pneg %p93
      %p288 = scmp.lt.s32.totalorder %s21, 1
      %s289 = scalar_select %p288, %s21, 1
      %p290 = scmp.lt.s32.totalorder %s24, 0
      %s291 = scalar_select %p290, %s24, 0
      %p292 = scmp.lt.s32.totalorder %s22, 0
      %s293 = scalar_select %p292, %s22, 0
      %s294 = sadd.s32 %s293, %s291
      %s295 = sadd.s32 %s294, %s289
      %s296 = smul.addr %s295, 8
      %s297 = scalar_lea.vmem %s2, %s296
      %p298 = pneg %p126
      %p299 = pneg %p123
      %p300 = scmp.lt.s32.totalorder %s21, 1
      %s301 = scalar_select %p300, %s21, 1
      %p302 = scmp.lt.s32.totalorder %s23, 0
      %s303 = scalar_select %p302, %s23, 0
      %p304 = scmp.lt.s32.totalorder %s24, 0
      %s305 = scalar_select %p304, %s24, 0
      %s306 = sadd.s32 %s305, %s303
      %s307 = sadd.s32 %s306, %s301
      %s308 = smul.addr %s307, 2
      %s309 = scalar_lea.vmem %s3, %s308
      %p310 = pneg %p156
      %p311 = pneg %p153
      %p312 = pneg %p186
      %p313 = pneg %p183
      %p314 = scmp.lt.s32.totalorder %s21, 1
      %s315 = scalar_select %p314, %s21, 1
      %p316 = scmp.lt.s32.totalorder %s23, 0
      %s317 = scalar_select %p316, %s23, 0
      %p318 = scmp.lt.s32.totalorder %s22, 0
      %s319 = scalar_select %p318, %s22, 0
      %s320 = sadd.s32 %s319, %s317
      %s321 = sadd.s32 %s320, %s315
      %s322 = smul.addr %s321, 8
      %s323 = scalar_lea.vmem %s4, %s322
      %p324 = scmp.lt.s32.totalorder %s21, 1
      %s325 = scalar_select %p324, %s21, 1
      %p326 = scmp.lt.s32.totalorder %s23, 0
      %s327 = scalar_select %p326, %s23, 0
      %p328 = scmp.lt.s32.totalorder %s22, 0
      %s329 = scalar_select %p328, %s22, 0
      %s330 = sadd.s32 %s329, %s327
      %s331 = sadd.s32 %s330, %s325
      %s332 = smul.addr %s331, 8
      %s333 = scalar_lea.vmem %s0, %s332
      %p334 = scmp.lt.s32.totalorder %s21, 1
      %s335 = scalar_select %p334, %s21, 1
      %p336 = scmp.lt.s32.totalorder %s24, 0
      %s337 = scalar_select %p336, %s24, 0
      %p338 = scmp.lt.s32.totalorder %s22, 0
      %s339 = scalar_select %p338, %s22, 0
      %s340 = sadd.s32 %s339, %s337
      %s341 = sadd.s32 %s340, %s335
      %s342 = smul.addr %s341, 8
      %s343 = scalar_lea.vmem %s1, %s342
      %p344 = scmp.lt.s32.totalorder %s21, 1
      %s345 = scalar_select %p344, %s21, 1
      %p346 = scmp.lt.s32.totalorder %s24, 0
      %s347 = scalar_select %p346, %s24, 0
      %p348 = scmp.lt.s32.totalorder %s22, 0
      %s349 = scalar_select %p348, %s22, 0
      %s350 = sadd.s32 %s349, %s347
      %s351 = sadd.s32 %s350, %s345
      %s352 = smul.addr %s351, 8
      %s353 = scalar_lea.vmem %s2, %s352
      %p354 = scmp.lt.s32.totalorder %s21, 1
      %s355 = scalar_select %p354, %s21, 1
      %p356 = scmp.lt.s32.totalorder %s23, 0
      %s357 = scalar_select %p356, %s23, 0
      %p358 = scmp.lt.s32.totalorder %s24, 0
      %s359 = scalar_select %p358, %s24, 0
      %s360 = sadd.s32 %s359, %s357
      %s361 = sadd.s32 %s360, %s355
      %s362 = smul.addr %s361, 2
      %s363 = scalar_lea.vmem %s3, %s362
      %p364 = scmp.lt.s32.totalorder %s21, 1
      %s365 = scalar_select %p364, %s21, 1
      %p366 = scmp.lt.s32.totalorder %s23, 0
      %s367 = scalar_select %p366, %s23, 0
      %p368 = scmp.lt.s32.totalorder %s22, 0
      %s369 = scalar_select %p368, %s22, 0
      %s370 = sadd.s32 %s369, %s367
      %s371 = sadd.s32 %s370, %s365
      %s372 = smul.addr %s371, 8
      %s373 = scalar_lea.vmem %s4, %s372
      %p374 = scmp.eq.s32.totalorder %s24, 0
      // Predicated region
      $region37: #{decoder_forward.20} parent=35 // pred_check
        %p375 = pneg %p374
      $region38: #{decoder_forward.20} parent=35 // pred_check_branch
        %377 = sbr.rel (%p375) target = $region40
      $region39: #{decoder_forward.20} parent=35 // pred_region
        %vm378 = vcmask 7168
        %379 = vst.msk [vmem:[#allocation2] sm:$0xff] %vm378, -inf
        %380 = vst.msk [vmem:[#allocation2 + $0x8] sm:$0xff] %vm378, -inf
        %381 = vst.msk [vmem:[#allocation2 + $0x10] sm:$0xff] %vm378, -inf
        %382 = vst.msk [vmem:[#allocation2 + $0x18] sm:$0xff] %vm378, -inf
        %383 = vst.msk [vmem:[#allocation3] sm:$0xff] %vm378, 0.0
        %384 = vst.msk [vmem:[#allocation3 + $0x8] sm:$0xff] %vm378, 0.0
        %385 = vst.msk [vmem:[#allocation3 + $0x10] sm:$0xff] %vm378, 0.0
        %386 = vst.msk [vmem:[#allocation3 + $0x18] sm:$0xff] %vm378, 0.0
        %vm387 = vcmask 64512
        %388 = vst.msk [vmem:[#allocation4] sm:$0xff] %vm387, 0.0
        %389 = vst.msk [vmem:[#allocation4 + $0x8] sm:$0xff] %vm387, 0.0
        %390 = vst.msk [vmem:[#allocation4 + $0x10] sm:$0xff] %vm387, 0.0
        %391 = vst.msk [vmem:[#allocation4 + $0x18] sm:$0xff] %vm387, 0.0
      $region40: #{decoder_forward.20} parent=35 // pred_fallthru
        _
      %v392 = vld [vmem:[%s333] sm:$0xff]
      %v393 = vld [vmem:[%s343] sm:$0xff]
      %v394 = vld [vmem:[%s353] sm:$0xff]
      %v395 = vld [vmem:[%s363] sm:$0x3]
      %v396 = vunpack.c.0.s8 %v395
      %vm397 = vcmp.eq.s32.totalorder %v396, 0
      %vm398 = vcmask 64512
      %v400 = vsel %vm398, %v392, 0
      %v403 = vsel %vm398, %v393, 0
      %405 = vmatprep.subr.mxu0 0.0
      %406 = vmatpush1.xpose.msra.mxu0 %v403
      %407 = vmatprep.subr.mxu0 0.0
      %408 = vmatpush1.xpose.msra.mxu0 0.0
      %409 = vmatprep.subr.mxu0 0.0
      %410 = vmatpush1.xpose.msra.mxu0 0.0
      %411 = vmatprep.subr.mxu0 0.0
      %412 = vmatpush1.xpose.msra.mxu0 0.0
      %413 = vmatprep.subr.mxu0 0.0
      %414 = vmatpush1.xpose.msra.mxu0 0.0
      %415 = vmatprep.subr.mxu0 0.0
      %416 = vmatpush1.xpose.msra.mxu0 0.0
      %417 = vmatprep.subr.mxu0 0.0
      %418 = vmatpush1.xpose.msra.mxu0 0.0
      %419 = vmatprep.subr.mxu0 0.0
      %420 = vmatpush1.xpose.msra.mxu0 0.0
      %421 = vmatprep.subr.mxu0 0.0
      %422 = vmatpush1.xpose.msra.mxu0 0.0
      %423 = vmatprep.subr.mxu0 0.0
      %424 = vmatpush1.xpose.msra.mxu0 0.0
      %425 = vmatprep.subr.mxu0 0.0
      %426 = vmatpush1.xpose.msra.mxu0 0.0
      %427 = vmatprep.subr.mxu0 0.0
      %428 = vmatpush1.xpose.msra.mxu0 0.0
      %429 = vmatprep.subr.mxu0 0.0
      %430 = vmatpush1.xpose.msra.mxu0 0.0
      %431 = vmatprep.subr.mxu0 0.0
      %432 = vmatpush1.xpose.msra.mxu0 0.0
      %433 = vmatprep.subr.mxu0 0.0
      %434 = vmatpush1.xpose.msra.mxu0 0.0
      %435 = vmatprep.subr.mxu0 0.0
      %436 = vmatpush1.xpose.msra.mxu0 0.0
      %437 = vmatprep.subr.mxu0 0.0
      %438 = vmatpush1.xpose.msra.mxu0 0.0
      %439 = vmatprep.subr.mxu0 0.0
      %440 = vmatpush1.xpose.msra.mxu0 0.0
      %441 = vmatprep.subr.mxu0 0.0
      %442 = vmatpush1.xpose.msra.mxu0 0.0
      %443 = vmatprep.subr.mxu0 0.0
      %444 = vmatpush1.xpose.msra.mxu0 0.0
      %445 = vmatprep.subr.mxu0 0.0
      %446 = vmatpush1.xpose.msra.mxu0 0.0
      %447 = vmatprep.subr.mxu0 0.0
      %448 = vmatpush1.xpose.msra.mxu0 0.0
      %449 = vmatprep.subr.mxu0 0.0
      %450 = vmatpush1.xpose.msra.mxu0 0.0
      %451 = vmatprep.subr.mxu0 0.0
      %452 = vmatpush1.xpose.msra.mxu0 0.0
      %453 = vmatprep.subr.mxu0 0.0
      %454 = vmatpush1.xpose.msra.mxu0 0.0
      %455 = vmatprep.subr.mxu0 0.0
      %456 = vmatpush1.xpose.msra.mxu0 0.0
      %457 = vmatprep.subr.mxu0 0.0
      %458 = vmatpush1.xpose.msra.mxu0 0.0
      %459 = vmatprep.subr.mxu0 0.0
      %460 = vmatpush1.xpose.msra.mxu0 0.0
      %461 = vmatprep.subr.mxu0 0.0
      %462 = vmatpush1.xpose.msra.mxu0 0.0
      %463 = vmatprep.subr.mxu0 0.0
      %464 = vmatpush1.xpose.msra.mxu0 0.0
      %465 = vmatprep.subr.mxu0 0.0
      %466 = vmatpush1.xpose.msra.mxu0 0.0
      %467 = vmatprep.subr.mxu0 0.0
      %468 = vmatpush1.xpose.msra.mxu0 0.0
      %469 = vmatprep.mubr.f32.mxu0 0.0
      %470 = vmatmul.mubr.f32.gmra.mrb[0].mxu0 %v400
      %v471 = vpop.f32.mrb[0].mxu0
      %v472 = vadd.f32 0.0, %v471
      %v473 = vpop.f32.mrb[0].mxu0
      %474 = vdwg.mxu0
      %v475 = vsel %vm397, -1e+09, %v472
      %v476 = vld [vmem:[#allocation2] sm:$0xff]
      %v477 = vsel %vm398, %v475, -inf
      %478 = vmax.xlane.f32.xlu0 %v477
      %v479 = vpop.xlane.xlu0 %478
      %v480 = vmax.f32 %v476, %v479
      %v481 = vsub.f32 %v476, %v480
      %v482 = vmul.f32 %v481, 1.442695
      %v483 = vpow.pop %v482
      %485 = vset.pattern.permute.xlu0 0
      %486 = vperm.xlu0 %485, %v480
      %v487 = vpop.permute.xlu0 %486
      %v489 = vsub.f32 %v475, %v487
      %v490 = vmul.f32 %v489, 1.442695
      %v491 = vpow.pop %v490
      %v492 = vld [vmem:[#allocation3] sm:$0xff]
      %v493 = vmul.f32 %v483, %v492
      %v494 = vsel %vm398, %v491, 0.0
      %495 = vadd.xlane.f32.xlu0 %v494
      %v496 = vpop.xlane.xlu0 %495
      %v497 = vadd.f32 %v493, %v496
      %vm498 = vcmask 7168
      %499 = vst.msk [vmem:[#allocation3] sm:$0xff] %vm498, %v497
      %v500 = vld [vmem:[#allocation4] sm:$0xff]
      %502 = vset.pattern.permute.xlu0 0
      %503 = vperm.xlu0 %502, %v483
      %v504 = vpop.permute.xlu0 %503
      %v506 = vmul.f32 %v504, %v500
      %v508 = vsel %vm398, %v491, 0
      %510 = vmatprep.subr.mxu0 0.0
      %511 = vmatpush1.msra.mxu0 %v394
      %512 = vmatprep.subr.mxu0 0.0
      %513 = vmatpush1.msra.mxu0 0.0
      %514 = vmatprep.subr.mxu0 0.0
      %515 = vmatpush1.msra.mxu0 0.0
      %516 = vmatprep.subr.mxu0 0.0
      %517 = vmatpush1.msra.mxu0 0.0
      %518 = vmatprep.subr.mxu0 0.0
      %519 = vmatpush1.msra.mxu0 0.0
      %520 = vmatprep.subr.mxu0 0.0
      %521 = vmatpush1.msra.mxu0 0.0
      %522 = vmatprep.subr.mxu0 0.0
      %523 = vmatpush1.msra.mxu0 0.0
      %524 = vmatprep.subr.mxu0 0.0
      %525 = vmatpush1.msra.mxu0 0.0
      %526 = vmatprep.subr.mxu0 0.0
      %527 = vmatpush1.msra.mxu0 0.0
      %528 = vmatprep.subr.mxu0 0.0
      %529 = vmatpush1.msra.mxu0 0.0
      %530 = vmatprep.subr.mxu0 0.0
      %531 = vmatpush1.msra.mxu0 0.0
      %532 = vmatprep.subr.mxu0 0.0
      %533 = vmatpush1.msra.mxu0 0.0
      %534 = vmatprep.subr.mxu0 0.0
      %535 = vmatpush1.msra.mxu0 0.0
      %536 = vmatprep.subr.mxu0 0.0
      %537 = vmatpush1.msra.mxu0 0.0
      %538 = vmatprep.subr.mxu0 0.0
      %539 = vmatpush1.msra.mxu0 0.0
      %540 = vmatprep.subr.mxu0 0.0
      %541 = vmatpush1.msra.mxu0 0.0
      %542 = vmatprep.subr.mxu0 0.0
      %543 = vmatpush1.msra.mxu0 0.0
      %544 = vmatprep.subr.mxu0 0.0
      %545 = vmatpush1.msra.mxu0 0.0
      %546 = vmatprep.subr.mxu0 0.0
      %547 = vmatpush1.msra.mxu0 0.0
      %548 = vmatprep.subr.mxu0 0.0
      %549 = vmatpush1.msra.mxu0 0.0
      %550 = vmatprep.subr.mxu0 0.0
      %551 = vmatpush1.msra.mxu0 0.0
      %552 = vmatprep.subr.mxu0 0.0
      %553 = vmatpush1.msra.mxu0 0.0
      %554 = vmatprep.subr.mxu0 0.0
      %555 = vmatpush1.msra.mxu0 0.0
      %556 = vmatprep.subr.mxu0 0.0
      %557 = vmatpush1.msra.mxu0 0.0
      %558 = vmatprep.subr.mxu0 0.0
      %559 = vmatpush1.msra.mxu0 0.0
      %560 = vmatprep.subr.mxu0 0.0
      %561 = vmatpush1.msra.mxu0 0.0
      %562 = vmatprep.subr.mxu0 0.0
      %563 = vmatpush1.msra.mxu0 0.0
      %564 = vmatprep.subr.mxu0 0.0
      %565 = vmatpush1.msra.mxu0 0.0
      %566 = vmatprep.subr.mxu0 0.0
      %567 = vmatpush1.msra.mxu0 0.0
      %568 = vmatprep.subr.mxu0 0.0
      %569 = vmatpush1.msra.mxu0 0.0
      %570 = vmatprep.subr.mxu0 0.0
      %571 = vmatpush1.msra.mxu0 0.0
      %572 = vmatprep.subr.mxu0 0.0
      %573 = vmatpush1.msra.mxu0 0.0
      %574 = vmatprep.mubr.f32.mxu0 0.0
      %575 = vmatmul.mubr.f32.gmra.mrb[0].mxu0 %v508
      %v576 = vpop.f32.mrb[0].mxu0
      %v577 = vadd.f32 0.0, %v576
      %v578 = vpop.f32.mrb[0].mxu0
      %579 = vdwg.mxu0
      %v580 = vadd.f32 %v506, %v577
      %581 = vst.msk [vmem:[#allocation4] sm:$0xff] %vm398, %v580
      %582 = vst.msk [vmem:[#allocation2] sm:$0xff] %vm498, %v480
      %583 = vrot.lane.b32.xlu0 %v392, 120
      %v584 = vpop.permute.xlu0 %583
      %585 = vrot.lane.b32.xlu0 %v393, 120
      %v586 = vpop.permute.xlu0 %585
      %v587 = vsel %vm398, %v584, 0
      %v589 = vsel %vm398, %v586, 0
      %591 = vmatprep.subr.mxu0 0.0
      %592 = vmatpush1.xpose.msra.mxu0 %v589
      %593 = vmatprep.subr.mxu0 0.0
      %594 = vmatpush1.xpose.msra.mxu0 0.0
      %595 = vmatprep.subr.mxu0 0.0
      %596 = vmatpush1.xpose.msra.mxu0 0.0
      %597 = vmatprep.subr.mxu0 0.0
      %598 = vmatpush1.xpose.msra.mxu0 0.0
      %599 = vmatprep.subr.mxu0 0.0
      %600 = vmatpush1.xpose.msra.mxu0 0.0
      %601 = vmatprep.subr.mxu0 0.0
      %602 = vmatpush1.xpose.msra.mxu0 0.0
      %603 = vmatprep.subr.mxu0 0.0
      %604 = vmatpush1.xpose.msra.mxu0 0.0
      %605 = vmatprep.subr.mxu0 0.0
      %606 = vmatpush1.xpose.msra.mxu0 0.0
      %607 = vmatprep.subr.mxu0 0.0
      %608 = vmatpush1.xpose.msra.mxu0 0.0
      %609 = vmatprep.subr.mxu0 0.0
      %610 = vmatpush1.xpose.msra.mxu0 0.0
      %611 = vmatprep.subr.mxu0 0.0
      %612 = vmatpush1.xpose.msra.mxu0 0.0
      %613 = vmatprep.subr.mxu0 0.0
      %614 = vmatpush1.xpose.msra.mxu0 0.0
      %615 = vmatprep.subr.mxu0 0.0
      %616 = vmatpush1.xpose.msra.mxu0 0.0
      %617 = vmatprep.subr.mxu0 0.0
      %618 = vmatpush1.xpose.msra.mxu0 0.0
      %619 = vmatprep.subr.mxu0 0.0
      %620 = vmatpush1.xpose.msra.mxu0 0.0
      %621 = vmatprep.subr.mxu0 0.0
      %622 = vmatpush1.xpose.msra.mxu0 0.0
      %623 = vmatprep.subr.mxu0 0.0
      %624 = vmatpush1.xpose.msra.mxu0 0.0
      %625 = vmatprep.subr.mxu0 0.0
      %626 = vmatpush1.xpose.msra.mxu0 0.0
      %627 = vmatprep.subr.mxu0 0.0
      %628 = vmatpush1.xpose.msra.mxu0 0.0
      %629 = vmatprep.subr.mxu0 0.0
      %630 = vmatpush1.xpose.msra.mxu0 0.0
      %631 = vmatprep.subr.mxu0 0.0
      %632 = vmatpush1.xpose.msra.mxu0 0.0
      %633 = vmatprep.subr.mxu0 0.0
      %634 = vmatpush1.xpose.msra.mxu0 0.0
      %635 = vmatprep.subr.mxu0 0.0
      %636 = vmatpush1.xpose.msra.mxu0 0.0
      %637 = vmatprep.subr.mxu0 0.0
      %638 = vmatpush1.xpose.msra.mxu0 0.0
      %639 = vmatprep.subr.mxu0 0.0
      %640 = vmatpush1.xpose.msra.mxu0 0.0
      %641 = vmatprep.subr.mxu0 0.0
      %642 = vmatpush1.xpose.msra.mxu0 0.0
      %643 = vmatprep.subr.mxu0 0.0
      %644 = vmatpush1.xpose.msra.mxu0 0.0
      %645 = vmatprep.subr.mxu0 0.0
      %646 = vmatpush1.xpose.msra.mxu0 0.0
      %647 = vmatprep.subr.mxu0 0.0
      %648 = vmatpush1.xpose.msra.mxu0 0.0
      %649 = vmatprep.subr.mxu0 0.0
      %650 = vmatpush1.xpose.msra.mxu0 0.0
      %651 = vmatprep.subr.mxu0 0.0
      %652 = vmatpush1.xpose.msra.mxu0 0.0
      %653 = vmatprep.subr.mxu0 0.0
      %654 = vmatpush1.xpose.msra.mxu0 0.0
      %655 = vmatprep.mubr.f32.mxu0 0.0
      %656 = vmatmul.mubr.f32.gmra.mrb[0].mxu0 %v587
      %v657 = vpop.f32.mrb[0].mxu0
      %v658 = vadd.f32 0.0, %v657
      %v659 = vpop.f32.mrb[0].mxu0
      %660 = vdwg.mxu0
      %v661 = vsel %vm397, -1e+09, %v658
      %s662 = scalar_lea.vmem [#allocation2], 8
      %v663 = vld [vmem:[%s662] sm:$0xff]
      %v664 = vsel %vm398, %v661, -inf
      %665 = vmax.xlane.f32.xlu0 %v664
      %v666 = vpop.xlane.xlu0 %665
      %v667 = vmax.f32 %v663, %v666
      %v668 = vsub.f32 %v663, %v667
      %v669 = vmul.f32 %v668, 1.442695
      %v670 = vpow.pop %v669
      %672 = vset.pattern.permute.xlu0 0
      %673 = vperm.xlu0 %672, %v667
      %v674 = vpop.permute.xlu0 %673
      %v676 = vsub.f32 %v661, %v674
      %v677 = vmul.f32 %v676, 1.442695
      %v678 = vpow.pop %v677
      %s679 = scalar_lea.vmem [#allocation3], 8
      %v680 = vld [vmem:[%s679] sm:$0xff]
      %v681 = vmul.f32 %v670, %v680
      %v682 = vsel %vm398, %v678, 0.0
      %683 = vadd.xlane.f32.xlu0 %v682
      %v684 = vpop.xlane.xlu0 %683
      %v685 = vadd.f32 %v681, %v684
      %686 = vst.msk [vmem:[%s679] sm:$0xff] %vm498, %v685
      %s687 = scalar_lea.vmem [#allocation4], 8
      %v688 = vld [vmem:[%s687] sm:$0xff]
      %690 = vset.pattern.permute.xlu0 0
      %691 = vperm.xlu0 %690, %v670
      %v692 = vpop.permute.xlu0 %691
      %v694 = vmul.f32 %v692, %v688
      %696 = vrot.lane.b32.xlu0 %v394, 120
      %v697 = vpop.permute.xlu0 %696
      %v700 = vsel %vm398, %v678, 0
      %702 = vmatprep.subr.mxu0 0.0
      %703 = vmatpush1.msra.mxu0 %v697
      %704 = vmatprep.subr.mxu0 0.0
      %705 = vmatpush1.msra.mxu0 0.0
      %706 = vmatprep.subr.mxu0 0.0
      %707 = vmatpush1.msra.mxu0 0.0
      %708 = vmatprep.subr.mxu0 0.0
      %709 = vmatpush1.msra.mxu0 0.0
      %710 = vmatprep.subr.mxu0 0.0
      %711 = vmatpush1.msra.mxu0 0.0
      %712 = vmatprep.subr.mxu0 0.0
      %713 = vmatpush1.msra.mxu0 0.0
      %714 = vmatprep.subr.mxu0 0.0
      %715 = vmatpush1.msra.mxu0 0.0
      %716 = vmatprep.subr.mxu0 0.0
      %717 = vmatpush1.msra.mxu0 0.0
      %718 = vmatprep.subr.mxu0 0.0
      %719 = vmatpush1.msra.mxu0 0.0
      %720 = vmatprep.subr.mxu0 0.0
      %721 = vmatpush1.msra.mxu0 0.0
      %722 = vmatprep.subr.mxu0 0.0
      %723 = vmatpush1.msra.mxu0 0.0
      %724 = vmatprep.subr.mxu0 0.0
      %725 = vmatpush1.msra.mxu0 0.0
      %726 = vmatprep.subr.mxu0 0.0
      %727 = vmatpush1.msra.mxu0 0.0
      %728 = vmatprep.subr.mxu0 0.0
      %729 = vmatpush1.msra.mxu0 0.0
      %730 = vmatprep.subr.mxu0 0.0
      %731 = vmatpush1.msra.mxu0 0.0
      %732 = vmatprep.subr.mxu0 0.0
      %733 = vmatpush1.msra.mxu0 0.0
      %734 = vmatprep.subr.mxu0 0.0
      %735 = vmatpush1.msra.mxu0 0.0
      %736 = vmatprep.subr.mxu0 0.0
      %737 = vmatpush1.msra.mxu0 0.0
      %738 = vmatprep.subr.mxu0 0.0
      %739 = vmatpush1.msra.mxu0 0.0
      %740 = vmatprep.subr.mxu0 0.0
      %741 = vmatpush1.msra.mxu0 0.0
      %742 = vmatprep.subr.mxu0 0.0
      %743 = vmatpush1.msra.mxu0 0.0
      %744 = vmatprep.subr.mxu0 0.0
      %745 = vmatpush1.msra.mxu0 0.0
      %746 = vmatprep.subr.mxu0 0.0
      %747 = vmatpush1.msra.mxu0 0.0
      %748 = vmatprep.subr.mxu0 0.0
      %749 = vmatpush1.msra.mxu0 0.0
      %750 = vmatprep.subr.mxu0 0.0
      %751 = vmatpush1.msra.mxu0 0.0
      %752 = vmatprep.subr.mxu0 0.0
      %753 = vmatpush1.msra.mxu0 0.0
      %754 = vmatprep.subr.mxu0 0.0
      %755 = vmatpush1.msra.mxu0 0.0
      %756 = vmatprep.subr.mxu0 0.0
      %757 = vmatpush1.msra.mxu0 0.0
      %758 = vmatprep.subr.mxu0 0.0
      %759 = vmatpush1.msra.mxu0 0.0
      %760 = vmatprep.subr.mxu0 0.0
      %761 = vmatpush1.msra.mxu0 0.0
      %762 = vmatprep.subr.mxu0 0.0
      %763 = vmatpush1.msra.mxu0 0.0
      %764 = vmatprep.subr.mxu0 0.0
      %765 = vmatpush1.msra.mxu0 0.0
      %766 = vmatprep.mubr.f32.mxu0 0.0
      %767 = vmatmul.mubr.f32.gmra.mrb[0].mxu0 %v700
      %v768 = vpop.f32.mrb[0].mxu0
      %v769 = vadd.f32 0.0, %v768
      %v770 = vpop.f32.mrb[0].mxu0
      %771 = vdwg.mxu0
      %v772 = vadd.f32 %v694, %v769
      %773 = vst.msk [vmem:[%s687] sm:$0xff] %vm398, %v772
      %774 = vst.msk [vmem:[%s662] sm:$0xff] %vm498, %v667
      %775 = vrot.lane.b32.xlu0 %v392, 112
      %v776 = vpop.permute.xlu0 %775
      %777 = vrot.lane.b32.xlu0 %v393, 112
      %v778 = vpop.permute.xlu0 %777
      %v779 = vsel %vm398, %v776, 0
      %v781 = vsel %vm398, %v778, 0
      %783 = vmatprep.subr.mxu0 0.0
      %784 = vmatpush1.xpose.msra.mxu0 %v781
      %785 = vmatprep.subr.mxu0 0.0
      %786 = vmatpush1.xpose.msra.mxu0 0.0
      %787 = vmatprep.subr.mxu0 0.0
      %788 = vmatpush1.xpose.msra.mxu0 0.0
      %789 = vmatprep.subr.mxu0 0.0
      %790 = vmatpush1.xpose.msra.mxu0 0.0
      %791 = vmatprep.subr.mxu0 0.0
      %792 = vmatpush1.xpose.msra.mxu0 0.0
      %793 = vmatprep.subr.mxu0 0.0
      %794 = vmatpush1.xpose.msra.mxu0 0.0
      %795 = vmatprep.subr.mxu0 0.0
      %796 = vmatpush1.xpose.msra.mxu0 0.0
      %797 = vmatprep.subr.mxu0 0.0
      %798 = vmatpush1.xpose.msra.mxu0 0.0
      %799 = vmatprep.subr.mxu0 0.0
      %800 = vmatpush1.xpose.msra.mxu0 0.0
      %801 = vmatprep.subr.mxu0 0.0
      %802 = vmatpush1.xpose.msra.mxu0 0.0
      %803 = vmatprep.subr.mxu0 0.0
      %804 = vmatpush1.xpose.msra.mxu0 0.0
      %805 = vmatprep.subr.mxu0 0.0
      %806 = vmatpush1.xpose.msra.mxu0 0.0
      %807 = vmatprep.subr.mxu0 0.0
      %808 = vmatpush1.xpose.msra.mxu0 0.0
      %809 = vmatprep.subr.mxu0 0.0
      %810 = vmatpush1.xpose.msra.mxu0 0.0
      %811 = vmatprep.subr.mxu0 0.0
      %812 = vmatpush1.xpose.msra.mxu0 0.0
      %813 = vmatprep.subr.mxu0 0.0
      %814 = vmatpush1.xpose.msra.mxu0 0.0
      %815 = vmatprep.subr.mxu0 0.0
      %816 = vmatpush1.xpose.msra.mxu0 0.0
      %817 = vmatprep.subr.mxu0 0.0
      %818 = vmatpush1.xpose.msra.mxu0 0.0
      %819 = vmatprep.subr.mxu0 0.0
      %820 = vmatpush1.xpose.msra.mxu0 0.0
      %821 = vmatprep.subr.mxu0 0.0
      %822 = vmatpush1.xpose.msra.mxu0 0.0
      %823 = vmatprep.subr.mxu0 0.0
      %824 = vmatpush1.xpose.msra.mxu0 0.0
      %825 = vmatprep.subr.mxu0 0.0
      %826 = vmatpush1.xpose.msra.mxu0 0.0
      %827 = vmatprep.subr.mxu0 0.0
      %828 = vmatpush1.xpose.msra.mxu0 0.0
      %829 = vmatprep.subr.mxu0 0.0
      %830 = vmatpush1.xpose.msra.mxu0 0.0
      %831 = vmatprep.subr.mxu0 0.0
      %832 = vmatpush1.xpose.msra.mxu0 0.0
      %833 = vmatprep.subr.mxu0 0.0
      %834 = vmatpush1.xpose.msra.mxu0 0.0
      %835 = vmatprep.subr.mxu0 0.0
      %836 = vmatpush1.xpose.msra.mxu0 0.0
      %837 = vmatprep.subr.mxu0 0.0
      %838 = vmatpush1.xpose.msra.mxu0 0.0
      %839 = vmatprep.subr.mxu0 0.0
      %840 = vmatpush1.xpose.msra.mxu0 0.0
      %841 = vmatprep.subr.mxu0 0.0
      %842 = vmatpush1.xpose.msra.mxu0 0.0
      %843 = vmatprep.subr.mxu0 0.0
      %844 = vmatpush1.xpose.msra.mxu0 0.0
      %845 = vmatprep.subr.mxu0 0.0
      %846 = vmatpush1.xpose.msra.mxu0 0.0
      %847 = vmatprep.mubr.f32.mxu0 0.0
      %848 = vmatmul.mubr.f32.gmra.mrb[0].mxu0 %v779
      %v849 = vpop.f32.mrb[0].mxu0
      %v850 = vadd.f32 0.0, %v849
      %v851 = vpop.f32.mrb[0].mxu0
      %852 = vdwg.mxu0
      %v853 = vsel %vm397, -1e+09, %v850
      %s854 = scalar_lea.vmem [#allocation2], 16
      %v855 = vld [vmem:[%s854] sm:$0xff]
      %v856 = vsel %vm398, %v853, -inf
      %857 = vmax.xlane.f32.xlu0 %v856
      %v858 = vpop.xlane.xlu0 %857
      %v859 = vmax.f32 %v855, %v858
      %v860 = vsub.f32 %v855, %v859
      %v861 = vmul.f32 %v860, 1.442695
      %v862 = vpow.pop %v861
      %864 = vset.pattern.permute.xlu0 0
      %865 = vperm.xlu0 %864, %v859
      %v866 = vpop.permute.xlu0 %865
      %v868 = vsub.f32 %v853, %v866
      %v869 = vmul.f32 %v868, 1.442695
      %v870 = vpow.pop %v869
      %s871 = scalar_lea.vmem [#allocation3], 16
      %v872 = vld [vmem:[%s871] sm:$0xff]
      %v873 = vmul.f32 %v862, %v872
      %v874 = vsel %vm398, %v870, 0.0
      %875 = vadd.xlane.f32.xlu0 %v874
      %v876 = vpop.xlane.xlu0 %875
      %v877 = vadd.f32 %v873, %v876
      %878 = vst.msk [vmem:[%s871] sm:$0xff] %vm498, %v877
      %s879 = scalar_lea.vmem [#allocation4], 16
      %v880 = vld [vmem:[%s879] sm:$0xff]
      %882 = vset.pattern.permute.xlu0 0
      %883 = vperm.xlu0 %882, %v862
      %v884 = vpop.permute.xlu0 %883
      %v886 = vmul.f32 %v884, %v880
      %887 = vrot.lane.b32.xlu0 %v394, 112
      %v888 = vpop.permute.xlu0 %887
      %v891 = vsel %vm398, %v870, 0
      %893 = vmatprep.subr.mxu0 0.0
      %894 = vmatpush1.msra.mxu0 %v888
      %895 = vmatprep.subr.mxu0 0.0
      %896 = vmatpush1.msra.mxu0 0.0
      %897 = vmatprep.subr.mxu0 0.0
      %898 = vmatpush1.msra.mxu0 0.0
      %899 = vmatprep.subr.mxu0 0.0
      %900 = vmatpush1.msra.mxu0 0.0
      %901 = vmatprep.subr.mxu0 0.0
      %902 = vmatpush1.msra.mxu0 0.0
      %903 = vmatprep.subr.mxu0 0.0
      %904 = vmatpush1.msra.mxu0 0.0
      %905 = vmatprep.subr.mxu0 0.0
      %906 = vmatpush1.msra.mxu0 0.0
      %907 = vmatprep.subr.mxu0 0.0
      %908 = vmatpush1.msra.mxu0 0.0
      %909 = vmatprep.subr.mxu0 0.0
      %910 = vmatpush1.msra.mxu0 0.0
      %911 = vmatprep.subr.mxu0 0.0
      %912 = vmatpush1.msra.mxu0 0.0
      %913 = vmatprep.subr.mxu0 0.0
      %914 = vmatpush1.msra.mxu0 0.0
      %915 = vmatprep.subr.mxu0 0.0
      %916 = vmatpush1.msra.mxu0 0.0
      %917 = vmatprep.subr.mxu0 0.0
      %918 = vmatpush1.msra.mxu0 0.0
      %919 = vmatprep.subr.mxu0 0.0
      %920 = vmatpush1.msra.mxu0 0.0
      %921 = vmatprep.subr.mxu0 0.0
      %922 = vmatpush1.msra.mxu0 0.0
      %923 = vmatprep.subr.mxu0 0.0
      %924 = vmatpush1.msra.mxu0 0.0
      %925 = vmatprep.subr.mxu0 0.0
      %926 = vmatpush1.msra.mxu0 0.0
      %927 = vmatprep.subr.mxu0 0.0
      %928 = vmatpush1.msra.mxu0 0.0
      %929 = vmatprep.subr.mxu0 0.0
      %930 = vmatpush1.msra.mxu0 0.0
      %931 = vmatprep.subr.mxu0 0.0
      %932 = vmatpush1.msra.mxu0 0.0
      %933 = vmatprep.subr.mxu0 0.0
      %934 = vmatpush1.msra.mxu0 0.0
      %935 = vmatprep.subr.mxu0 0.0
      %936 = vmatpush1.msra.mxu0 0.0
      %937 = vmatprep.subr.mxu0 0.0
      %938 = vmatpush1.msra.mxu0 0.0
      %939 = vmatprep.subr.mxu0 0.0
      %940 = vmatpush1.msra.mxu0 0.0
      %941 = vmatprep.subr.mxu0 0.0
      %942 = vmatpush1.msra.mxu0 0.0
      %943 = vmatprep.subr.mxu0 0.0
      %944 = vmatpush1.msra.mxu0 0.0
      %945 = vmatprep.subr.mxu0 0.0
      %946 = vmatpush1.msra.mxu0 0.0
      %947 = vmatprep.subr.mxu0 0.0
      %948 = vmatpush1.msra.mxu0 0.0
      %949 = vmatprep.subr.mxu0 0.0
      %950 = vmatpush1.msra.mxu0 0.0
      %951 = vmatprep.subr.mxu0 0.0
      %952 = vmatpush1.msra.mxu0 0.0
      %953 = vmatprep.subr.mxu0 0.0
      %954 = vmatpush1.msra.mxu0 0.0
      %955 = vmatprep.subr.mxu0 0.0
      %956 = vmatpush1.msra.mxu0 0.0
      %957 = vmatprep.mubr.f32.mxu0 0.0
      %958 = vmatmul.mubr.f32.gmra.mrb[0].mxu0 %v891
      %v959 = vpop.f32.mrb[0].mxu0
      %v960 = vadd.f32 0.0, %v959
      %v961 = vpop.f32.mrb[0].mxu0
      %962 = vdwg.mxu0
      %v963 = vadd.f32 %v886, %v960
      %964 = vst.msk [vmem:[%s879] sm:$0xff] %vm398, %v963
      %965 = vst.msk [vmem:[%s854] sm:$0xff] %vm498, %v859
      %966 = vrot.lane.b32.xlu0 %v392, 104
      %v967 = vpop.permute.xlu0 %966
      %968 = vrot.lane.b32.xlu0 %v393, 104
      %v969 = vpop.permute.xlu0 %968
      %v970 = vsel %vm398, %v967, 0
      %v972 = vsel %vm398, %v969, 0
      %974 = vmatprep.subr.mxu0 0.0
      %975 = vmatpush1.xpose.msra.mxu0 %v972
      %976 = vmatprep.subr.mxu0 0.0
      %977 = vmatpush1.xpose.msra.mxu0 0.0
      %978 = vmatprep.subr.mxu0 0.0
      %979 = vmatpush1.xpose.msra.mxu0 0.0
      %980 = vmatprep.subr.mxu0 0.0
      %981 = vmatpush1.xpose.msra.mxu0 0.0
      %982 = vmatprep.subr.mxu0 0.0
      %983 = vmatpush1.xpose.msra.mxu0 0.0
      %984 = vmatprep.subr.mxu0 0.0
      %985 = vmatpush1.xpose.msra.mxu0 0.0
      %986 = vmatprep.subr.mxu0 0.0
      %987 = vmatpush1.xpose.msra.mxu0 0.0
      %988 = vmatprep.subr.mxu0 0.0
      %989 = vmatpush1.xpose.msra.mxu0 0.0
      %990 = vmatprep.subr.mxu0 0.0
      %991 = vmatpush1.xpose.msra.mxu0 0.0
      %992 = vmatprep.subr.mxu0 0.0
      %993 = vmatpush1.xpose.msra.mxu0 0.0
      %994 = vmatprep.subr.mxu0 0.0
      %995 = vmatpush1.xpose.msra.mxu0 0.0
      %996 = vmatprep.subr.mxu0 0.0
      %997 = vmatpush1.xpose.msra.mxu0 0.0
      %998 = vmatprep.subr.mxu0 0.0
      %999 = vmatpush1.xpose.msra.mxu0 0.0
      %1000 = vmatprep.subr.mxu0 0.0
      %1001 = vmatpush1.xpose.msra.mxu0 0.0
      %1002 = vmatprep.subr.mxu0 0.0
      %1003 = vmatpush1.xpose.msra.mxu0 0.0
      %1004 = vmatprep.subr.mxu0 0.0
      %1005 = vmatpush1.xpose.msra.mxu0 0.0
      %1006 = vmatprep.subr.mxu0 0.0
      %1007 = vmatpush1.xpose.msra.mxu0 0.0
      %1008 = vmatprep.subr.mxu0 0.0
      %1009 = vmatpush1.xpose.msra.mxu0 0.0
      %1010 = vmatprep.subr.mxu0 0.0
      %1011 = vmatpush1.xpose.msra.mxu0 0.0
      %1012 = vmatprep.subr.mxu0 0.0
      %1013 = vmatpush1.xpose.msra.mxu0 0.0
      %1014 = vmatprep.subr.mxu0 0.0
      %1015 = vmatpush1.xpose.msra.mxu0 0.0
      %1016 = vmatprep.subr.mxu0 0.0
      %1017 = vmatpush1.xpose.msra.mxu0 0.0
      %1018 = vmatprep.subr.mxu0 0.0
      %1019 = vmatpush1.xpose.msra.mxu0 0.0
      %1020 = vmatprep.subr.mxu0 0.0
      %1021 = vmatpush1.xpose.msra.mxu0 0.0
      %1022 = vmatprep.subr.mxu0 0.0
      %1023 = vmatpush1.xpose.msra.mxu0 0.0
      %1024 = vmatprep.subr.mxu0 0.0
      %1025 = vmatpush1.xpose.msra.mxu0 0.0
      %1026 = vmatprep.subr.mxu0 0.0
      %1027 = vmatpush1.xpose.msra.mxu0 0.0
      %1028 = vmatprep.subr.mxu0 0.0
      %1029 = vmatpush1.xpose.msra.mxu0 0.0
      %1030 = vmatprep.subr.mxu0 0.0
      %1031 = vmatpush1.xpose.msra.mxu0 0.0
      %1032 = vmatprep.subr.mxu0 0.0
      %1033 = vmatpush1.xpose.msra.mxu0 0.0
      %1034 = vmatprep.subr.mxu0 0.0
      %1035 = vmatpush1.xpose.msra.mxu0 0.0
      %1036 = vmatprep.subr.mxu0 0.0
      %1037 = vmatpush1.xpose.msra.mxu0 0.0
      %1038 = vmatprep.mubr.f32.mxu0 0.0
      %1039 = vmatmul.mubr.f32.gmra.mrb[0].mxu0 %v970
      %v1040 = vpop.f32.mrb[0].mxu0
      %v1041 = vadd.f32 0.0, %v1040
      %v1042 = vpop.f32.mrb[0].mxu0
      %1043 = vdwg.mxu0
      %v1044 = vsel %vm397, -1e+09, %v1041
      %s1045 = scalar_lea.vmem [#allocation2], 24
      %v1046 = vld [vmem:[%s1045] sm:$0xff]
      %v1047 = vsel %vm398, %v1044, -inf
      %1048 = vmax.xlane.f32.xlu0 %v1047
      %v1049 = vpop.xlane.xlu0 %1048
      %v1050 = vmax.f32 %v1046, %v1049
      %v1051 = vsub.f32 %v1046, %v1050
      %v1052 = vmul.f32 %v1051, 1.442695
      %v1053 = vpow.pop %v1052
      %1055 = vset.pattern.permute.xlu0 0
      %1056 = vperm.xlu0 %1055, %v1050
      %v1057 = vpop.permute.xlu0 %1056
      %v1059 = vsub.f32 %v1044, %v1057
      %v1060 = vmul.f32 %v1059, 1.442695
      %v1061 = vpow.pop %v1060
      %s1062 = scalar_lea.vmem [#allocation3], 24
      %v1063 = vld [vmem:[%s1062] sm:$0xff]
      %v1064 = vmul.f32 %v1053, %v1063
      %v1065 = vsel %vm398, %v1061, 0.0
      %1066 = vadd.xlane.f32.xlu0 %v1065
      %v1067 = vpop.xlane.xlu0 %1066
      %v1068 = vadd.f32 %v1064, %v1067
      %1069 = vst.msk [vmem:[%s1062] sm:$0xff] %vm498, %v1068
      %s1070 = scalar_lea.vmem [#allocation4], 24
      %v1071 = vld [vmem:[%s1070] sm:$0xff]
      %1073 = vset.pattern.permute.xlu0 0
      %1074 = vperm.xlu0 %1073, %v1053
      %v1075 = vpop.permute.xlu0 %1074
      %v1077 = vmul.f32 %v1075, %v1071
      %1078 = vrot.lane.b32.xlu0 %v394, 104
      %v1079 = vpop.permute.xlu0 %1078
      %v1082 = vsel %vm398, %v1061, 0
      %1084 = vmatprep.subr.mxu0 0.0
      %1085 = vmatpush1.msra.mxu0 %v1079
      %1086 = vmatprep.subr.mxu0 0.0
      %1087 = vmatpush1.msra.mxu0 0.0
      %1088 = vmatprep.subr.mxu0 0.0
      %1089 = vmatpush1.msra.mxu0 0.0
      %1090 = vmatprep.subr.mxu0 0.0
      %1091 = vmatpush1.msra.mxu0 0.0
      %1092 = vmatprep.subr.mxu0 0.0
      %1093 = vmatpush1.msra.mxu0 0.0
      %1094 = vmatprep.subr.mxu0 0.0
      %1095 = vmatpush1.msra.mxu0 0.0
      %1096 = vmatprep.subr.mxu0 0.0
      %1097 = vmatpush1.msra.mxu0 0.0
      %1098 = vmatprep.subr.mxu0 0.0
      %1099 = vmatpush1.msra.mxu0 0.0
      %1100 = vmatprep.subr.mxu0 0.0
      %1101 = vmatpush1.msra.mxu0 0.0
      %1102 = vmatprep.subr.mxu0 0.0
      %1103 = vmatpush1.msra.mxu0 0.0
      %1104 = vmatprep.subr.mxu0 0.0
      %1105 = vmatpush1.msra.mxu0 0.0
      %1106 = vmatprep.subr.mxu0 0.0
      %1107 = vmatpush1.msra.mxu0 0.0
      %1108 = vmatprep.subr.mxu0 0.0
      %1109 = vmatpush1.msra.mxu0 0.0
      %1110 = vmatprep.subr.mxu0 0.0
      %1111 = vmatpush1.msra.mxu0 0.0
      %1112 = vmatprep.subr.mxu0 0.0
      %1113 = vmatpush1.msra.mxu0 0.0
      %1114 = vmatprep.subr.mxu0 0.0
      %1115 = vmatpush1.msra.mxu0 0.0
      %1116 = vmatprep.subr.mxu0 0.0
      %1117 = vmatpush1.msra.mxu0 0.0
      %1118 = vmatprep.subr.mxu0 0.0
      %1119 = vmatpush1.msra.mxu0 0.0
      %1120 = vmatprep.subr.mxu0 0.0
      %1121 = vmatpush1.msra.mxu0 0.0
      %1122 = vmatprep.subr.mxu0 0.0
      %1123 = vmatpush1.msra.mxu0 0.0
      %1124 = vmatprep.subr.mxu0 0.0
      %1125 = vmatpush1.msra.mxu0 0.0
      %1126 = vmatprep.subr.mxu0 0.0
      %1127 = vmatpush1.msra.mxu0 0.0
      %1128 = vmatprep.subr.mxu0 0.0
      %1129 = vmatpush1.msra.mxu0 0.0
      %1130 = vmatprep.subr.mxu0 0.0
      %1131 = vmatpush1.msra.mxu0 0.0
      %1132 = vmatprep.subr.mxu0 0.0
      %1133 = vmatpush1.msra.mxu0 0.0
      %1134 = vmatprep.subr.mxu0 0.0
      %1135 = vmatpush1.msra.mxu0 0.0
      %1136 = vmatprep.subr.mxu0 0.0
      %1137 = vmatpush1.msra.mxu0 0.0
      %1138 = vmatprep.subr.mxu0 0.0
      %1139 = vmatpush1.msra.mxu0 0.0
      %1140 = vmatprep.subr.mxu0 0.0
      %1141 = vmatpush1.msra.mxu0 0.0
      %1142 = vmatprep.subr.mxu0 0.0
      %1143 = vmatpush1.msra.mxu0 0.0
      %1144 = vmatprep.subr.mxu0 0.0
      %1145 = vmatpush1.msra.mxu0 0.0
      %1146 = vmatprep.subr.mxu0 0.0
      %1147 = vmatpush1.msra.mxu0 0.0
      %1148 = vmatprep.mubr.f32.mxu0 0.0
      %1149 = vmatmul.mubr.f32.gmra.mrb[0].mxu0 %v1082
      %v1150 = vpop.f32.mrb[0].mxu0
      %v1151 = vadd.f32 0.0, %v1150
      %v1152 = vpop.f32.mrb[0].mxu0
      %1153 = vdwg.mxu0
      %v1154 = vadd.f32 %v1077, %v1151
      %1155 = vst.msk [vmem:[%s1070] sm:$0xff] %vm398, %v1154
      %1156 = vst.msk [vmem:[%s1045] sm:$0xff] %vm498, %v1050
      // Predicated region
      $region41: #{decoder_forward.20} parent=35 // pred_check
        %p1157 = pneg %p374
      $region42: #{decoder_forward.20} parent=35 // pred_check_branch
        %1159 = sbr.rel (%p1157) target = $region44
      $region43: #{decoder_forward.20} parent=35 // pred_region
        %v1160 = vld [vmem:[#allocation3] sm:$0xff]
        %v1161 = vrcp.pop %v1160
        %v1162 = vmul.f32 1.0, %v1161
        %v1163 = vld [vmem:[#allocation4] sm:$0xff]
        %1165 = vset.pattern.permute.xlu0 0
        %1166 = vperm.xlu0 %1165, %v1162
        %v1167 = vpop.permute.xlu0 %1166
        %v1169 = vmul.f32 %v1163, %v1167
        %1170 = vst.msk [vmem:[%s373] sm:$0xff] %vm398, %v1169
        %v1171 = vld [vmem:[%s679] sm:$0xff]
        %v1172 = vrcp.pop %v1171
        %v1173 = vmul.f32 1.0, %v1172
        %v1174 = vld [vmem:[%s687] sm:$0xff]
        %1176 = vset.pattern.permute.xlu0 0
        %1177 = vperm.xlu0 %1176, %v1173
        %v1178 = vpop.permute.xlu0 %1177
        %v1180 = vmul.f32 %v1174, %v1178
        %1182 = vrot.lane.b32.xlu0 %v1180, 8
        %v1183 = vpop.permute.xlu0 %1182
        %vm1185 = vcmask 130112
        %1186 = vst.msk [vmem:[%s373] sm:$0xff] %vm1185, %v1183
        %v1187 = vld [vmem:[%s871] sm:$0xff]
        %v1188 = vrcp.pop %v1187
        %v1189 = vmul.f32 1.0, %v1188
        %v1190 = vld [vmem:[%s879] sm:$0xff]
        %1192 = vset.pattern.permute.xlu0 0
        %1193 = vperm.xlu0 %1192, %v1189
        %v1194 = vpop.permute.xlu0 %1193
        %v1196 = vmul.f32 %v1190, %v1194
        %1198 = vrot.lane.b32.xlu0 %v1196, 16
        %v1199 = vpop.permute.xlu0 %1198
        %vm1201 = vcmask 195712
        %1202 = vst.msk [vmem:[%s373] sm:$0xff] %vm1201, %v1199
        %v1203 = vld [vmem:[%s1062] sm:$0xff]
        %v1204 = vrcp.pop %v1203
        %v1205 = vmul.f32 1.0, %v1204
        %v1206 = vld [vmem:[%s1070] sm:$0xff]
        %1208 = vset.pattern.permute.xlu0 0
        %1209 = vperm.xlu0 %1208, %v1205
        %v1210 = vpop.permute.xlu0 %1209
        %v1212 = vmul.f32 %v1206, %v1210
        %1214 = vrot.lane.b32.xlu0 %v1212, 24
        %v1215 = vpop.permute.xlu0 %1214
        %vm1217 = vcmask 261312
        %1218 = vst.msk [vmem:[%s373] sm:$0xff] %vm1217, %v1215
      $region44: #{decoder_forward.20} parent=35 // pred_fallthru
        _
      %p1219 = scmp.lt.s32.totalorder %s21, 1
      %s1220 = scalar_select %p1219, %s21, 1
      %p1221 = scmp.lt.s32.totalorder %s23, 0
      %s1222 = scalar_select %p1221, %s23, 0
      %p1223 = scmp.lt.s32.totalorder %s22, 0
      %s1224 = scalar_select %p1223, %s22, 0
      %s1225 = sadd.s32 %s1224, %s1222
      %s1226 = sadd.s32 %s1225, %s1220
      %s1227 = smul.addr %s1226, 8
      %s1228 = scalar_lea.vmem %s4, %s1227
      // Predicated region
      $region45: #{decoder_forward.20} parent=35 // pred_check
        %p1229 = pneg %p183
      $region46: #{decoder_forward.20} parent=35 // pred_check_branch
        %1231 = sbr.rel (%p1229) target = $region48
      $region47: #{decoder_forward.20} parent=35 // pred_region
        _
      $region48: #{decoder_forward.20} parent=35 // pred_fallthru
        _
    $region36: #{decoder_forward.20} parent=5 // pred_fallthru
      _
    %p1232 = scmp.le.s32.totalorder 2, %s10
    // Predicated region
    $region49: #{decoder_forward.20} parent=5 // pred_check
      %p1233 = pneg %p1232
    $region50: #{decoder_forward.20} parent=5 // pred_check_branch
      %1235 = sbr.rel (%p1233) target = $region52
    $region51: #{decoder_forward.20} parent=5 // pred_region
      %s1236 = ssub.s32 %s10, 2
      // Predicated region
      $region53: #{decoder_forward.20} parent=51 // pred_check
        %p1237 = pneg %p189
      $region54: #{decoder_forward.20} parent=51 // pred_check_branch
        %1239 = sbr.rel (%p1237) target = $region56
      $region55: #{decoder_forward.20} parent=51 // pred_region
        %p1240 = scmp.lt.s32.totalorder %s25, 1
        %s1241 = scalar_select %p1240, %s25, 1
        %p1242 = scmp.lt.s32.totalorder %s27, 0
        %s1243 = scalar_select %p1242, %s27, 0
        %p1244 = scmp.lt.s32.totalorder %s26, 0
        %s1245 = scalar_select %p1244, %s26, 0
        %s1246 = sadd.s32 %s1245, %s1243
        %s1247 = sadd.s32 %s1246, %s1241
        %s1248 = smul.addr %s1247, 8
        %s1249 = scalar_lea.vmem %s4, %s1248
      $region56: #{decoder_forward.20} parent=51 // pred_fallthru
        _
    $region52: #{decoder_forward.20} parent=5 // pred_fallthru
      _
  $region6: #{decoder_forward.20} parent=0 // loop_footer
    %s14 = sadd.s32 1, %s10
  $region7: #{decoder_forward.20} parent=0 // loop_footer_branch
    %9 = sbr.rel target = $region3
  $region8: #{decoder_forward.20} parent=0 // loop_exit
    _

// kernel: decoder_forward.26
$region0: #{decoder_forward.26}
  #allocation0 [shape = 'u32[]', space=smem, size = 0x4, offset = 0x4, fixed_abs, tag = 'smem constant byte address 0x4 - core index']
  #allocation1 [shape = 'u32[144,128]{1,0:T(1,128)}', space=vmem, size = 0x12000, scoped, tag = 'internal scratch']
  %s0 = inlined_call_operand.vmem [shape: f32[16,32], index: 0, kind: input, shape index: {}]
  %s1 = inlined_call_operand.vmem [shape: f32[1,32], index: 1, kind: input, shape index: {}]
  %s2 = inlined_call_operand.vmem [shape: f32[1,32], index: 2, kind: input, shape index: {}]
  %s3 = inlined_call_operand.vmem [shape: f32[32,64], index: 3, kind: input, shape index: {}]
  %s4 = inlined_call_operand.vmem [shape: f32[1,64], index: 4, kind: input, shape index: {}]
  %s5 = inlined_call_operand.vmem [shape: f32[16,64], index: 5, kind: output, shape index: {}]
  %s6 = sld [smem:[#allocation0]]
  $region30: #{decoder_forward.26} parent=0
    _
  %s8 = ssub.s32 1, %s6
  %s9 = scalar_select 0, %s8, %s6
  // Predicated region
  $region2: #{decoder_forward.26} parent=0 // pred_check
    _
  $region3: #{decoder_forward.26} parent=0 // pred_check_branch
    %11 = sbr.rel (0) target = $region5
  $region4: #{decoder_forward.26} parent=0 // pred_region
    _
  $region5: #{decoder_forward.26} parent=0 // pred_fallthru
    _
  // Predicated region
  $region6: #{decoder_forward.26} parent=0 // pred_check
    _
  $region7: #{decoder_forward.26} parent=0 // pred_check_branch
    %13 = sbr.rel (0) target = $region9
  $region8: #{decoder_forward.26} parent=0 // pred_region
    _
  $region9: #{decoder_forward.26} parent=0 // pred_fallthru
    _
  // Predicated region
  $region10: #{decoder_forward.26} parent=0 // pred_check
    _
  $region11: #{decoder_forward.26} parent=0 // pred_check_branch
    %15 = sbr.rel (0) target = $region13
  $region12: #{decoder_forward.26} parent=0 // pred_region
    _
  $region13: #{decoder_forward.26} parent=0 // pred_fallthru
    _
  // Predicated region
  $region14: #{decoder_forward.26} parent=0 // pred_check
    _
  $region15: #{decoder_forward.26} parent=0 // pred_check_branch
    %17 = sbr.rel (0) target = $region17
  $region16: #{decoder_forward.26} parent=0 // pred_region
    _
  $region17: #{decoder_forward.26} parent=0 // pred_fallthru
    _
  // Predicated region
  $region18: #{decoder_forward.26} parent=0 // pred_check
    _
  $region19: #{decoder_forward.26} parent=0 // pred_check_branch
    %19 = sbr.rel (0) target = $region21
  $region20: #{decoder_forward.26} parent=0 // pred_region
    _
  $region21: #{decoder_forward.26} parent=0 // pred_fallthru
    _
  %v20 = vld [vmem:[%s0] sm:$0xff]
  %v21 = vld [vmem:[%s0 + $0x8] sm:$0xff]
  %vm22 = vcmask 261120
  %v23 = vsel %vm22, %v20, 0.0
  %24 = vadd.xlane.f32.xlu0 %v23
  %v25 = vpop.xlane.xlu0 %24
  %v26 = vsel %vm22, %v21, 0.0
  %27 = vadd.xlane.f32.xlu0 %v26
  %v28 = vpop.xlane.xlu0 %27
  %v29 = vrcp.pop 32.0
  %v30 = vmul.f32 %v25, %v29
  %v31 = vmul.f32 %v28, %v29
  %v32 = vsub.f32 %v20, %v30
  %v33 = vsub.f32 %v21, %v31
  %v34 = vmul.f32 %v32, %v32
  %v35 = vmul.f32 %v33, %v33
  %v36 = vsel %vm22, %v34, 0.0
  %37 = vadd.xlane.f32.xlu0 %v36
  %v38 = vpop.xlane.xlu0 %37
  %v39 = vsel %vm22, %v35, 0.0
  %40 = vadd.xlane.f32.xlu0 %v39
  %v41 = vpop.xlane.xlu0 %40
  %v42 = vmul.f32 %v38, 0.032258064
  %v43 = vmul.f32 %v41, 0.032258064
  %v44 = vrsqrt.pop %v42
  %v45 = vmul.f32 %v42, %v44
  %vm46 = vcmp.eq.f32.partialorder %v42, inf
  %v47 = vsel %vm46, %v42, %v45
  %vm48 = vcmp.eq.f32.partialorder %v42, 0.0
  %v49 = vand.u32 %v42, 2147483648
  %v50 = vsel %vm48, %v49, %v47
  %v51 = vrsqrt.pop %v43
  %v52 = vmul.f32 %v43, %v51
  %vm53 = vcmp.eq.f32.partialorder %v43, inf
  %v54 = vsel %vm53, %v43, %v52
  %vm55 = vcmp.eq.f32.partialorder %v43, 0.0
  %v56 = vand.u32 %v43, 2147483648
  %v57 = vsel %vm55, %v56, %v54
  %v58 = vadd.f32 %v50, 1e-06
  %v59 = vadd.f32 %v57, 1e-06
  %v60 = vrcp.pop %v58
  %v61 = vmul.f32 1.0, %v60
  %v62 = vrcp.pop %v59
  %v63 = vmul.f32 1.0, %v62
  %v64 = vld [vmem:[%s1] sm:$0x1]
  %v66 = vlaneseq
  %v67 = vshrl.u32 %v66, 7
  %v68 = vsub.s32 0, %v67
  %v69 = vrot.slane %v64, %v68
  %v71 = vmul.f32 %v69, %v32
  %v72 = vmul.f32 %v69, %v33
  %v73 = vmul.f32 %v71, %v61
  %v74 = vmul.f32 %v72, %v63
  %v75 = vld [vmem:[%s2] sm:$0x1]
  %v77 = vlaneseq
  %v78 = vshrl.u32 %v77, 7
  %v79 = vsub.s32 0, %v78
  %v80 = vrot.slane %v75, %v79
  %v82 = vadd.f32 %v73, %v80
  %v83 = vadd.f32 %v74, %v80
  %v84 = vld [vmem:[%s3] sm:$0xff]
  %v85 = vld [vmem:[%s3 + $0x8] sm:$0xff]
  %v86 = vld [vmem:[%s3 + $0x10] sm:$0xff]
  %v87 = vld [vmem:[%s3 + $0x18] sm:$0xff]
  %v88 = vld [vmem:[%s4] sm:$0x1]
  %v90 = vlaneseq
  %v91 = vshrl.u32 %v90, 7
  %v92 = vsub.s32 0, %v91
  %v93 = vrot.slane %v88, %v92
  %v96 = vsel %vm22, %v82, 0
  %v99 = vsel %vm22, %v83, 0
  %101 = vmatprep.subr.mxu0 0.0
  %102 = vmatpush1.msra.mxu0 %v84
  %103 = vmatprep.subr.mxu0 0.0
  %104 = vmatpush1.msra.mxu0 %v85
  %105 = vmatprep.subr.mxu0 0.0
  %106 = vmatpush1.msra.mxu0 %v86
  %107 = vmatprep.subr.mxu0 0.0
  %108 = vmatpush1.msra.mxu0 %v87
  %109 = vmatprep.subr.mxu0 0.0
  %110 = vmatpush1.msra.mxu0 0.0
  %111 = vmatprep.subr.mxu0 0.0
  %112 = vmatpush1.msra.mxu0 0.0
  %113 = vmatprep.subr.mxu0 0.0
  %114 = vmatpush1.msra.mxu0 0.0
  %115 = vmatprep.subr.mxu0 0.0
  %116 = vmatpush1.msra.mxu0 0.0
  %117 = vmatprep.subr.mxu0 0.0
  %118 = vmatpush1.msra.mxu0 0.0
  %119 = vmatprep.subr.mxu0 0.0
  %120 = vmatpush1.msra.mxu0 0.0
  %121 = vmatprep.subr.mxu0 0.0
  %122 = vmatpush1.msra.mxu0 0.0
  %123 = vmatprep.subr.mxu0 0.0
  %124 = vmatpush1.msra.mxu0 0.0
  %125 = vmatprep.subr.mxu0 0.0
  %126 = vmatpush1.msra.mxu0 0.0
  %127 = vmatprep.subr.mxu0 0.0
  %128 = vmatpush1.msra.mxu0 0.0
  %129 = vmatprep.subr.mxu0 0.0
  %130 = vmatpush1.msra.mxu0 0.0
  %131 = vmatprep.subr.mxu0 0.0
  %132 = vmatpush1.msra.mxu0 0.0
  %133 = vmatprep.subr.mxu0 0.0
  %134 = vmatpush1.msra.mxu0 0.0
  %135 = vmatprep.subr.mxu0 0.0
  %136 = vmatpush1.msra.mxu0 0.0
  %137 = vmatprep.subr.mxu0 0.0
  %138 = vmatpush1.msra.mxu0 0.0
  %139 = vmatprep.subr.mxu0 0.0
  %140 = vmatpush1.msra.mxu0 0.0
  %141 = vmatprep.subr.mxu0 0.0
  %142 = vmatpush1.msra.mxu0 0.0
  %143 = vmatprep.subr.mxu0 0.0
  %144 = vmatpush1.msra.mxu0 0.0
  %145 = vmatprep.subr.mxu0 0.0
  %146 = vmatpush1.msra.mxu0 0.0
  %147 = vmatprep.subr.mxu0 0.0
  %148 = vmatpush1.msra.mxu0 0.0
  %149 = vmatprep.subr.mxu0 0.0
  %150 = vmatpush1.msra.mxu0 0.0
  %151 = vmatprep.subr.mxu0 0.0
  %152 = vmatpush1.msra.mxu0 0.0
  %153 = vmatprep.subr.mxu0 0.0
  %154 = vmatpush1.msra.mxu0 0.0
  %155 = vmatprep.subr.mxu0 0.0
  %156 = vmatpush1.msra.mxu0 0.0
  %157 = vmatprep.subr.mxu0 0.0
  %158 = vmatpush1.msra.mxu0 0.0
  %159 = vmatprep.subr.mxu0 0.0
  %160 = vmatpush1.msra.mxu0 0.0
  %161 = vmatprep.subr.mxu0 0.0
  %162 = vmatpush1.msra.mxu0 0.0
  %163 = vmatprep.subr.mxu0 0.0
  %164 = vmatpush1.msra.mxu0 0.0
  %165 = vmatprep.mubr.f32.mxu0 0.0
  %166 = vmatmul.mubr.f32.gmra.mrb[0].mxu0 %v96
  %v167 = vpop.f32.mrb[0].mxu0
  %v168 = vadd.f32 %v93, %v167
  %v169 = vpop.f32.mrb[0].mxu0
  %170 = vmatprep.mubr.f32.mxu0 0.0
  %171 = vmatmul.mubr.f32.gmra.mrb[0].mxu0 %v99
  %v172 = vpop.f32.mrb[0].mxu0
  %v173 = vadd.f32 %v93, %v172
  %v174 = vpop.f32.mrb[0].mxu0
  %175 = vdwg.mxu0
  %v176 = vmax.f32 %v168, 0.0
  %v177 = vmax.f32 %v173, 0.0
  %vm178 = vcmask 523264
  %179 = vst.msk [vmem:[%s5] sm:$0xff] %vm178, %v176
  %180 = vst.msk [vmem:[%s5 + $0x8] sm:$0xff] %vm178, %v177
  // Predicated region
  $region22: #{decoder_forward.26} parent=0 // pred_check
    _
  $region23: #{decoder_forward.26} parent=0 // pred_check_branch
    %182 = sbr.rel (0) target = $region25
  $region24: #{decoder_forward.26} parent=0 // pred_region
    _
  $region25: #{decoder_forward.26} parent=0 // pred_fallthru
    _
  // Predicated region
  $region26: #{decoder_forward.26} parent=0 // pred_check
    _
  $region27: #{decoder_forward.26} parent=0 // pred_check_branch
    %184 = sbr.rel (0) target = $region29
  $region28: #{decoder_forward.26} parent=0 // pred_region
    _
  $region29: #{decoder_forward.26} parent=0 // pred_fallthru
    _

// kernel: decoder_forward.27
$region0: #{decoder_forward.27}
  #allocation0 [shape = 'u32[]', space=smem, size = 0x4, offset = 0x4, fixed_abs, tag = 'smem constant byte address 0x4 - core index']
  #allocation1 [shape = 'u32[144,128]{1,0:T(1,128)}', space=vmem, size = 0x12000, scoped, tag = 'internal scratch']
  %s0 = inlined_call_operand.vmem [shape: f32[16,64], index: 0, kind: input, shape index: {}]
  %s1 = inlined_call_operand.vmem [shape: f32[64,32], index: 1, kind: input, shape index: {}]
  %s2 = inlined_call_operand.vmem [shape: f32[1,32], index: 2, kind: input, shape index: {}]
  %s3 = inlined_call_operand.vmem [shape: f32[16,32], index: 3, kind: input, shape index: {}]
  %s4 = inlined_call_operand.vmem [shape: f32[16,32], index: 4, kind: output, shape index: {}]
  %s5 = sld [smem:[#allocation0]]
  $region26: #{decoder_forward.27} parent=0
    _
  %s7 = ssub.s32 1, %s5
  %s8 = scalar_select 0, %s7, %s5
  // Predicated region
  $region2: #{decoder_forward.27} parent=0 // pred_check
    _
  $region3: #{decoder_forward.27} parent=0 // pred_check_branch
    %10 = sbr.rel (0) target = $region5
  $region4: #{decoder_forward.27} parent=0 // pred_region
    _
  $region5: #{decoder_forward.27} parent=0 // pred_fallthru
    _
  // Predicated region
  $region6: #{decoder_forward.27} parent=0 // pred_check
    _
  $region7: #{decoder_forward.27} parent=0 // pred_check_branch
    %12 = sbr.rel (0) target = $region9
  $region8: #{decoder_forward.27} parent=0 // pred_region
    _
  $region9: #{decoder_forward.27} parent=0 // pred_fallthru
    _
  // Predicated region
  $region10: #{decoder_forward.27} parent=0 // pred_check
    _
  $region11: #{decoder_forward.27} parent=0 // pred_check_branch
    %14 = sbr.rel (0) target = $region13
  $region12: #{decoder_forward.27} parent=0 // pred_region
    _
  $region13: #{decoder_forward.27} parent=0 // pred_fallthru
    _
  // Predicated region
  $region14: #{decoder_forward.27} parent=0 // pred_check
    _
  $region15: #{decoder_forward.27} parent=0 // pred_check_branch
    %16 = sbr.rel (0) target = $region17
  $region16: #{decoder_forward.27} parent=0 // pred_region
    _
  $region17: #{decoder_forward.27} parent=0 // pred_fallthru
    _
  %v17 = vld [vmem:[%s0] sm:$0xff]
  %v18 = vld [vmem:[%s0 + $0x8] sm:$0xff]
  %v19 = vld [vmem:[%s1] sm:$0xff]
  %v20 = vld [vmem:[%s1 + $0x8] sm:$0xff]
  %v21 = vld [vmem:[%s1 + $0x10] sm:$0xff]
  %v22 = vld [vmem:[%s1 + $0x18] sm:$0xff]
  %v23 = vld [vmem:[%s1 + $0x20] sm:$0xff]
  %v24 = vld [vmem:[%s1 + $0x28] sm:$0xff]
  %v25 = vld [vmem:[%s1 + $0x30] sm:$0xff]
  %v26 = vld [vmem:[%s1 + $0x38] sm:$0xff]
  %v27 = vld [vmem:[%s2] sm:$0x1]
  %v29 = vlaneseq
  %v30 = vshrl.u32 %v29, 7
  %v31 = vsub.s32 0, %v30
  %v32 = vrot.slane %v27, %v31
  %vm34 = vcmask 523264
  %v36 = vsel %vm34, %v17, 0
  %v39 = vsel %vm34, %v18, 0
  %41 = vmatprep.subr.mxu0 0.0
  %42 = vmatpush1.msra.mxu0 %v19
  %43 = vmatprep.subr.mxu0 0.0
  %44 = vmatpush1.msra.mxu0 %v20
  %45 = vmatprep.subr.mxu0 0.0
  %46 = vmatpush1.msra.mxu0 %v21
  %47 = vmatprep.subr.mxu0 0.0
  %48 = vmatpush1.msra.mxu0 %v22
  %49 = vmatprep.subr.mxu0 0.0
  %50 = vmatpush1.msra.mxu0 %v23
  %51 = vmatprep.subr.mxu0 0.0
  %52 = vmatpush1.msra.mxu0 %v24
  %53 = vmatprep.subr.mxu0 0.0
  %54 = vmatpush1.msra.mxu0 %v25
  %55 = vmatprep.subr.mxu0 0.0
  %56 = vmatpush1.msra.mxu0 %v26
  %57 = vmatprep.subr.mxu0 0.0
  %58 = vmatpush1.msra.mxu0 0.0
  %59 = vmatprep.subr.mxu0 0.0
  %60 = vmatpush1.msra.mxu0 0.0
  %61 = vmatprep.subr.mxu0 0.0
  %62 = vmatpush1.msra.mxu0 0.0
  %63 = vmatprep.subr.mxu0 0.0
  %64 = vmatpush1.msra.mxu0 0.0
  %65 = vmatprep.subr.mxu0 0.0
  %66 = vmatpush1.msra.mxu0 0.0
  %67 = vmatprep.subr.mxu0 0.0
  %68 = vmatpush1.msra.mxu0 0.0
  %69 = vmatprep.subr.mxu0 0.0
  %70 = vmatpush1.msra.mxu0 0.0
  %71 = vmatprep.subr.mxu0 0.0
  %72 = vmatpush1.msra.mxu0 0.0
  %73 = vmatprep.subr.mxu0 0.0
  %74 = vmatpush1.msra.mxu0 0.0
  %75 = vmatprep.subr.mxu0 0.0
  %76 = vmatpush1.msra.mxu0 0.0
  %77 = vmatprep.subr.mxu0 0.0
  %78 = vmatpush1.msra.mxu0 0.0
  %79 = vmatprep.subr.mxu0 0.0
  %80 = vmatpush1.msra.mxu0 0.0
  %81 = vmatprep.subr.mxu0 0.0
  %82 = vmatpush1.msra.mxu0 0.0
  %83 = vmatprep.subr.mxu0 0.0
  %84 = vmatpush1.msra.mxu0 0.0
  %85 = vmatprep.subr.mxu0 0.0
  %86 = vmatpush1.msra.mxu0 0.0
  %87 = vmatprep.subr.mxu0 0.0
  %88 = vmatpush1.msra.mxu0 0.0
  %89 = vmatprep.subr.mxu0 0.0
  %90 = vmatpush1.msra.mxu0 0.0
  %91 = vmatprep.subr.mxu0 0.0
  %92 = vmatpush1.msra.mxu0 0.0
  %93 = vmatprep.subr.mxu0 0.0
  %94 = vmatpush1.msra.mxu0 0.0
  %95 = vmatprep.subr.mxu0 0.0
  %96 = vmatpush1.msra.mxu0 0.0
  %97 = vmatprep.subr.mxu0 0.0
  %98 = vmatpush1.msra.mxu0 0.0
  %99 = vmatprep.subr.mxu0 0.0
  %100 = vmatpush1.msra.mxu0 0.0
  %101 = vmatprep.subr.mxu0 0.0
  %102 = vmatpush1.msra.mxu0 0.0
  %103 = vmatprep.subr.mxu0 0.0
  %104 = vmatpush1.msra.mxu0 0.0
  %105 = vmatprep.mubr.f32.mxu0 0.0
  %106 = vmatmul.mubr.f32.gmra.mrb[0].mxu0 %v36
  %v107 = vpop.f32.mrb[0].mxu0
  %v108 = vadd.f32 %v32, %v107
  %v109 = vpop.f32.mrb[0].mxu0
  %110 = vmatprep.mubr.f32.mxu0 0.0
  %111 = vmatmul.mubr.f32.gmra.mrb[0].mxu0 %v39
  %v112 = vpop.f32.mrb[0].mxu0
  %v113 = vadd.f32 %v32, %v112
  %v114 = vpop.f32.mrb[0].mxu0
  %115 = vdwg.mxu0
  %v116 = vld [vmem:[%s3] sm:$0xff]
  %v117 = vld [vmem:[%s3 + $0x8] sm:$0xff]
  %v118 = vadd.f32 %v108, %v116
  %v119 = vadd.f32 %v113, %v117
  %vm120 = vcmask 261120
  %121 = vst.msk [vmem:[%s4] sm:$0xff] %vm120, %v118
  %122 = vst.msk [vmem:[%s4 + $0x8] sm:$0xff] %vm120, %v119
  // Predicated region
  $region18: #{decoder_forward.27} parent=0 // pred_check
    _
  $region19: #{decoder_forward.27} parent=0 // pred_check_branch
    %124 = sbr.rel (0) target = $region21
  $region20: #{decoder_forward.27} parent=0 // pred_region
    _
  $region21: #{decoder_forward.27} parent=0 // pred_fallthru
    _
  // Predicated region
  $region22: #{decoder_forward.27} parent=0 // pred_check
    _
  $region23: #{decoder_forward.27} parent=0 // pred_check_branch
    %126 = sbr.rel (0) target = $region25
  $region24: #{decoder_forward.27} parent=0 // pred_region
    _
  $region25: #{decoder_forward.27} parent=0 // pred_fallthru
    _

// kernel: decoder_forward.24
$region0: #{decoder_forward.24}
  #allocation0 [shape = 'u32[]', space=smem, size = 0x4, offset = 0x4, fixed_abs, tag = 'smem constant byte address 0x4 - core index']
  #allocation1 [shape = 'u32[144,128]{1,0:T(1,128)}', space=vmem, size = 0x12000, scoped, tag = 'internal scratch']
  #allocation2 [shape = 'f32[4,8,1]{2,1,0:T(8,128)}', space=vmem, size = 0x4000, scoped, tag = 'scratch operand']
  #allocation3 [shape = 'f32[4,8,1]{2,1,0:T(8,128)}', space=vmem, size = 0x4000, scoped, tag = 'scratch operand']
  #allocation4 [shape = 'f32[4,8,8]{2,1,0:T(8,128)}', space=vmem, size = 0x4000, scoped, tag = 'scratch operand']
  %s0 = inlined_call_operand.vmem [shape: f32[2,8,32], index: 0, kind: input, shape index: {}]
  %s1 = inlined_call_operand.vmem [shape: f32[2,8,32], index: 1, kind: input, shape index: {}]
  %s2 = inlined_call_operand.vmem [shape: f32[2,8,32], index: 2, kind: input, shape index: {}]
  %s3 = inlined_call_operand.vmem [shape: s8[2,1,8], index: 3, kind: input, shape index: {}]
  %s4 = inlined_call_operand.vmem [shape: f32[2,8,32], index: 4, kind: output, shape index: {}]
  %s5 = sld [smem:[#allocation0]]
  $region57: #{decoder_forward.24} parent=0
    _
  %s7 = ssub.s32 1, %s5
  %s8 = scalar_select 0, %s7, %s5
  loop: start=0, step=1, limit=4
  $region2: #{decoder_forward.24} parent=0 // loop_pre_header
    _
  $region3: #{decoder_forward.24} parent=0 // loop_header
    %s10 = sphi 0, %s14
    %p11 = scmp.ge.s32.totalorder %s10, 4
    %s17 = sphi 0, %s43
    %s18 = sphi 0, %s39
    %s19 = sphi 0, %s35
    %s20 = sphi 0, %s31
    %s21 = sphi 0, %s17
    %s22 = sphi 0, %s18
    %s23 = sphi 0, %s19
    %s24 = sphi 0, %s20
    %s25 = sphi 0, %s21
    %s26 = sphi 0, %s22
    %s27 = sphi 0, %s23
    %s28 = sphi 0, %s24
    %s50 = sphi 0, %s52
    %s53 = sphi 0, %s50
    %s54 = sphi 0, %s53
    %s70 = sphi 0, %s54
    %s80 = sphi 0, %s82
    %s83 = sphi 0, %s80
    %s84 = sphi 0, %s83
    %s100 = sphi 0, %s84
    %s110 = sphi 0, %s112
    %s113 = sphi 0, %s110
    %s114 = sphi 0, %s113
    %s130 = sphi 0, %s114
    %s138 = sphi 0, %s140
    %s141 = sphi 0, %s138
    %s142 = sphi 0, %s141
    %s158 = sphi 0, %s142
    %s168 = sphi 0, %s170
    %s171 = sphi 0, %s168
    %s172 = sphi 0, %s171
    %s188 = sphi 0, %s172
  $region4: #{decoder_forward.24} parent=0 // loop_header_branch
    %13 = sbr.rel (%p11) target = $region8
  $region5: #{decoder_forward.24} parent=0 // loop_body
    %s15 = ssub.s32 %s10, 1
    %s16 = ssub.s32 %s10, 2
    %s29 = sadd.s32 1, %s20
    %p30 = scmp.ge.s32.totalorder %s29, 1
    %s31 = scalar_select %p30, 0, %s29
    %s32 = sadd.s32 1, %s19
    %s33 = scalar_select %p30, %s32, %s19
    %p34 = scmp.ge.s32.totalorder %s33, 1
    %s35 = scalar_select %p34, 0, %s33
    %s36 = sadd.s32 1, %s18
    %s37 = scalar_select %p34, %s36, %s18
    %p38 = scmp.ge.s32.totalorder %s37, 1
    %s39 = scalar_select %p38, 0, %s37
    %s40 = sadd.s32 1, %s17
    %s41 = scalar_select %p38, %s40, %s17
    %p42 = scmp.ge.s32.totalorder %s41, 2
    %s43 = scalar_select %p42, 0, %s41
    %s44 = ssub.s32 %s17, %s43
    %s45 = ssub.s32 %s19, %s35
    %s46 = sor.u32 %s44, %s45
    %s47 = ssub.s32 %s18, %s39
    %s48 = sor.u32 %s46, %s47
    %p49 = scmp.eq.s32.totalorder %s48, 0
    %s51 = sadd.s32 %s50, 1
    %s52 = scalar_select %p49, %s50, %s51
    %p55 = pneg %p49
    %p56 = scmp.eq.s32.totalorder %s10, 1
    %p57 = por %p55, %p56
    %p58 = scmp.ne.s32.totalorder %s50, %s53
    %p59 = scmp.eq.s32.totalorder %s10, 0
    %p60 = por %p58, %p59
    %p61 = scmp.ne.s32.totalorder %s50, %s53
    %p62 = scmp.eq.s32.totalorder %s15, 1
    %p63 = por %p61, %p62
    %p64 = scmp.ne.s32.totalorder %s53, %s54
    %p65 = scmp.eq.s32.totalorder %s15, 0
    %p66 = por %p64, %p65
    %p67 = scmp.ne.s32.totalorder %s53, %s54
    %p68 = scmp.eq.s32.totalorder %s16, 1
    %p69 = por %p67, %p68
    %p71 = scmp.ne.s32.totalorder %s54, %s70
    %p72 = scmp.eq.s32.totalorder %s16, 0
    %p73 = por %p71, %p72
    %s74 = ssub.s32 %s17, %s43
    %s75 = ssub.s32 %s20, %s31
    %s76 = sor.u32 %s74, %s75
    %s77 = ssub.s32 %s18, %s39
    %s78 = sor.u32 %s76, %s77
    %p79 = scmp.eq.s32.totalorder %s78, 0
    %s81 = sadd.s32 %s80, 1
    %s82 = scalar_select %p79, %s80, %s81
    %p85 = pneg %p79
    %p86 = scmp.eq.s32.totalorder %s10, 1
    %p87 = por %p85, %p86
    %p88 = scmp.ne.s32.totalorder %s80, %s83
    %p89 = scmp.eq.s32.totalorder %s10, 0
    %p90 = por %p88, %p89
    %p91 = scmp.ne.s32.totalorder %s80, %s83
    %p92 = scmp.eq.s32.totalorder %s15, 1
    %p93 = por %p91, %p92
    %p94 = scmp.ne.s32.totalorder %s83, %s84
    %p95 = scmp.eq.s32.totalorder %s15, 0
    %p96 = por %p94, %p95
    %p97 = scmp.ne.s32.totalorder %s83, %s84
    %p98 = scmp.eq.s32.totalorder %s16, 1
    %p99 = por %p97, %p98
    %p101 = scmp.ne.s32.totalorder %s84, %s100
    %p102 = scmp.eq.s32.totalorder %s16, 0
    %p103 = por %p101, %p102
    %s104 = ssub.s32 %s17, %s43
    %s105 = ssub.s32 %s20, %s31
    %s106 = sor.u32 %s104, %s105
    %s107 = ssub.s32 %s18, %s39
    %s108 = sor.u32 %s106, %s107
    %p109 = scmp.eq.s32.totalorder %s108, 0
    %s111 = sadd.s32 %s110, 1
    %s112 = scalar_select %p109, %s110, %s111
    %p115 = pneg %p109
    %p116 = scmp.eq.s32.totalorder %s10, 1
    %p117 = por %p115, %p116
    %p118 = scmp.ne.s32.totalorder %s110, %s113
    %p119 = scmp.eq.s32.totalorder %s10, 0
    %p120 = por %p118, %p119
    %p121 = scmp.ne.s32.totalorder %s110, %s113
    %p122 = scmp.eq.s32.totalorder %s15, 1
    %p123 = por %p121, %p122
    %p124 = scmp.ne.s32.totalorder %s113, %s114
    %p125 = scmp.eq.s32.totalorder %s15, 0
    %p126 = por %p124, %p125
    %p127 = scmp.ne.s32.totalorder %s113, %s114
    %p128 = scmp.eq.s32.totalorder %s16, 1
    %p129 = por %p127, %p128
    %p131 = scmp.ne.s32.totalorder %s114, %s130
    %p132 = scmp.eq.s32.totalorder %s16, 0
    %p133 = por %p131, %p132
    %s134 = ssub.s32 %s17, %s43
    %s135 = ssub.s32 %s20, %s31
    %s136 = sor.u32 %s134, %s135
    %p137 = scmp.eq.s32.totalorder %s136, 0
    %s139 = sadd.s32 %s138, 1
    %s140 = scalar_select %p137, %s138, %s139
    %p143 = pneg %p137
    %p144 = scmp.eq.s32.totalorder %s10, 1
    %p145 = por %p143, %p144
    %p146 = scmp.ne.s32.totalorder %s138, %s141
    %p147 = scmp.eq.s32.totalorder %s10, 0
    %p148 = por %p146, %p147
    %p149 = scmp.ne.s32.totalorder %s138, %s141
    %p150 = scmp.eq.s32.totalorder %s15, 1
    %p151 = por %p149, %p150
    %p152 = scmp.ne.s32.totalorder %s141, %s142
    %p153 = scmp.eq.s32.totalorder %s15, 0
    %p154 = por %p152, %p153
    %p155 = scmp.ne.s32.totalorder %s141, %s142
    %p156 = scmp.eq.s32.totalorder %s16, 1
    %p157 = por %p155, %p156
    %p159 = scmp.ne.s32.totalorder %s142, %s158
    %p160 = scmp.eq.s32.totalorder %s16, 0
    %p161 = por %p159, %p160
    %s162 = ssub.s32 %s17, %s43
    %s163 = ssub.s32 %s19, %s35
    %s164 = sor.u32 %s162, %s163
    %s165 = ssub.s32 %s18, %s39
    %s166 = sor.u32 %s164, %s165
    %p167 = scmp.eq.s32.totalorder %s166, 0
    %s169 = sadd.s32 %s168, 1
    %s170 = scalar_select %p167, %s168, %s169
    %p173 = pneg %p167
    %p174 = scmp.eq.s32.totalorder %s10, 1
    %p175 = por %p173, %p174
    %p176 = scmp.ne.s32.totalorder %s168, %s171
    %p177 = scmp.eq.s32.totalorder %s10, 0
    %p178 = por %p176, %p177
    %p179 = scmp.ne.s32.totalorder %s168, %s171
    %p180 = scmp.eq.s32.totalorder %s15, 1
    %p181 = por %p179, %p180
    %p182 = scmp.ne.s32.totalorder %s171, %s172
    %p183 = scmp.eq.s32.totalorder %s15, 0
    %p184 = por %p182, %p183
    %p185 = scmp.ne.s32.totalorder %s171, %s172
    %p186 = scmp.eq.s32.totalorder %s16, 1
    %p187 = por %p185, %p186
    %p189 = scmp.ne.s32.totalorder %s172, %s188
    %p190 = scmp.eq.s32.totalorder %s16, 0
    %p191 = por %p189, %p190
    %p192 = scmp.le.s32.totalorder 1, %s10
    %p193 = scmp.lt.s32.totalorder %s10, 3
    %p194 = pnand %p192, %p193
    %p195 = pneg %p194
    // Predicated region
    $region9: #{decoder_forward.24} parent=5 // pred_check
      _
    $region10: #{decoder_forward.24} parent=5 // pred_check_branch
      %197 = sbr.rel (%p194) target = $region12
    $region11: #{decoder_forward.24} parent=5 // pred_region
      %s198 = ssub.s32 %s10, 1
    $region12: #{decoder_forward.24} parent=5 // pred_fallthru
      _
    %p199 = scmp.lt.s32.totalorder %s10, 2
    // Predicated region
    $region13: #{decoder_forward.24} parent=5 // pred_check
      %p200 = pneg %p199
    $region14: #{decoder_forward.24} parent=5 // pred_check_branch
      %202 = sbr.rel (%p200) target = $region16
    $region15: #{decoder_forward.24} parent=5 // pred_region
      // Predicated region
      $region17: #{decoder_forward.24} parent=15 // pred_check
        %p203 = pneg %p60
      $region18: #{decoder_forward.24} parent=15 // pred_check_branch
        %205 = sbr.rel (%p203) target = $region20
      $region19: #{decoder_forward.24} parent=15 // pred_region
        %p206 = scmp.lt.s32.totalorder %s17, 1
        %s207 = scalar_select %p206, %s17, 1
        %p208 = scmp.lt.s32.totalorder %s19, 0
        %s209 = scalar_select %p208, %s19, 0
        %p210 = scmp.lt.s32.totalorder %s18, 0
        %s211 = scalar_select %p210, %s18, 0
        %s212 = sadd.s32 %s211, %s209
        %s213 = sadd.s32 %s212, %s207
        %s214 = smul.addr %s213, 8
        %s215 = scalar_lea.vmem %s0, %s214
      $region20: #{decoder_forward.24} parent=15 // pred_fallthru
        _
      // Predicated region
      $region21: #{decoder_forward.24} parent=15 // pred_check
        %p216 = pneg %p90
      $region22: #{decoder_forward.24} parent=15 // pred_check_branch
        %218 = sbr.rel (%p216) target = $region24
      $region23: #{decoder_forward.24} parent=15 // pred_region
        %p219 = scmp.lt.s32.totalorder %s17, 1
        %s220 = scalar_select %p219, %s17, 1
        %p221 = scmp.lt.s32.totalorder %s20, 0
        %s222 = scalar_select %p221, %s20, 0
        %p223 = scmp.lt.s32.totalorder %s18, 0
        %s224 = scalar_select %p223, %s18, 0
        %s225 = sadd.s32 %s224, %s222
        %s226 = sadd.s32 %s225, %s220
        %s227 = smul.addr %s226, 8
        %s228 = scalar_lea.vmem %s1, %s227
      $region24: #{decoder_forward.24} parent=15 // pred_fallthru
        _
      // Predicated region
      $region25: #{decoder_forward.24} parent=15 // pred_check
        %p229 = pneg %p120
      $region26: #{decoder_forward.24} parent=15 // pred_check_branch
        %231 = sbr.rel (%p229) target = $region28
      $region27: #{decoder_forward.24} parent=15 // pred_region
        %p232 = scmp.lt.s32.totalorder %s17, 1
        %s233 = scalar_select %p232, %s17, 1
        %p234 = scmp.lt.s32.totalorder %s20, 0
        %s235 = scalar_select %p234, %s20, 0
        %p236 = scmp.lt.s32.totalorder %s18, 0
        %s237 = scalar_select %p236, %s18, 0
        %s238 = sadd.s32 %s237, %s235
        %s239 = sadd.s32 %s238, %s233
        %s240 = smul.addr %s239, 8
        %s241 = scalar_lea.vmem %s2, %s240
      $region28: #{decoder_forward.24} parent=15 // pred_fallthru
        _
      // Predicated region
      $region29: #{decoder_forward.24} parent=15 // pred_check
        %p242 = pneg %p148
      $region30: #{decoder_forward.24} parent=15 // pred_check_branch
        %244 = sbr.rel (%p242) target = $region32
      $region31: #{decoder_forward.24} parent=15 // pred_region
        %p245 = scmp.lt.s32.totalorder %s17, 1
        %s246 = scalar_select %p245, %s17, 1
        %p247 = scmp.lt.s32.totalorder %s20, 0
        %s248 = scalar_select %p247, %s20, 0
        %s249 = sadd.s32 %s248, %s246
        %s250 = scalar_lea.vmem %s3, %s249
      $region32: #{decoder_forward.24} parent=15 // pred_fallthru
        _
    $region16: #{decoder_forward.24} parent=5 // pred_fallthru
      _
    %p251 = scmp.le.s32.totalorder 1, %s10
    %p252 = scmp.lt.s32.totalorder %s10, 3
    %p253 = pnand %p251, %p252
    %p254 = pneg %p253
    // Predicated region
    $region33: #{decoder_forward.24} parent=5 // pred_check
      _
    $region34: #{decoder_forward.24} parent=5 // pred_check_branch
      %256 = sbr.rel (%p253) target = $region36
    $region35: #{decoder_forward.24} parent=5 // pred_region
      %s257 = ssub.s32 %s10, 1
      %p258 = scmp.lt.s32.totalorder %s21, 1
      %s259 = scalar_select %p258, %s21, 1
      %p260 = scmp.lt.s32.totalorder %s23, 0
      %s261 = scalar_select %p260, %s23, 0
      %p262 = scmp.lt.s32.totalorder %s22, 0
      %s263 = scalar_select %p262, %s22, 0
      %s264 = sadd.s32 %s263, %s261
      %s265 = sadd.s32 %s264, %s259
      %s266 = smul.addr %s265, 8
      %s267 = scalar_lea.vmem %s0, %s266
      %p268 = pneg %p66
      %p269 = pneg %p63
      %p270 = scmp.lt.s32.totalorder %s21, 1
      %s271 = scalar_select %p270, %s21, 1
      %p272 = scmp.lt.s32.totalorder %s24, 0
      %s273 = scalar_select %p272, %s24, 0
      %p274 = scmp.lt.s32.totalorder %s22, 0
      %s275 = scalar_select %p274, %s22, 0
      %s276 = sadd.s32 %s275, %s273
      %s277 = sadd.s32 %s276, %s271
      %s278 = smul.addr %s277, 8
      %s279 = scalar_lea.vmem %s1, %s278
      %p280 = pneg %p96
      %p281 = pneg %p93
      %p282 = scmp.lt.s32.totalorder %s21, 1
      %s283 = scalar_select %p282, %s21, 1
      %p284 = scmp.lt.s32.totalorder %s24, 0
      %s285 = scalar_select %p284, %s24, 0
      %p286 = scmp.lt.s32.totalorder %s22, 0
      %s287 = scalar_select %p286, %s22, 0
      %s288 = sadd.s32 %s287, %s285
      %s289 = sadd.s32 %s288, %s283
      %s290 = smul.addr %s289, 8
      %s291 = scalar_lea.vmem %s2, %s290
      %p292 = pneg %p126
      %p293 = pneg %p123
      %p294 = scmp.lt.s32.totalorder %s21, 1
      %s295 = scalar_select %p294, %s21, 1
      %p296 = scmp.lt.s32.totalorder %s24, 0
      %s297 = scalar_select %p296, %s24, 0
      %s298 = sadd.s32 %s297, %s295
      %s299 = scalar_lea.vmem %s3, %s298
      %p300 = pneg %p154
      %p301 = pneg %p151
      %p302 = pneg %p184
      %p303 = pneg %p181
      %p304 = scmp.lt.s32.totalorder %s21, 1
      %s305 = scalar_select %p304, %s21, 1
      %p306 = scmp.lt.s32.totalorder %s23, 0
      %s307 = scalar_select %p306, %s23, 0
      %p308 = scmp.lt.s32.totalorder %s22, 0
      %s309 = scalar_select %p308, %s22, 0
      %s310 = sadd.s32 %s309, %s307
      %s311 = sadd.s32 %s310, %s305
      %s312 = smul.addr %s311, 8
      %s313 = scalar_lea.vmem %s4, %s312
      %p314 = scmp.lt.s32.totalorder %s21, 1
      %s315 = scalar_select %p314, %s21, 1
      %p316 = scmp.lt.s32.totalorder %s23, 0
      %s317 = scalar_select %p316, %s23, 0
      %p318 = scmp.lt.s32.totalorder %s22, 0
      %s319 = scalar_select %p318, %s22, 0
      %s320 = sadd.s32 %s319, %s317
      %s321 = sadd.s32 %s320, %s315
      %s322 = smul.addr %s321, 8
      %s323 = scalar_lea.vmem %s0, %s322
      %p324 = scmp.lt.s32.totalorder %s21, 1
      %s325 = scalar_select %p324, %s21, 1
      %p326 = scmp.lt.s32.totalorder %s24, 0
      %s327 = scalar_select %p326, %s24, 0
      %p328 = scmp.lt.s32.totalorder %s22, 0
      %s329 = scalar_select %p328, %s22, 0
      %s330 = sadd.s32 %s329, %s327
      %s331 = sadd.s32 %s330, %s325
      %s332 = smul.addr %s331, 8
      %s333 = scalar_lea.vmem %s1, %s332
      %p334 = scmp.lt.s32.totalorder %s21, 1
      %s335 = scalar_select %p334, %s21, 1
      %p336 = scmp.lt.s32.totalorder %s24, 0
      %s337 = scalar_select %p336, %s24, 0
      %p338 = scmp.lt.s32.totalorder %s22, 0
      %s339 = scalar_select %p338, %s22, 0
      %s340 = sadd.s32 %s339, %s337
      %s341 = sadd.s32 %s340, %s335
      %s342 = smul.addr %s341, 8
      %s343 = scalar_lea.vmem %s2, %s342
      %p344 = scmp.lt.s32.totalorder %s21, 1
      %s345 = scalar_select %p344, %s21, 1
      %p346 = scmp.lt.s32.totalorder %s24, 0
      %s347 = scalar_select %p346, %s24, 0
      %s348 = sadd.s32 %s347, %s345
      %s349 = scalar_lea.vmem %s3, %s348
      %p350 = scmp.lt.s32.totalorder %s21, 1
      %s351 = scalar_select %p350, %s21, 1
      %p352 = scmp.lt.s32.totalorder %s23, 0
      %s353 = scalar_select %p352, %s23, 0
      %p354 = scmp.lt.s32.totalorder %s22, 0
      %s355 = scalar_select %p354, %s22, 0
      %s356 = sadd.s32 %s355, %s353
      %s357 = sadd.s32 %s356, %s351
      %s358 = smul.addr %s357, 8
      %s359 = scalar_lea.vmem %s4, %s358
      %p360 = scmp.eq.s32.totalorder %s24, 0
      // Predicated region
      $region37: #{decoder_forward.24} parent=35 // pred_check
        %p361 = pneg %p360
      $region38: #{decoder_forward.24} parent=35 // pred_check_branch
        %363 = sbr.rel (%p361) target = $region40
      $region39: #{decoder_forward.24} parent=35 // pred_region
        %vm364 = vcmask 7168
        %365 = vst.msk [vmem:[#allocation2] sm:$0xff] %vm364, -inf
        %366 = vst.msk [vmem:[#allocation2 + $0x8] sm:$0xff] %vm364, -inf
        %367 = vst.msk [vmem:[#allocation2 + $0x10] sm:$0xff] %vm364, -inf
        %368 = vst.msk [vmem:[#allocation2 + $0x18] sm:$0xff] %vm364, -inf
        %369 = vst.msk [vmem:[#allocation3] sm:$0xff] %vm364, 0.0
        %370 = vst.msk [vmem:[#allocation3 + $0x8] sm:$0xff] %vm364, 0.0
        %371 = vst.msk [vmem:[#allocation3 + $0x10] sm:$0xff] %vm364, 0.0
        %372 = vst.msk [vmem:[#allocation3 + $0x18] sm:$0xff] %vm364, 0.0
        %vm373 = vcmask 64512
        %374 = vst.msk [vmem:[#allocation4] sm:$0xff] %vm373, 0.0
        %375 = vst.msk [vmem:[#allocation4 + $0x8] sm:$0xff] %vm373, 0.0
        %376 = vst.msk [vmem:[#allocation4 + $0x10] sm:$0xff] %vm373, 0.0
        %377 = vst.msk [vmem:[#allocation4 + $0x18] sm:$0xff] %vm373, 0.0
      $region40: #{decoder_forward.24} parent=35 // pred_fallthru
        _
      %v378 = vld [vmem:[%s323] sm:$0xff]
      %v379 = vld [vmem:[%s333] sm:$0xff]
      %v380 = vld [vmem:[%s343] sm:$0xff]
      %v381 = vld [vmem:[%s349] sm:$0x1]
      %v382 = vunpack.c.0.s8 %v381
      %vm383 = vcmp.eq.s32.totalorder %v382, 0
      %vm384 = vcmask 64512
      %v386 = vsel %vm384, %v378, 0
      %v389 = vsel %vm384, %v379, 0
      %391 = vmatprep.subr.mxu0 0.0
      %392 = vmatpush1.xpose.msra.mxu0 %v389
      %393 = vmatprep.subr.mxu0 0.0
      %394 = vmatpush1.xpose.msra.mxu0 0.0
      %395 = vmatprep.subr.mxu0 0.0
      %396 = vmatpush1.xpose.msra.mxu0 0.0
      %397 = vmatprep.subr.mxu0 0.0
      %398 = vmatpush1.xpose.msra.mxu0 0.0
      %399 = vmatprep.subr.mxu0 0.0
      %400 = vmatpush1.xpose.msra.mxu0 0.0
      %401 = vmatprep.subr.mxu0 0.0
      %402 = vmatpush1.xpose.msra.mxu0 0.0
      %403 = vmatprep.subr.mxu0 0.0
      %404 = vmatpush1.xpose.msra.mxu0 0.0
      %405 = vmatprep.subr.mxu0 0.0
      %406 = vmatpush1.xpose.msra.mxu0 0.0
      %407 = vmatprep.subr.mxu0 0.0
      %408 = vmatpush1.xpose.msra.mxu0 0.0
      %409 = vmatprep.subr.mxu0 0.0
      %410 = vmatpush1.xpose.msra.mxu0 0.0
      %411 = vmatprep.subr.mxu0 0.0
      %412 = vmatpush1.xpose.msra.mxu0 0.0
      %413 = vmatprep.subr.mxu0 0.0
      %414 = vmatpush1.xpose.msra.mxu0 0.0
      %415 = vmatprep.subr.mxu0 0.0
      %416 = vmatpush1.xpose.msra.mxu0 0.0
      %417 = vmatprep.subr.mxu0 0.0
      %418 = vmatpush1.xpose.msra.mxu0 0.0
      %419 = vmatprep.subr.mxu0 0.0
      %420 = vmatpush1.xpose.msra.mxu0 0.0
      %421 = vmatprep.subr.mxu0 0.0
      %422 = vmatpush1.xpose.msra.mxu0 0.0
      %423 = vmatprep.subr.mxu0 0.0
      %424 = vmatpush1.xpose.msra.mxu0 0.0
      %425 = vmatprep.subr.mxu0 0.0
      %426 = vmatpush1.xpose.msra.mxu0 0.0
      %427 = vmatprep.subr.mxu0 0.0
      %428 = vmatpush1.xpose.msra.mxu0 0.0
      %429 = vmatprep.subr.mxu0 0.0
      %430 = vmatpush1.xpose.msra.mxu0 0.0
      %431 = vmatprep.subr.mxu0 0.0
      %432 = vmatpush1.xpose.msra.mxu0 0.0
      %433 = vmatprep.subr.mxu0 0.0
      %434 = vmatpush1.xpose.msra.mxu0 0.0
      %435 = vmatprep.subr.mxu0 0.0
      %436 = vmatpush1.xpose.msra.mxu0 0.0
      %437 = vmatprep.subr.mxu0 0.0
      %438 = vmatpush1.xpose.msra.mxu0 0.0
      %439 = vmatprep.subr.mxu0 0.0
      %440 = vmatpush1.xpose.msra.mxu0 0.0
      %441 = vmatprep.subr.mxu0 0.0
      %442 = vmatpush1.xpose.msra.mxu0 0.0
      %443 = vmatprep.subr.mxu0 0.0
      %444 = vmatpush1.xpose.msra.mxu0 0.0
      %445 = vmatprep.subr.mxu0 0.0
      %446 = vmatpush1.xpose.msra.mxu0 0.0
      %447 = vmatprep.subr.mxu0 0.0
      %448 = vmatpush1.xpose.msra.mxu0 0.0
      %449 = vmatprep.subr.mxu0 0.0
      %450 = vmatpush1.xpose.msra.mxu0 0.0
      %451 = vmatprep.subr.mxu0 0.0
      %452 = vmatpush1.xpose.msra.mxu0 0.0
      %453 = vmatprep.subr.mxu0 0.0
      %454 = vmatpush1.xpose.msra.mxu0 0.0
      %455 = vmatprep.mubr.f32.mxu0 0.0
      %456 = vmatmul.mubr.f32.gmra.mrb[0].mxu0 %v386
      %v457 = vpop.f32.mrb[0].mxu0
      %v458 = vadd.f32 0.0, %v457
      %v459 = vpop.f32.mrb[0].mxu0
      %460 = vdwg.mxu0
      %v461 = vsel %vm383, 1, 0
      %v462 = vlaneseq
      %v463 = vshrl.u32 %v462, 7
      %v464 = vsub.s32 0, %v463
      %v465 = vrot.slane %v461, %v464
      %vm466 = vcmp.eq.s32.totalorder %v465, 1
      %v467 = vsel %vm466, -1e+09, %v458
      %v468 = vld [vmem:[#allocation2] sm:$0xff]
      %v469 = vsel %vm384, %v467, -inf
      %470 = vmax.xlane.f32.xlu0 %v469
      %v471 = vpop.xlane.xlu0 %470
      %v472 = vmax.f32 %v468, %v471
      %v473 = vsub.f32 %v468, %v472
      %v474 = vmul.f32 %v473, 1.442695
      %v475 = vpow.pop %v474
      %477 = vset.pattern.permute.xlu0 0
      %478 = vperm.xlu0 %477, %v472
      %v479 = vpop.permute.xlu0 %478
      %v481 = vsub.f32 %v467, %v479
      %v482 = vmul.f32 %v481, 1.442695
      %v483 = vpow.pop %v482
      %v484 = vld [vmem:[#allocation3] sm:$0xff]
      %v485 = vmul.f32 %v475, %v484
      %v486 = vsel %vm384, %v483, 0.0
      %487 = vadd.xlane.f32.xlu0 %v486
      %v488 = vpop.xlane.xlu0 %487
      %v489 = vadd.f32 %v485, %v488
      %vm490 = vcmask 7168
      %491 = vst.msk [vmem:[#allocation3] sm:$0xff] %vm490, %v489
      %v492 = vld [vmem:[#allocation4] sm:$0xff]
      %494 = vset.pattern.permute.xlu0 0
      %495 = vperm.xlu0 %494, %v475
      %v496 = vpop.permute.xlu0 %495
      %v498 = vmul.f32 %v496, %v492
      %v500 = vsel %vm384, %v483, 0
      %502 = vmatprep.subr.mxu0 0.0
      %503 = vmatpush1.msra.mxu0 %v380
      %504 = vmatprep.subr.mxu0 0.0
      %505 = vmatpush1.msra.mxu0 0.0
      %506 = vmatprep.subr.mxu0 0.0
      %507 = vmatpush1.msra.mxu0 0.0
      %508 = vmatprep.subr.mxu0 0.0
      %509 = vmatpush1.msra.mxu0 0.0
      %510 = vmatprep.subr.mxu0 0.0
      %511 = vmatpush1.msra.mxu0 0.0
      %512 = vmatprep.subr.mxu0 0.0
      %513 = vmatpush1.msra.mxu0 0.0
      %514 = vmatprep.subr.mxu0 0.0
      %515 = vmatpush1.msra.mxu0 0.0
      %516 = vmatprep.subr.mxu0 0.0
      %517 = vmatpush1.msra.mxu0 0.0
      %518 = vmatprep.subr.mxu0 0.0
      %519 = vmatpush1.msra.mxu0 0.0
      %520 = vmatprep.subr.mxu0 0.0
      %521 = vmatpush1.msra.mxu0 0.0
      %522 = vmatprep.subr.mxu0 0.0
      %523 = vmatpush1.msra.mxu0 0.0
      %524 = vmatprep.subr.mxu0 0.0
      %525 = vmatpush1.msra.mxu0 0.0
      %526 = vmatprep.subr.mxu0 0.0
      %527 = vmatpush1.msra.mxu0 0.0
      %528 = vmatprep.subr.mxu0 0.0
      %529 = vmatpush1.msra.mxu0 0.0
      %530 = vmatprep.subr.mxu0 0.0
      %531 = vmatpush1.msra.mxu0 0.0
      %532 = vmatprep.subr.mxu0 0.0
      %533 = vmatpush1.msra.mxu0 0.0
      %534 = vmatprep.subr.mxu0 0.0
      %535 = vmatpush1.msra.mxu0 0.0
      %536 = vmatprep.subr.mxu0 0.0
      %537 = vmatpush1.msra.mxu0 0.0
      %538 = vmatprep.subr.mxu0 0.0
      %539 = vmatpush1.msra.mxu0 0.0
      %540 = vmatprep.subr.mxu0 0.0
      %541 = vmatpush1.msra.mxu0 0.0
      %542 = vmatprep.subr.mxu0 0.0
      %543 = vmatpush1.msra.mxu0 0.0
      %544 = vmatprep.subr.mxu0 0.0
      %545 = vmatpush1.msra.mxu0 0.0
      %546 = vmatprep.subr.mxu0 0.0
      %547 = vmatpush1.msra.mxu0 0.0
      %548 = vmatprep.subr.mxu0 0.0
      %549 = vmatpush1.msra.mxu0 0.0
      %550 = vmatprep.subr.mxu0 0.0
      %551 = vmatpush1.msra.mxu0 0.0
      %552 = vmatprep.subr.mxu0 0.0
      %553 = vmatpush1.msra.mxu0 0.0
      %554 = vmatprep.subr.mxu0 0.0
      %555 = vmatpush1.msra.mxu0 0.0
      %556 = vmatprep.subr.mxu0 0.0
      %557 = vmatpush1.msra.mxu0 0.0
      %558 = vmatprep.subr.mxu0 0.0
      %559 = vmatpush1.msra.mxu0 0.0
      %560 = vmatprep.subr.mxu0 0.0
      %561 = vmatpush1.msra.mxu0 0.0
      %562 = vmatprep.subr.mxu0 0.0
      %563 = vmatpush1.msra.mxu0 0.0
      %564 = vmatprep.subr.mxu0 0.0
      %565 = vmatpush1.msra.mxu0 0.0
      %566 = vmatprep.mubr.f32.mxu0 0.0
      %567 = vmatmul.mubr.f32.gmra.mrb[0].mxu0 %v500
      %v568 = vpop.f32.mrb[0].mxu0
      %v569 = vadd.f32 0.0, %v568
      %v570 = vpop.f32.mrb[0].mxu0
      %571 = vdwg.mxu0
      %v572 = vadd.f32 %v498, %v569
      %573 = vst.msk [vmem:[#allocation4] sm:$0xff] %vm384, %v572
      %574 = vst.msk [vmem:[#allocation2] sm:$0xff] %vm490, %v472
      %575 = vrot.lane.b32.xlu0 %v378, 120
      %v576 = vpop.permute.xlu0 %575
      %577 = vrot.lane.b32.xlu0 %v379, 120
      %v578 = vpop.permute.xlu0 %577
      %v579 = vsel %vm384, %v576, 0
      %v581 = vsel %vm384, %v578, 0
      %583 = vmatprep.subr.mxu0 0.0
      %584 = vmatpush1.xpose.msra.mxu0 %v581
      %585 = vmatprep.subr.mxu0 0.0
      %586 = vmatpush1.xpose.msra.mxu0 0.0
      %587 = vmatprep.subr.mxu0 0.0
      %588 = vmatpush1.xpose.msra.mxu0 0.0
      %589 = vmatprep.subr.mxu0 0.0
      %590 = vmatpush1.xpose.msra.mxu0 0.0
      %591 = vmatprep.subr.mxu0 0.0
      %592 = vmatpush1.xpose.msra.mxu0 0.0
      %593 = vmatprep.subr.mxu0 0.0
      %594 = vmatpush1.xpose.msra.mxu0 0.0
      %595 = vmatprep.subr.mxu0 0.0
      %596 = vmatpush1.xpose.msra.mxu0 0.0
      %597 = vmatprep.subr.mxu0 0.0
      %598 = vmatpush1.xpose.msra.mxu0 0.0
      %599 = vmatprep.subr.mxu0 0.0
      %600 = vmatpush1.xpose.msra.mxu0 0.0
      %601 = vmatprep.subr.mxu0 0.0
      %602 = vmatpush1.xpose.msra.mxu0 0.0
      %603 = vmatprep.subr.mxu0 0.0
      %604 = vmatpush1.xpose.msra.mxu0 0.0
      %605 = vmatprep.subr.mxu0 0.0
      %606 = vmatpush1.xpose.msra.mxu0 0.0
      %607 = vmatprep.subr.mxu0 0.0
      %608 = vmatpush1.xpose.msra.mxu0 0.0
      %609 = vmatprep.subr.mxu0 0.0
      %610 = vmatpush1.xpose.msra.mxu0 0.0
      %611 = vmatprep.subr.mxu0 0.0
      %612 = vmatpush1.xpose.msra.mxu0 0.0
      %613 = vmatprep.subr.mxu0 0.0
      %614 = vmatpush1.xpose.msra.mxu0 0.0
      %615 = vmatprep.subr.mxu0 0.0
      %616 = vmatpush1.xpose.msra.mxu0 0.0
      %617 = vmatprep.subr.mxu0 0.0
      %618 = vmatpush1.xpose.msra.mxu0 0.0
      %619 = vmatprep.subr.mxu0 0.0
      %620 = vmatpush1.xpose.msra.mxu0 0.0
      %621 = vmatprep.subr.mxu0 0.0
      %622 = vmatpush1.xpose.msra.mxu0 0.0
      %623 = vmatprep.subr.mxu0 0.0
      %624 = vmatpush1.xpose.msra.mxu0 0.0
      %625 = vmatprep.subr.mxu0 0.0
      %626 = vmatpush1.xpose.msra.mxu0 0.0
      %627 = vmatprep.subr.mxu0 0.0
      %628 = vmatpush1.xpose.msra.mxu0 0.0
      %629 = vmatprep.subr.mxu0 0.0
      %630 = vmatpush1.xpose.msra.mxu0 0.0
      %631 = vmatprep.subr.mxu0 0.0
      %632 = vmatpush1.xpose.msra.mxu0 0.0
      %633 = vmatprep.subr.mxu0 0.0
      %634 = vmatpush1.xpose.msra.mxu0 0.0
      %635 = vmatprep.subr.mxu0 0.0
      %636 = vmatpush1.xpose.msra.mxu0 0.0
      %637 = vmatprep.subr.mxu0 0.0
      %638 = vmatpush1.xpose.msra.mxu0 0.0
      %639 = vmatprep.subr.mxu0 0.0
      %640 = vmatpush1.xpose.msra.mxu0 0.0
      %641 = vmatprep.subr.mxu0 0.0
      %642 = vmatpush1.xpose.msra.mxu0 0.0
      %643 = vmatprep.subr.mxu0 0.0
      %644 = vmatpush1.xpose.msra.mxu0 0.0
      %645 = vmatprep.subr.mxu0 0.0
      %646 = vmatpush1.xpose.msra.mxu0 0.0
      %647 = vmatprep.mubr.f32.mxu0 0.0
      %648 = vmatmul.mubr.f32.gmra.mrb[0].mxu0 %v579
      %v649 = vpop.f32.mrb[0].mxu0
      %v650 = vadd.f32 0.0, %v649
      %v651 = vpop.f32.mrb[0].mxu0
      %652 = vdwg.mxu0
      %v653 = vsel %vm466, -1e+09, %v650
      %s654 = scalar_lea.vmem [#allocation2], 8
      %v655 = vld [vmem:[%s654] sm:$0xff]
      %v656 = vsel %vm384, %v653, -inf
      %657 = vmax.xlane.f32.xlu0 %v656
      %v658 = vpop.xlane.xlu0 %657
      %v659 = vmax.f32 %v655, %v658
      %v660 = vsub.f32 %v655, %v659
      %v661 = vmul.f32 %v660, 1.442695
      %v662 = vpow.pop %v661
      %664 = vset.pattern.permute.xlu0 0
      %665 = vperm.xlu0 %664, %v659
      %v666 = vpop.permute.xlu0 %665
      %v668 = vsub.f32 %v653, %v666
      %v669 = vmul.f32 %v668, 1.442695
      %v670 = vpow.pop %v669
      %s671 = scalar_lea.vmem [#allocation3], 8
      %v672 = vld [vmem:[%s671] sm:$0xff]
      %v673 = vmul.f32 %v662, %v672
      %v674 = vsel %vm384, %v670, 0.0
      %675 = vadd.xlane.f32.xlu0 %v674
      %v676 = vpop.xlane.xlu0 %675
      %v677 = vadd.f32 %v673, %v676
      %678 = vst.msk [vmem:[%s671] sm:$0xff] %vm490, %v677
      %s679 = scalar_lea.vmem [#allocation4], 8
      %v680 = vld [vmem:[%s679] sm:$0xff]
      %682 = vset.pattern.permute.xlu0 0
      %683 = vperm.xlu0 %682, %v662
      %v684 = vpop.permute.xlu0 %683
      %v686 = vmul.f32 %v684, %v680
      %688 = vrot.lane.b32.xlu0 %v380, 120
      %v689 = vpop.permute.xlu0 %688
      %v692 = vsel %vm384, %v670, 0
      %694 = vmatprep.subr.mxu0 0.0
      %695 = vmatpush1.msra.mxu0 %v689
      %696 = vmatprep.subr.mxu0 0.0
      %697 = vmatpush1.msra.mxu0 0.0
      %698 = vmatprep.subr.mxu0 0.0
      %699 = vmatpush1.msra.mxu0 0.0
      %700 = vmatprep.subr.mxu0 0.0
      %701 = vmatpush1.msra.mxu0 0.0
      %702 = vmatprep.subr.mxu0 0.0
      %703 = vmatpush1.msra.mxu0 0.0
      %704 = vmatprep.subr.mxu0 0.0
      %705 = vmatpush1.msra.mxu0 0.0
      %706 = vmatprep.subr.mxu0 0.0
      %707 = vmatpush1.msra.mxu0 0.0
      %708 = vmatprep.subr.mxu0 0.0
      %709 = vmatpush1.msra.mxu0 0.0
      %710 = vmatprep.subr.mxu0 0.0
      %711 = vmatpush1.msra.mxu0 0.0
      %712 = vmatprep.subr.mxu0 0.0
      %713 = vmatpush1.msra.mxu0 0.0
      %714 = vmatprep.subr.mxu0 0.0
      %715 = vmatpush1.msra.mxu0 0.0
      %716 = vmatprep.subr.mxu0 0.0
      %717 = vmatpush1.msra.mxu0 0.0
      %718 = vmatprep.subr.mxu0 0.0
      %719 = vmatpush1.msra.mxu0 0.0
      %720 = vmatprep.subr.mxu0 0.0
      %721 = vmatpush1.msra.mxu0 0.0
      %722 = vmatprep.subr.mxu0 0.0
      %723 = vmatpush1.msra.mxu0 0.0
      %724 = vmatprep.subr.mxu0 0.0
      %725 = vmatpush1.msra.mxu0 0.0
      %726 = vmatprep.subr.mxu0 0.0
      %727 = vmatpush1.msra.mxu0 0.0
      %728 = vmatprep.subr.mxu0 0.0
      %729 = vmatpush1.msra.mxu0 0.0
      %730 = vmatprep.subr.mxu0 0.0
      %731 = vmatpush1.msra.mxu0 0.0
      %732 = vmatprep.subr.mxu0 0.0
      %733 = vmatpush1.msra.mxu0 0.0
      %734 = vmatprep.subr.mxu0 0.0
      %735 = vmatpush1.msra.mxu0 0.0
      %736 = vmatprep.subr.mxu0 0.0
      %737 = vmatpush1.msra.mxu0 0.0
      %738 = vmatprep.subr.mxu0 0.0
      %739 = vmatpush1.msra.mxu0 0.0
      %740 = vmatprep.subr.mxu0 0.0
      %741 = vmatpush1.msra.mxu0 0.0
      %742 = vmatprep.subr.mxu0 0.0
      %743 = vmatpush1.msra.mxu0 0.0
      %744 = vmatprep.subr.mxu0 0.0
      %745 = vmatpush1.msra.mxu0 0.0
      %746 = vmatprep.subr.mxu0 0.0
      %747 = vmatpush1.msra.mxu0 0.0
      %748 = vmatprep.subr.mxu0 0.0
      %749 = vmatpush1.msra.mxu0 0.0
      %750 = vmatprep.subr.mxu0 0.0
      %751 = vmatpush1.msra.mxu0 0.0
      %752 = vmatprep.subr.mxu0 0.0
      %753 = vmatpush1.msra.mxu0 0.0
      %754 = vmatprep.subr.mxu0 0.0
      %755 = vmatpush1.msra.mxu0 0.0
      %756 = vmatprep.subr.mxu0 0.0
      %757 = vmatpush1.msra.mxu0 0.0
      %758 = vmatprep.mubr.f32.mxu0 0.0
      %759 = vmatmul.mubr.f32.gmra.mrb[0].mxu0 %v692
      %v760 = vpop.f32.mrb[0].mxu0
      %v761 = vadd.f32 0.0, %v760
      %v762 = vpop.f32.mrb[0].mxu0
      %763 = vdwg.mxu0
      %v764 = vadd.f32 %v686, %v761
      %765 = vst.msk [vmem:[%s679] sm:$0xff] %vm384, %v764
      %766 = vst.msk [vmem:[%s654] sm:$0xff] %vm490, %v659
      %767 = vrot.lane.b32.xlu0 %v378, 112
      %v768 = vpop.permute.xlu0 %767
      %769 = vrot.lane.b32.xlu0 %v379, 112
      %v770 = vpop.permute.xlu0 %769
      %v771 = vsel %vm384, %v768, 0
      %v773 = vsel %vm384, %v770, 0
      %775 = vmatprep.subr.mxu0 0.0
      %776 = vmatpush1.xpose.msra.mxu0 %v773
      %777 = vmatprep.subr.mxu0 0.0
      %778 = vmatpush1.xpose.msra.mxu0 0.0
      %779 = vmatprep.subr.mxu0 0.0
      %780 = vmatpush1.xpose.msra.mxu0 0.0
      %781 = vmatprep.subr.mxu0 0.0
      %782 = vmatpush1.xpose.msra.mxu0 0.0
      %783 = vmatprep.subr.mxu0 0.0
      %784 = vmatpush1.xpose.msra.mxu0 0.0
      %785 = vmatprep.subr.mxu0 0.0
      %786 = vmatpush1.xpose.msra.mxu0 0.0
      %787 = vmatprep.subr.mxu0 0.0
      %788 = vmatpush1.xpose.msra.mxu0 0.0
      %789 = vmatprep.subr.mxu0 0.0
      %790 = vmatpush1.xpose.msra.mxu0 0.0
      %791 = vmatprep.subr.mxu0 0.0
      %792 = vmatpush1.xpose.msra.mxu0 0.0
      %793 = vmatprep.subr.mxu0 0.0
      %794 = vmatpush1.xpose.msra.mxu0 0.0
      %795 = vmatprep.subr.mxu0 0.0
      %796 = vmatpush1.xpose.msra.mxu0 0.0
      %797 = vmatprep.subr.mxu0 0.0
      %798 = vmatpush1.xpose.msra.mxu0 0.0
      %799 = vmatprep.subr.mxu0 0.0
      %800 = vmatpush1.xpose.msra.mxu0 0.0
      %801 = vmatprep.subr.mxu0 0.0
      %802 = vmatpush1.xpose.msra.mxu0 0.0
      %803 = vmatprep.subr.mxu0 0.0
      %804 = vmatpush1.xpose.msra.mxu0 0.0
      %805 = vmatprep.subr.mxu0 0.0
      %806 = vmatpush1.xpose.msra.mxu0 0.0
      %807 = vmatprep.subr.mxu0 0.0
      %808 = vmatpush1.xpose.msra.mxu0 0.0
      %809 = vmatprep.subr.mxu0 0.0
      %810 = vmatpush1.xpose.msra.mxu0 0.0
      %811 = vmatprep.subr.mxu0 0.0
      %812 = vmatpush1.xpose.msra.mxu0 0.0
      %813 = vmatprep.subr.mxu0 0.0
      %814 = vmatpush1.xpose.msra.mxu0 0.0
      %815 = vmatprep.subr.mxu0 0.0
      %816 = vmatpush1.xpose.msra.mxu0 0.0
      %817 = vmatprep.subr.mxu0 0.0
      %818 = vmatpush1.xpose.msra.mxu0 0.0
      %819 = vmatprep.subr.mxu0 0.0
      %820 = vmatpush1.xpose.msra.mxu0 0.0
      %821 = vmatprep.subr.mxu0 0.0
      %822 = vmatpush1.xpose.msra.mxu0 0.0
      %823 = vmatprep.subr.mxu0 0.0
      %824 = vmatpush1.xpose.msra.mxu0 0.0
      %825 = vmatprep.subr.mxu0 0.0
      %826 = vmatpush1.xpose.msra.mxu0 0.0
      %827 = vmatprep.subr.mxu0 0.0
      %828 = vmatpush1.xpose.msra.mxu0 0.0
      %829 = vmatprep.subr.mxu0 0.0
      %830 = vmatpush1.xpose.msra.mxu0 0.0
      %831 = vmatprep.subr.mxu0 0.0
      %832 = vmatpush1.xpose.msra.mxu0 0.0
      %833 = vmatprep.subr.mxu0 0.0
      %834 = vmatpush1.xpose.msra.mxu0 0.0
      %835 = vmatprep.subr.mxu0 0.0
      %836 = vmatpush1.xpose.msra.mxu0 0.0
      %837 = vmatprep.subr.mxu0 0.0
      %838 = vmatpush1.xpose.msra.mxu0 0.0
      %839 = vmatprep.mubr.f32.mxu0 0.0
      %840 = vmatmul.mubr.f32.gmra.mrb[0].mxu0 %v771
      %v841 = vpop.f32.mrb[0].mxu0
      %v842 = vadd.f32 0.0, %v841
      %v843 = vpop.f32.mrb[0].mxu0
      %844 = vdwg.mxu0
      %v845 = vsel %vm466, -1e+09, %v842
      %s846 = scalar_lea.vmem [#allocation2], 16
      %v847 = vld [vmem:[%s846] sm:$0xff]
      %v848 = vsel %vm384, %v845, -inf
      %849 = vmax.xlane.f32.xlu0 %v848
      %v850 = vpop.xlane.xlu0 %849
      %v851 = vmax.f32 %v847, %v850
      %v852 = vsub.f32 %v847, %v851
      %v853 = vmul.f32 %v852, 1.442695
      %v854 = vpow.pop %v853
      %856 = vset.pattern.permute.xlu0 0
      %857 = vperm.xlu0 %856, %v851
      %v858 = vpop.permute.xlu0 %857
      %v860 = vsub.f32 %v845, %v858
      %v861 = vmul.f32 %v860, 1.442695
      %v862 = vpow.pop %v861
      %s863 = scalar_lea.vmem [#allocation3], 16
      %v864 = vld [vmem:[%s863] sm:$0xff]
      %v865 = vmul.f32 %v854, %v864
      %v866 = vsel %vm384, %v862, 0.0
      %867 = vadd.xlane.f32.xlu0 %v866
      %v868 = vpop.xlane.xlu0 %867
      %v869 = vadd.f32 %v865, %v868
      %870 = vst.msk [vmem:[%s863] sm:$0xff] %vm490, %v869
      %s871 = scalar_lea.vmem [#allocation4], 16
      %v872 = vld [vmem:[%s871] sm:$0xff]
      %874 = vset.pattern.permute.xlu0 0
      %875 = vperm.xlu0 %874, %v854
      %v876 = vpop.permute.xlu0 %875
      %v878 = vmul.f32 %v876, %v872
      %879 = vrot.lane.b32.xlu0 %v380, 112
      %v880 = vpop.permute.xlu0 %879
      %v883 = vsel %vm384, %v862, 0
      %885 = vmatprep.subr.mxu0 0.0
      %886 = vmatpush1.msra.mxu0 %v880
      %887 = vmatprep.subr.mxu0 0.0
      %888 = vmatpush1.msra.mxu0 0.0
      %889 = vmatprep.subr.mxu0 0.0
      %890 = vmatpush1.msra.mxu0 0.0
      %891 = vmatprep.subr.mxu0 0.0
      %892 = vmatpush1.msra.mxu0 0.0
      %893 = vmatprep.subr.mxu0 0.0
      %894 = vmatpush1.msra.mxu0 0.0
      %895 = vmatprep.subr.mxu0 0.0
      %896 = vmatpush1.msra.mxu0 0.0
      %897 = vmatprep.subr.mxu0 0.0
      %898 = vmatpush1.msra.mxu0 0.0
      %899 = vmatprep.subr.mxu0 0.0
      %900 = vmatpush1.msra.mxu0 0.0
      %901 = vmatprep.subr.mxu0 0.0
      %902 = vmatpush1.msra.mxu0 0.0
      %903 = vmatprep.subr.mxu0 0.0
      %904 = vmatpush1.msra.mxu0 0.0
      %905 = vmatprep.subr.mxu0 0.0
      %906 = vmatpush1.msra.mxu0 0.0
      %907 = vmatprep.subr.mxu0 0.0
      %908 = vmatpush1.msra.mxu0 0.0
      %909 = vmatprep.subr.mxu0 0.0
      %910 = vmatpush1.msra.mxu0 0.0
      %911 = vmatprep.subr.mxu0 0.0
      %912 = vmatpush1.msra.mxu0 0.0
      %913 = vmatprep.subr.mxu0 0.0
      %914 = vmatpush1.msra.mxu0 0.0
      %915 = vmatprep.subr.mxu0 0.0
      %916 = vmatpush1.msra.mxu0 0.0
      %917 = vmatprep.subr.mxu0 0.0
      %918 = vmatpush1.msra.mxu0 0.0
      %919 = vmatprep.subr.mxu0 0.0
      %920 = vmatpush1.msra.mxu0 0.0
      %921 = vmatprep.subr.mxu0 0.0
      %922 = vmatpush1.msra.mxu0 0.0
      %923 = vmatprep.subr.mxu0 0.0
      %924 = vmatpush1.msra.mxu0 0.0
      %925 = vmatprep.subr.mxu0 0.0
      %926 = vmatpush1.msra.mxu0 0.0
      %927 = vmatprep.subr.mxu0 0.0
      %928 = vmatpush1.msra.mxu0 0.0
      %929 = vmatprep.subr.mxu0 0.0
      %930 = vmatpush1.msra.mxu0 0.0
      %931 = vmatprep.subr.mxu0 0.0
      %932 = vmatpush1.msra.mxu0 0.0
      %933 = vmatprep.subr.mxu0 0.0
      %934 = vmatpush1.msra.mxu0 0.0
      %935 = vmatprep.subr.mxu0 0.0
      %936 = vmatpush1.msra.mxu0 0.0
      %937 = vmatprep.subr.mxu0 0.0
      %938 = vmatpush1.msra.mxu0 0.0
      %939 = vmatprep.subr.mxu0 0.0
      %940 = vmatpush1.msra.mxu0 0.0
      %941 = vmatprep.subr.mxu0 0.0
      %942 = vmatpush1.msra.mxu0 0.0
      %943 = vmatprep.subr.mxu0 0.0
      %944 = vmatpush1.msra.mxu0 0.0
      %945 = vmatprep.subr.mxu0 0.0
      %946 = vmatpush1.msra.mxu0 0.0
      %947 = vmatprep.subr.mxu0 0.0
      %948 = vmatpush1.msra.mxu0 0.0
      %949 = vmatprep.mubr.f32.mxu0 0.0
      %950 = vmatmul.mubr.f32.gmra.mrb[0].mxu0 %v883
      %v951 = vpop.f32.mrb[0].mxu0
      %v952 = vadd.f32 0.0, %v951
      %v953 = vpop.f32.mrb[0].mxu0
      %954 = vdwg.mxu0
      %v955 = vadd.f32 %v878, %v952
      %956 = vst.msk [vmem:[%s871] sm:$0xff] %vm384, %v955
      %957 = vst.msk [vmem:[%s846] sm:$0xff] %vm490, %v851
      %958 = vrot.lane.b32.xlu0 %v378, 104
      %v959 = vpop.permute.xlu0 %958
      %960 = vrot.lane.b32.xlu0 %v379, 104
      %v961 = vpop.permute.xlu0 %960
      %v962 = vsel %vm384, %v959, 0
      %v964 = vsel %vm384, %v961, 0
      %966 = vmatprep.subr.mxu0 0.0
      %967 = vmatpush1.xpose.msra.mxu0 %v964
      %968 = vmatprep.subr.mxu0 0.0
      %969 = vmatpush1.xpose.msra.mxu0 0.0
      %970 = vmatprep.subr.mxu0 0.0
      %971 = vmatpush1.xpose.msra.mxu0 0.0
      %972 = vmatprep.subr.mxu0 0.0
      %973 = vmatpush1.xpose.msra.mxu0 0.0
      %974 = vmatprep.subr.mxu0 0.0
      %975 = vmatpush1.xpose.msra.mxu0 0.0
      %976 = vmatprep.subr.mxu0 0.0
      %977 = vmatpush1.xpose.msra.mxu0 0.0
      %978 = vmatprep.subr.mxu0 0.0
      %979 = vmatpush1.xpose.msra.mxu0 0.0
      %980 = vmatprep.subr.mxu0 0.0
      %981 = vmatpush1.xpose.msra.mxu0 0.0
      %982 = vmatprep.subr.mxu0 0.0
      %983 = vmatpush1.xpose.msra.mxu0 0.0
      %984 = vmatprep.subr.mxu0 0.0
      %985 = vmatpush1.xpose.msra.mxu0 0.0
      %986 = vmatprep.subr.mxu0 0.0
      %987 = vmatpush1.xpose.msra.mxu0 0.0
      %988 = vmatprep.subr.mxu0 0.0
      %989 = vmatpush1.xpose.msra.mxu0 0.0
      %990 = vmatprep.subr.mxu0 0.0
      %991 = vmatpush1.xpose.msra.mxu0 0.0
      %992 = vmatprep.subr.mxu0 0.0
      %993 = vmatpush1.xpose.msra.mxu0 0.0
      %994 = vmatprep.subr.mxu0 0.0
      %995 = vmatpush1.xpose.msra.mxu0 0.0
      %996 = vmatprep.subr.mxu0 0.0
      %997 = vmatpush1.xpose.msra.mxu0 0.0
      %998 = vmatprep.subr.mxu0 0.0
      %999 = vmatpush1.xpose.msra.mxu0 0.0
      %1000 = vmatprep.subr.mxu0 0.0
      %1001 = vmatpush1.xpose.msra.mxu0 0.0
      %1002 = vmatprep.subr.mxu0 0.0
      %1003 = vmatpush1.xpose.msra.mxu0 0.0
      %1004 = vmatprep.subr.mxu0 0.0
      %1005 = vmatpush1.xpose.msra.mxu0 0.0
      %1006 = vmatprep.subr.mxu0 0.0
      %1007 = vmatpush1.xpose.msra.mxu0 0.0
      %1008 = vmatprep.subr.mxu0 0.0
      %1009 = vmatpush1.xpose.msra.mxu0 0.0
      %1010 = vmatprep.subr.mxu0 0.0
      %1011 = vmatpush1.xpose.msra.mxu0 0.0
      %1012 = vmatprep.subr.mxu0 0.0
      %1013 = vmatpush1.xpose.msra.mxu0 0.0
      %1014 = vmatprep.subr.mxu0 0.0
      %1015 = vmatpush1.xpose.msra.mxu0 0.0
      %1016 = vmatprep.subr.mxu0 0.0
      %1017 = vmatpush1.xpose.msra.mxu0 0.0
      %1018 = vmatprep.subr.mxu0 0.0
      %1019 = vmatpush1.xpose.msra.mxu0 0.0
      %1020 = vmatprep.subr.mxu0 0.0
      %1021 = vmatpush1.xpose.msra.mxu0 0.0
      %1022 = vmatprep.subr.mxu0 0.0
      %1023 = vmatpush1.xpose.msra.mxu0 0.0
      %1024 = vmatprep.subr.mxu0 0.0
      %1025 = vmatpush1.xpose.msra.mxu0 0.0
      %1026 = vmatprep.subr.mxu0 0.0
      %1027 = vmatpush1.xpose.msra.mxu0 0.0
      %1028 = vmatprep.subr.mxu0 0.0
      %1029 = vmatpush1.xpose.msra.mxu0 0.0
      %1030 = vmatprep.mubr.f32.mxu0 0.0
      %1031 = vmatmul.mubr.f32.gmra.mrb[0].mxu0 %v962
      %v1032 = vpop.f32.mrb[0].mxu0
      %v1033 = vadd.f32 0.0, %v1032
      %v1034 = vpop.f32.mrb[0].mxu0
      %1035 = vdwg.mxu0
      %v1036 = vsel %vm466, -1e+09, %v1033
      %s1037 = scalar_lea.vmem [#allocation2], 24
      %v1038 = vld [vmem:[%s1037] sm:$0xff]
      %v1039 = vsel %vm384, %v1036, -inf
      %1040 = vmax.xlane.f32.xlu0 %v1039
      %v1041 = vpop.xlane.xlu0 %1040
      %v1042 = vmax.f32 %v1038, %v1041
      %v1043 = vsub.f32 %v1038, %v1042
      %v1044 = vmul.f32 %v1043, 1.442695
      %v1045 = vpow.pop %v1044
      %1047 = vset.pattern.permute.xlu0 0
      %1048 = vperm.xlu0 %1047, %v1042
      %v1049 = vpop.permute.xlu0 %1048
      %v1051 = vsub.f32 %v1036, %v1049
      %v1052 = vmul.f32 %v1051, 1.442695
      %v1053 = vpow.pop %v1052
      %s1054 = scalar_lea.vmem [#allocation3], 24
      %v1055 = vld [vmem:[%s1054] sm:$0xff]
      %v1056 = vmul.f32 %v1045, %v1055
      %v1057 = vsel %vm384, %v1053, 0.0
      %1058 = vadd.xlane.f32.xlu0 %v1057
      %v1059 = vpop.xlane.xlu0 %1058
      %v1060 = vadd.f32 %v1056, %v1059
      %1061 = vst.msk [vmem:[%s1054] sm:$0xff] %vm490, %v1060
      %s1062 = scalar_lea.vmem [#allocation4], 24
      %v1063 = vld [vmem:[%s1062] sm:$0xff]
      %1065 = vset.pattern.permute.xlu0 0
      %1066 = vperm.xlu0 %1065, %v1045
      %v1067 = vpop.permute.xlu0 %1066
      %v1069 = vmul.f32 %v1067, %v1063
      %1070 = vrot.lane.b32.xlu0 %v380, 104
      %v1071 = vpop.permute.xlu0 %1070
      %v1074 = vsel %vm384, %v1053, 0
      %1076 = vmatprep.subr.mxu0 0.0
      %1077 = vmatpush1.msra.mxu0 %v1071
      %1078 = vmatprep.subr.mxu0 0.0
      %1079 = vmatpush1.msra.mxu0 0.0
      %1080 = vmatprep.subr.mxu0 0.0
      %1081 = vmatpush1.msra.mxu0 0.0
      %1082 = vmatprep.subr.mxu0 0.0
      %1083 = vmatpush1.msra.mxu0 0.0
      %1084 = vmatprep.subr.mxu0 0.0
      %1085 = vmatpush1.msra.mxu0 0.0
      %1086 = vmatprep.subr.mxu0 0.0
      %1087 = vmatpush1.msra.mxu0 0.0
      %1088 = vmatprep.subr.mxu0 0.0
      %1089 = vmatpush1.msra.mxu0 0.0
      %1090 = vmatprep.subr.mxu0 0.0
      %1091 = vmatpush1.msra.mxu0 0.0
      %1092 = vmatprep.subr.mxu0 0.0
      %1093 = vmatpush1.msra.mxu0 0.0
      %1094 = vmatprep.subr.mxu0 0.0
      %1095 = vmatpush1.msra.mxu0 0.0
      %1096 = vmatprep.subr.mxu0 0.0
      %1097 = vmatpush1.msra.mxu0 0.0
      %1098 = vmatprep.subr.mxu0 0.0
      %1099 = vmatpush1.msra.mxu0 0.0
      %1100 = vmatprep.subr.mxu0 0.0
      %1101 = vmatpush1.msra.mxu0 0.0
      %1102 = vmatprep.subr.mxu0 0.0
      %1103 = vmatpush1.msra.mxu0 0.0
      %1104 = vmatprep.subr.mxu0 0.0
      %1105 = vmatpush1.msra.mxu0 0.0
      %1106 = vmatprep.subr.mxu0 0.0
      %1107 = vmatpush1.msra.mxu0 0.0
      %1108 = vmatprep.subr.mxu0 0.0
      %1109 = vmatpush1.msra.mxu0 0.0
      %1110 = vmatprep.subr.mxu0 0.0
      %1111 = vmatpush1.msra.mxu0 0.0
      %1112 = vmatprep.subr.mxu0 0.0
      %1113 = vmatpush1.msra.mxu0 0.0
      %1114 = vmatprep.subr.mxu0 0.0
      %1115 = vmatpush1.msra.mxu0 0.0
      %1116 = vmatprep.subr.mxu0 0.0
      %1117 = vmatpush1.msra.mxu0 0.0
      %1118 = vmatprep.subr.mxu0 0.0
      %1119 = vmatpush1.msra.mxu0 0.0
      %1120 = vmatprep.subr.mxu0 0.0
      %1121 = vmatpush1.msra.mxu0 0.0
      %1122 = vmatprep.subr.mxu0 0.0
      %1123 = vmatpush1.msra.mxu0 0.0
      %1124 = vmatprep.subr.mxu0 0.0
      %1125 = vmatpush1.msra.mxu0 0.0
      %1126 = vmatprep.subr.mxu0 0.0
      %1127 = vmatpush1.msra.mxu0 0.0
      %1128 = vmatprep.subr.mxu0 0.0
      %1129 = vmatpush1.msra.mxu0 0.0
      %1130 = vmatprep.subr.mxu0 0.0
      %1131 = vmatpush1.msra.mxu0 0.0
      %1132 = vmatprep.subr.mxu0 0.0
      %1133 = vmatpush1.msra.mxu0 0.0
      %1134 = vmatprep.subr.mxu0 0.0
      %1135 = vmatpush1.msra.mxu0 0.0
      %1136 = vmatprep.subr.mxu0 0.0
      %1137 = vmatpush1.msra.mxu0 0.0
      %1138 = vmatprep.subr.mxu0 0.0
      %1139 = vmatpush1.msra.mxu0 0.0
      %1140 = vmatprep.mubr.f32.mxu0 0.0
      %1141 = vmatmul.mubr.f32.gmra.mrb[0].mxu0 %v1074
      %v1142 = vpop.f32.mrb[0].mxu0
      %v1143 = vadd.f32 0.0, %v1142
      %v1144 = vpop.f32.mrb[0].mxu0
      %1145 = vdwg.mxu0
      %v1146 = vadd.f32 %v1069, %v1143
      %1147 = vst.msk [vmem:[%s1062] sm:$0xff] %vm384, %v1146
      %1148 = vst.msk [vmem:[%s1037] sm:$0xff] %vm490, %v1042
      // Predicated region
      $region41: #{decoder_forward.24} parent=35 // pred_check
        %p1149 = pneg %p360
      $region42: #{decoder_forward.24} parent=35 // pred_check_branch
        %1151 = sbr.rel (%p1149) target = $region44
      $region43: #{decoder_forward.24} parent=35 // pred_region
        %v1152 = vld [vmem:[#allocation3] sm:$0xff]
        %v1153 = vrcp.pop %v1152
        %v1154 = vmul.f32 1.0, %v1153
        %v1155 = vld [vmem:[#allocation4] sm:$0xff]
        %1157 = vset.pattern.permute.xlu0 0
        %1158 = vperm.xlu0 %1157, %v1154
        %v1159 = vpop.permute.xlu0 %1158
        %v1161 = vmul.f32 %v1155, %v1159
        %1162 = vst.msk [vmem:[%s359] sm:$0xff] %vm384, %v1161
        %v1163 = vld [vmem:[%s671] sm:$0xff]
        %v1164 = vrcp.pop %v1163
        %v1165 = vmul.f32 1.0, %v1164
        %v1166 = vld [vmem:[%s679] sm:$0xff]
        %1168 = vset.pattern.permute.xlu0 0
        %1169 = vperm.xlu0 %1168, %v1165
        %v1170 = vpop.permute.xlu0 %1169
        %v1172 = vmul.f32 %v1166, %v1170
        %1174 = vrot.lane.b32.xlu0 %v1172, 8
        %v1175 = vpop.permute.xlu0 %1174
        %vm1177 = vcmask 130112
        %1178 = vst.msk [vmem:[%s359] sm:$0xff] %vm1177, %v1175
        %v1179 = vld [vmem:[%s863] sm:$0xff]
        %v1180 = vrcp.pop %v1179
        %v1181 = vmul.f32 1.0, %v1180
        %v1182 = vld [vmem:[%s871] sm:$0xff]
        %1184 = vset.pattern.permute.xlu0 0
        %1185 = vperm.xlu0 %1184, %v1181
        %v1186 = vpop.permute.xlu0 %1185
        %v1188 = vmul.f32 %v1182, %v1186
        %1190 = vrot.lane.b32.xlu0 %v1188, 16
        %v1191 = vpop.permute.xlu0 %1190
        %vm1193 = vcmask 195712
        %1194 = vst.msk [vmem:[%s359] sm:$0xff] %vm1193, %v1191
        %v1195 = vld [vmem:[%s1054] sm:$0xff]
        %v1196 = vrcp.pop %v1195
        %v1197 = vmul.f32 1.0, %v1196
        %v1198 = vld [vmem:[%s1062] sm:$0xff]
        %1200 = vset.pattern.permute.xlu0 0
        %1201 = vperm.xlu0 %1200, %v1197
        %v1202 = vpop.permute.xlu0 %1201
        %v1204 = vmul.f32 %v1198, %v1202
        %1206 = vrot.lane.b32.xlu0 %v1204, 24
        %v1207 = vpop.permute.xlu0 %1206
        %vm1209 = vcmask 261312
        %1210 = vst.msk [vmem:[%s359] sm:$0xff] %vm1209, %v1207
      $region44: #{decoder_forward.24} parent=35 // pred_fallthru
        _
      %p1211 = scmp.lt.s32.totalorder %s21, 1
      %s1212 = scalar_select %p1211, %s21, 1
      %p1213 = scmp.lt.s32.totalorder %s23, 0
      %s1214 = scalar_select %p1213, %s23, 0
      %p1215 = scmp.lt.s32.totalorder %s22, 0
      %s1216 = scalar_select %p1215, %s22, 0
      %s1217 = sadd.s32 %s1216, %s1214
      %s1218 = sadd.s32 %s1217, %s1212
      %s1219 = smul.addr %s1218, 8
      %s1220 = scalar_lea.vmem %s4, %s1219
      // Predicated region
      $region45: #{decoder_forward.24} parent=35 // pred_check
        %p1221 = pneg %p181
      $region46: #{decoder_forward.24} parent=35 // pred_check_branch
        %1223 = sbr.rel (%p1221) target = $region48
      $region47: #{decoder_forward.24} parent=35 // pred_region
        _
      $region48: #{decoder_forward.24} parent=35 // pred_fallthru
        _
    $region36: #{decoder_forward.24} parent=5 // pred_fallthru
      _
    %p1224 = scmp.le.s32.totalorder 2, %s10
    // Predicated region
    $region49: #{decoder_forward.24} parent=5 // pred_check
      %p1225 = pneg %p1224
    $region50: #{decoder_forward.24} parent=5 // pred_check_branch
      %1227 = sbr.rel (%p1225) target = $region52
    $region51: #{decoder_forward.24} parent=5 // pred_region
      %s1228 = ssub.s32 %s10, 2
      // Predicated region
      $region53: #{decoder_forward.24} parent=51 // pred_check
        %p1229 = pneg %p187
      $region54: #{decoder_forward.24} parent=51 // pred_check_branch
        %1231 = sbr.rel (%p1229) target = $region56
      $region55: #{decoder_forward.24} parent=51 // pred_region
        %p1232 = scmp.lt.s32.totalorder %s25, 1
        %s1233 = scalar_select %p1232, %s25, 1
        %p1234 = scmp.lt.s32.totalorder %s27, 0
        %s1235 = scalar_select %p1234, %s27, 0
        %p1236 = scmp.lt.s32.totalorder %s26, 0
        %s1237 = scalar_select %p1236, %s26, 0
        %s1238 = sadd.s32 %s1237, %s1235
        %s1239 = sadd.s32 %s1238, %s1233
        %s1240 = smul.addr %s1239, 8
        %s1241 = scalar_lea.vmem %s4, %s1240
      $region56: #{decoder_forward.24} parent=51 // pred_fallthru
        _
    $region52: #{decoder_forward.24} parent=5 // pred_fallthru
      _
  $region6: #{decoder_forward.24} parent=0 // loop_footer
    %s14 = sadd.s32 1, %s10
  $region7: #{decoder_forward.24} parent=0 // loop_footer_branch
    %9 = sbr.rel target = $region3
  $region8: #{decoder_forward.24} parent=0 // loop_exit
    _

// kernel: decoder_forward.37
$region0: #{decoder_forward.37}
  #allocation0 [shape = 'u32[]', space=smem, size = 0x4, offset = 0x4, fixed_abs, tag = 'smem constant byte address 0x4 - core index']
  #allocation1 [shape = 'u32[144,128]{1,0:T(1,128)}', space=vmem, size = 0x12000, scoped, tag = 'internal scratch']
  %s0 = inlined_call_operand.vmem [shape: f32[16,32], index: 0, kind: input, shape index: {}]
  %s1 = inlined_call_operand.vmem [shape: f32[1,32], index: 1, kind: input, shape index: {}]
  %s2 = inlined_call_operand.vmem [shape: f32[1,32], index: 2, kind: input, shape index: {}]
  %s3 = inlined_call_operand.hbm [shape: f32[16,32], index: 3, kind: output, shape index: {}]
  %s4 = sld [smem:[#allocation0]]
  $region22: #{decoder_forward.37} parent=0
    _
  %s6 = ssub.s32 1, %s4
  %s7 = scalar_select 0, %s6, %s4
  $region1: #{decoder_forward.37} parent=0
    #allocation2 [shape = 'u8[8192]{0}', space=vmem, size = 0x2000, scoped, tag = 'output window, operand 0, single buffered']
    #allocation3 [shape = 's32[1]{0}', space=sflag, size = 0x4, scoped, tag = 'scoped memory for decoder_forward.37']
    %8 = vsyncpa [#allocation3], 0
    // Predicated region
    $region2: #{decoder_forward.37} parent=1 // pred_check
      _
    $region3: #{decoder_forward.37} parent=1 // pred_check_branch
      %10 = sbr.rel (0) target = $region5
    $region4: #{decoder_forward.37} parent=1 // pred_region
      _
    $region5: #{decoder_forward.37} parent=1 // pred_fallthru
      _
    // Predicated region
    $region6: #{decoder_forward.37} parent=1 // pred_check
      _
    $region7: #{decoder_forward.37} parent=1 // pred_check_branch
      %12 = sbr.rel (0) target = $region9
    $region8: #{decoder_forward.37} parent=1 // pred_region
      _
    $region9: #{decoder_forward.37} parent=1 // pred_fallthru
      _
    // Predicated region
    $region10: #{decoder_forward.37} parent=1 // pred_check
      _
    $region11: #{decoder_forward.37} parent=1 // pred_check_branch
      %14 = sbr.rel (0) target = $region13
    $region12: #{decoder_forward.37} parent=1 // pred_region
      _
    $region13: #{decoder_forward.37} parent=1 // pred_fallthru
      _
    %v15 = vld [vmem:[%s0] sm:$0xff]
    %v16 = vld [vmem:[%s0 + $0x8] sm:$0xff]
    %vm17 = vcmask 261120
    %v18 = vsel %vm17, %v15, 0.0
    %19 = vadd.xlane.f32.xlu0 %v18
    %v20 = vpop.xlane.xlu0 %19
    %v21 = vsel %vm17, %v16, 0.0
    %22 = vadd.xlane.f32.xlu0 %v21
    %v23 = vpop.xlane.xlu0 %22
    %v24 = vrcp.pop 32.0
    %v25 = vmul.f32 %v20, %v24
    %v26 = vmul.f32 %v23, %v24
    %v27 = vsub.f32 %v15, %v25
    %v28 = vsub.f32 %v16, %v26
    %v29 = vmul.f32 %v27, %v27
    %v30 = vmul.f32 %v28, %v28
    %v31 = vsel %vm17, %v29, 0.0
    %32 = vadd.xlane.f32.xlu0 %v31
    %v33 = vpop.xlane.xlu0 %32
    %v34 = vsel %vm17, %v30, 0.0
    %35 = vadd.xlane.f32.xlu0 %v34
    %v36 = vpop.xlane.xlu0 %35
    %v37 = vmul.f32 %v33, 0.032258064
    %v38 = vmul.f32 %v36, 0.032258064
    %v39 = vrsqrt.pop %v37
    %v40 = vmul.f32 %v37, %v39
    %vm41 = vcmp.eq.f32.partialorder %v37, inf
    %v42 = vsel %vm41, %v37, %v40
    %vm43 = vcmp.eq.f32.partialorder %v37, 0.0
    %v44 = vand.u32 %v37, 2147483648
    %v45 = vsel %vm43, %v44, %v42
    %v46 = vrsqrt.pop %v38
    %v47 = vmul.f32 %v38, %v46
    %vm48 = vcmp.eq.f32.partialorder %v38, inf
    %v49 = vsel %vm48, %v38, %v47
    %vm50 = vcmp.eq.f32.partialorder %v38, 0.0
    %v51 = vand.u32 %v38, 2147483648
    %v52 = vsel %vm50, %v51, %v49
    %v53 = vadd.f32 %v45, 1e-06
    %v54 = vadd.f32 %v52, 1e-06
    %v55 = vrcp.pop %v53
    %v56 = vmul.f32 1.0, %v55
    %v57 = vrcp.pop %v54
    %v58 = vmul.f32 1.0, %v57
    %v59 = vld [vmem:[%s1] sm:$0x1]
    %v61 = vlaneseq
    %v62 = vshrl.u32 %v61, 7
    %v63 = vsub.s32 0, %v62
    %v64 = vrot.slane %v59, %v63
    %v66 = vmul.f32 %v64, %v27
    %v67 = vmul.f32 %v64, %v28
    %v68 = vmul.f32 %v66, %v56
    %v69 = vmul.f32 %v67, %v58
    %v70 = vld [vmem:[%s2] sm:$0x1]
    %v72 = vlaneseq
    %v73 = vshrl.u32 %v72, 7
    %v74 = vsub.s32 0, %v73
    %v75 = vrot.slane %v70, %v74
    %v77 = vadd.f32 %v68, %v75
    %v78 = vadd.f32 %v69, %v75
    %79 = vst.msk [vmem:[#allocation2] sm:$0xff] %vm17, %v77
    %80 = vst.msk [vmem:[#allocation2 + $0x8] sm:$0xff] %vm17, %v78
    // Predicated region
    $region14: #{decoder_forward.37} parent=1 // pred_check
      _
    $region15: #{decoder_forward.37} parent=1 // pred_check_branch
      %82 = sbr.rel (0) target = $region17
    $region16: #{decoder_forward.37} parent=1 // pred_region
      %s84 = ssub.s32 256, 256
      %85 = vsyncadd [#allocation3], %s84
      %s86 = sshll.u32 [#allocation2], 4
      %s87 = int_to_ptr.vmem [resolvable:$true] %s86
      %92 = dma.vmem_to_hbm [thread:$0]  %s87, 256, %s3, [#allocation3], 128, 128, 8
    $region17: #{decoder_forward.37} parent=1 // pred_fallthru
      _
    // Predicated region
    $region18: #{decoder_forward.37} parent=1 // pred_check
      _
    $region19: #{decoder_forward.37} parent=1 // pred_check_branch
      %94 = sbr.rel (0) target = $region21
    $region20: #{decoder_forward.37} parent=1 // pred_region
      %95 = dma.done [#allocation3], 256
    $region21: #{decoder_forward.37} parent=1 // pred_fallthru
      _
    %96 = vsyncpa [#allocation3], 1

</llo_original>
